<compile_context>
chip_gen: v6e
topology: v6e:2x2x1
jax: 0.10.0
libtpu: 0.0.40
codegen_flags: <defaults>
</compile_context>

<pallas_src>
import jax
import jax.numpy as jnp
from jax.experimental import pallas as pl
from jax.experimental.pallas import tpu as pltpu

B = 2            # batch
L0 = 96          # input length (96 / 2^3 * 128 channels = 1536 -> matches fc1)
C_IN = 3
C1, C2, C3 = 32, 64, 128
L3 = L0 // 8     # 12
FLAT = C3 * L3   # 1536
EXTRA = 8        # extra_features_size
HID = 200


def _conv_relu_pool(x, L, w, b):
    """x: (R, Cin) f32 rows (batch-major, time within example, length L);
    w: (3*Cin, Cout) bf16 fused im2col weight; b: (1, Cout) f32.
    Conv1d(k=3, s=1, p=1) + ReLU + sum-pool(2) — the pool's 0.5 is folded into
    the NEXT layer's weights by prepare_params()."""
    R = x.shape[0]
    # Edge masks built in-kernel (cheap VPU ops) instead of DMA'd lane-sparse inputs.
    pos = jax.lax.broadcasted_iota(jnp.int32, (R, 1), 0) % L
    keep_prev = (pos != 0).astype(jnp.float32)        # zero x[l-1] at first row of each example
    keep_next = (pos != L - 1).astype(jnp.float32)    # zero x[l+1] at last row of each example
    # Time shifts on the XLU; wrapped / cross-example rows zeroed by the masks.
    x_m1 = pltpu.roll(x, shift=1, axis=0) * keep_prev        # x[l-1]
    x_p1 = pltpu.roll(x, shift=R - 1, axis=0) * keep_next    # x[l+1]
    xcat = jnp.concatenate([x_m1, x, x_p1], axis=-1)         # (R, 3*Cin)
    y = jnp.dot(xcat.astype(jnp.bfloat16), w,
                preferred_element_type=jnp.float32) + b      # bf16 MXU, f32 acc
    y = jnp.maximum(y, 0.0)                                  # ReLU
    cout = w.shape[-1]
    y = y.reshape(R // 2, 2, cout)                           # pool pairs
    return y[:, 0, :] + y[:, 1, :]                           # 0.5 folded downstream


def convnet_kernel(x_ref, pf_ref,
                   w1_ref, b1_ref, w2_ref, b2_ref, w3_ref, b3_ref,
                   wf1_ref, bf1_ref, wf2_ref, bf2_ref,
                   out_ref):
    bsz = x_ref.shape[0]
    # NCL (b, 3, 96) -> rows (b*96, 3): channels to the lane axis (XLU transpose;
    # the trailing reshape only merges leading dims, 96 is sublane-aligned).
    x_rows = jnp.transpose(x_ref[...], (0, 2, 1)).reshape(bsz * L0, C_IN)

    h = _conv_relu_pool(x_rows, L0, w1_ref[...], b1_ref[...])        # (b*48, 32)
    h = _conv_relu_pool(h, L0 // 2, w2_ref[...], b2_ref[...])        # (b*24, 64)
    h = _conv_relu_pool(h, L0 // 4, w3_ref[...], b3_ref[...])        # (b*12, 128)

    # Time-major flatten (l*C3 + c).  NOTE: for large b_tile on v5e, the
    # reshape-free 12x K=128 accumulated-dot form (wc pre-reshaped to
    # (12,128,200)) avoids this sublane->lane relayout; at small b_tile the
    # relayout is a few KB and the single fused matmul wins on launch overhead.
    h_flat = h.reshape(bsz, FLAT)                                    # (b, 1536)
    feat = jnp.concatenate([h_flat, pf_ref[...]], axis=-1)           # (b, 1544), 128-aligned concat

    # fc1: single fused K=1544 matmul (conv features + extra features) + bias + ReLU.
    z1 = jnp.dot(feat.astype(jnp.bfloat16), wf1_ref[...],
                 preferred_element_type=jnp.float32) + bf1_ref[...]
    z1 = jnp.maximum(z1, 0.0)                                        # (b, 200)

    # fc2 (N=1) on VPU/XLU: broadcast multiply + lane reduction, no MXU pass.
    out_ref[...] = (jnp.sum(z1 * wf2_ref[...], axis=-1, keepdims=True)
                    + bf2_ref[...])                                  # (b, 1)


def prepare_params(params):
    """One-time weight reshuffle + bf16 cast (hoisted out of the per-call path)."""
    (w1, b1), (w2, b2), (w3, b3), (fc1_w, fc1_b), (fc2_w, fc2_b) = params

    def fuse(w, scale):
        # torch (Cout, Cin, K=3) -> im2col (3*Cin, Cout); row order k*Cin + cin,
        # tap k=0 multiplies x[l-1] (padding=1), matching the xcat lane order.
        co, ci, k = w.shape
        wk = jnp.transpose(w, (2, 1, 0)).reshape(k * ci, co) * scale
        return wk.astype(jnp.bfloat16)

    w1k = fuse(w1, 1.0)
    w2k = fuse(w2, 0.5)       # layer-1 AvgPool 0.5 folded in
    w3k = fuse(w3, 0.5)       # layer-2 AvgPool 0.5 folded in

    # fc1 conv part: torch flatten is channel-major (c*L3 + l); kernel flatten is
    # time-major (l*C3 + c).  Permute rows, fold layer-3 AvgPool 0.5, and stack
    # the extra-feature rows underneath so fc1 is one matmul.
    wc = fc1_w[:, :FLAT].reshape(HID, C3, L3)
    wc = jnp.transpose(wc, (0, 2, 1)).reshape(HID, FLAT).T * 0.5     # (1536, 200)
    we = fc1_w[:, FLAT:].T                                           # (EXTRA, 200)
    wf1 = jnp.concatenate([wc, we], axis=0).astype(jnp.bfloat16)     # (1544, 200) bf16

    return (w1k, b1.reshape(1, -1), w2k, b2.reshape(1, -1), w3k, b3.reshape(1, -1),
            wf1, fc1_b.reshape(1, -1),
            fc2_w.reshape(1, HID).astype(jnp.float32),               # fc2 row weight (VPU path)
            fc2_b.reshape(1, 1))


def convnet_forward(scenario_x, policy_feature_x, prepared, b_tile=None):
    """scenario_x: (B, 3, 96) NCL f32 (native torch layout, no wrapper transpose);
    policy_feature_x: (B, EXTRA) f32."""
    (w1k, b1, w2k, b2, w3k, b3, wf1, bf1, wf2, bf2) = prepared
    bsz = scenario_x.shape[0]
    if b_tile is None:
        b_tile = bsz
    assert bsz % b_tile == 0
    # Sub-batch tiles need sublane-legal (b_tile, EXTRA)/(b_tile, 1) blocks.
    assert b_tile == bsz or b_tile % 8 == 0, "b_tile must equal batch or be a multiple of 8"
    grid = (bsz // b_tile,)

    def const(a):                        # grid-invariant 2-D operands (weights, biases)
        return pl.BlockSpec(a.shape, lambda i: (0, 0))

    in_specs = [
        pl.BlockSpec((b_tile, C_IN, L0), lambda i: (i, 0, 0)),   # lane-dense NCL input
        pl.BlockSpec((b_tile, EXTRA), lambda i: (i, 0)),         # policy features
        const(w1k), const(b1), const(w2k), const(b2), const(w3k), const(b3),
        const(wf1), const(bf1), const(wf2), const(bf2),
    ]

    out = pl.pallas_call(
        convnet_kernel,
        out_shape=jax.ShapeDtypeStruct((bsz, 1), jnp.float32),
        grid=grid,
        in_specs=in_specs,
        out_specs=pl.BlockSpec((b_tile, 1), lambda i: (i, 0)),
        compiler_params=pltpu.CompilerParams(
            dimension_semantics=("parallel",),      # megacore shards batch tiles (grid >= 2)
            vmem_limit_bytes=32 * 1024 * 1024),     # explicit, safe on v5e/v6e/v7x
    )(scenario_x, policy_feature_x,
      w1k, b1, w2k, b2, w3k, b3, wf1, bf1, wf2, bf2)
    return out[:, 0]                                # squeeze(-1) -> (B,)


def reference_forward(scenario_x, policy_feature_x, params):
    """Pure-JAX f32 reference matching the PyTorch module exactly (NCL layout)."""
    (w1, b1), (w2, b2), (w3, b3), (fc1_w, fc1_b), (fc2_w, fc2_b) = params

    def block(x, w, bias):
        y = jax.lax.conv_general_dilated(
            x, w, window_strides=(1,), padding=((1, 1),),
            dimension_numbers=('NCH', 'OIH', 'NCH'))
        y = jnp.maximum(y + bias[None, :, None], 0.0)
        Bq, Cq, Lq = y.shape
        return y.reshape(Bq, Cq, Lq // 2, 2).mean(-1)

    h = block(scenario_x, w1, b1)
    h = block(h, w2, b2)
    h = block(h, w3, b3)
    flat = h.reshape(h.shape[0], -1)                   # torch .view(B, -1)
    feat = jnp.concatenate([flat, policy_feature_x], axis=1)
    z = jnp.maximum(feat @ fc1_w.T + fc1_b, 0.0)
    z = z @ fc2_w.T + fc2_b
    return z[:, 0]


def init_params(key):
    ks = jax.random.split(key, 10)
    f32 = jnp.float32
    w1 = jax.random.normal(ks[0], (C1, C_IN, 3), f32) * 0.20
    b1 = jax.random.normal(ks[1], (C1,), f32) * 0.05
    w2 = jax.random.normal(ks[2], (C2, C1, 3), f32) * 0.10
    b2 = jax.random.normal(ks[3], (C2,), f32) * 0.05
    w3 = jax.random.normal(ks[4], (C3, C2, 3), f32) * 0.08
    b3 = jax.random.normal(ks[5], (C3,), f32) * 0.05
    fc1_w = jax.random.normal(ks[6], (HID, FLAT + EXTRA), f32) * 0.02
    fc1_b = jax.random.normal(ks[7], (HID,), f32) * 0.05
    fc2_w = jax.random.normal(ks[8], (1, HID), f32) * 0.05
    fc2_b = jax.random.normal(ks[9], (1,), f32) * 0.05
    return ((w1, b1), (w2, b2), (w3, b3), (fc1_w, fc1_b), (fc2_w, fc2_b))


if __name__ == "__main__":
    params = init_params(jax.random.PRNGKey(42))

    k0, k1 = jax.random.split(jax.random.PRNGKey(0))
    scenario_x = jax.random.normal(k0, (B, C_IN, L0), jnp.float32)       # NCL like torch
    policy_feature_x = jax.random.normal(k1, (B, EXTRA), jnp.float32)

    prepared = prepare_params(params)                  # one-time weight reshuffle + bf16 cast
    fwd = jax.jit(convnet_forward)

    out = jax.block_until_ready(fwd(scenario_x, policy_feature_x, prepared))
    ref = jax.block_until_ready(reference_forward(scenario_x, policy_feature_x, params))

    assert out.shape == (B,), out.shape
    # bf16 MXU operands (per perf review) => tolerance deliberately relaxed vs the
    # f32 reference; observed error is ~1e-2 absolute on O(0.1-1) outputs.
    assert jnp.allclose(out, ref, rtol=5e-2, atol=5e-2), (out, ref)

    print("KERNEL_OK")
</pallas_src>

<mosaic_0001>
module attributes {stable_mosaic.version = 11 : i64} {
  func.func @convnet_kernel(%arg0: i32, %arg1: memref<2x3x96xf32, #tpu.memory_space<vmem>>, %arg2: memref<2x8xf32, #tpu.memory_space<vmem>>, %arg3: memref<9x32xbf16, #tpu.memory_space<vmem>>, %arg4: memref<1x32xf32, #tpu.memory_space<vmem>>, %arg5: memref<96x64xbf16, #tpu.memory_space<vmem>>, %arg6: memref<1x64xf32, #tpu.memory_space<vmem>>, %arg7: memref<192x128xbf16, #tpu.memory_space<vmem>>, %arg8: memref<1x128xf32, #tpu.memory_space<vmem>>, %arg9: memref<1544x200xbf16, #tpu.memory_space<vmem>>, %arg10: memref<1x200xf32, #tpu.memory_space<vmem>>, %arg11: memref<1x200xf32, #tpu.memory_space<vmem>>, %arg12: memref<1x1xf32, #tpu.memory_space<vmem>>, %arg13: memref<2x1xf32, #tpu.memory_space<vmem>>) attributes {dimension_semantics = [#tpu.dimension_semantics<parallel>], iteration_bounds = array<i64: 1>, scalar_prefetch = 0 : i64, scratch_operands = 0 : i64, tpu.core_type = #tpu.core_type<tc>, window_params = [{transform_indices = @transform_0, window_bounds = array<i64: 2, 3, 96>}, {transform_indices = @transform_1, window_bounds = array<i64: 2, 8>}, {pipeline_mode = #tpu.pipeline_mode<synchronous>, transform_indices = @transform_2, window_bounds = array<i64: 9, 32>}, {pipeline_mode = #tpu.pipeline_mode<synchronous>, transform_indices = @transform_3, window_bounds = array<i64: 1, 32>}, {pipeline_mode = #tpu.pipeline_mode<synchronous>, transform_indices = @transform_4, window_bounds = array<i64: 96, 64>}, {pipeline_mode = #tpu.pipeline_mode<synchronous>, transform_indices = @transform_5, window_bounds = array<i64: 1, 64>}, {pipeline_mode = #tpu.pipeline_mode<synchronous>, transform_indices = @transform_6, window_bounds = array<i64: 192, 128>}, {pipeline_mode = #tpu.pipeline_mode<synchronous>, transform_indices = @transform_7, window_bounds = array<i64: 1, 128>}, {pipeline_mode = #tpu.pipeline_mode<synchronous>, transform_indices = @transform_8, window_bounds = array<i64: 1544, 200>}, {pipeline_mode = #tpu.pipeline_mode<synchronous>, transform_indices = @transform_9, window_bounds = array<i64: 1, 200>}, {pipeline_mode = #tpu.pipeline_mode<synchronous>, transform_indices = @transform_10, window_bounds = array<i64: 1, 200>}, {pipeline_mode = #tpu.pipeline_mode<synchronous>, transform_indices = @transform_11, window_bounds = array<i64: 1, 1>}, {transform_indices = @transform_12, window_bounds = array<i64: 2, 1>}]} {
    %c0 = arith.constant 0 : index
    %c0_0 = arith.constant 0 : index
    %c0_1 = arith.constant 0 : index
    %0 = vector.load %arg1[%c0, %c0_0, %c0_1] : memref<2x3x96xf32, #tpu.memory_space<vmem>>, vector<2x3x96xf32>
    %1 = tpu.transpose %0, [0, 2, 1] : vector<2x3x96xf32> -> vector<2x96x3xf32>
    %2 = vector.shape_cast %1 : vector<2x96x3xf32> to vector<192x3xf32>
    %c0_2 = arith.constant 0 : index
    %c0_3 = arith.constant 0 : index
    %3 = vector.load %arg3[%c0_2, %c0_3] : memref<9x32xbf16, #tpu.memory_space<vmem>>, vector<9x32xbf16>
    %c0_4 = arith.constant 0 : index
    %c0_5 = arith.constant 0 : index
    %4 = vector.load %arg4[%c0_4, %c0_5] : memref<1x32xf32, #tpu.memory_space<vmem>>, vector<1x32xf32>
    %5 = tpu.iota {dimensions = array<i32: 0>} : vector<192x1xi32>
    %c96_i32 = arith.constant 96 : i32
    %c0_i32 = arith.constant 0 : i32
    %6 = arith.cmpi eq, %c96_i32, %c0_i32 : i32
    %c1_i32 = arith.constant 1 : i32
    %7 = arith.select %6, %c1_i32, %c96_i32 : i32
    %8 = vector.broadcast %7 : i32 to vector<192x1xi32>
    %9 = arith.remsi %5, %8 : vector<192x1xi32>
    %c0_i32_6 = arith.constant 0 : i32
    %10 = vector.broadcast %c0_i32_6 : i32 to vector<192x1xi32>
    %11 = arith.cmpi ne, %9, %10 : vector<192x1xi32>
    %c0_i32_7 = arith.constant 0 : i32
    %12 = vector.broadcast %c0_i32_7 : i32 to vector<192x1xi32>
    %13 = arith.cmpi slt, %9, %12 : vector<192x1xi32>
    %c0_i32_8 = arith.constant 0 : i32
    %14 = arith.cmpi slt, %7, %c0_i32_8 : i32
    %15 = vector.broadcast %14 : i1 to vector<192x1xi1>
    %16 = vector.broadcast %15 : vector<192x1xi1> to vector<192x1xi1>
    %17 = arith.xori %13, %16 : vector<192x1xi1>
    %18 = arith.andi %17, %11 : vector<192x1xi1>
    %19 = vector.broadcast %7 : i32 to vector<192x1xi32>
    %20 = arith.addi %9, %19 : vector<192x1xi32>
    %21 = arith.select %18, %20, %9 : vector<192x1xi1>, vector<192x1xi32>
    %c0_i32_9 = arith.constant 0 : i32
    %22 = vector.broadcast %c0_i32_9 : i32 to vector<192x1xi32>
    %23 = arith.cmpi ne, %21, %22 : vector<192x1xi32>
    %24 = arith.extui %23 : vector<192x1xi1> to vector<192x1xi32>
    %25 = arith.sitofp %24 : vector<192x1xi32> to vector<192x1xf32>
    %c95_i32 = arith.constant 95 : i32
    %26 = vector.broadcast %c95_i32 : i32 to vector<192x1xi32>
    %27 = arith.cmpi ne, %21, %26 : vector<192x1xi32>
    %28 = arith.extui %27 : vector<192x1xi1> to vector<192x1xi32>
    %29 = arith.sitofp %28 : vector<192x1xi32> to vector<192x1xf32>
    %c1_i32_10 = arith.constant 1 : i32
    %30 = tpu.dynamic_rotate %2 by %c1_i32_10 dim 0 : vector<192x3xf32>, i32 -> vector<192x3xf32>
    %31 = vector.broadcast %25 : vector<192x1xf32> to vector<192x3xf32>
    %32 = arith.mulf %30, %31 : vector<192x3xf32>
    %c191_i32 = arith.constant 191 : i32
    %33 = tpu.dynamic_rotate %2 by %c191_i32 dim 0 : vector<192x3xf32>, i32 -> vector<192x3xf32>
    %34 = vector.broadcast %29 : vector<192x1xf32> to vector<192x3xf32>
    %35 = arith.mulf %33, %34 : vector<192x3xf32>
    %36 = tpu.concatenate %32, %2, %35 in 1 : vector<192x3xf32>, vector<192x3xf32>, vector<192x3xf32> -> vector<192x9xf32>
    %37 = arith.truncf %36 : vector<192x9xf32> to vector<192x9xbf16>
    %cst = arith.constant dense<0.000000e+00> : vector<192x32xf32>
    %38 = tpu.matmul %37, %3, %cst {dimension_numbers = #tpu.dot_dimension_numbers<[1], [0], [0], [1], [0, 0, 1, 1], [], []>} : vector<192x9xbf16>, vector<9x32xbf16>, vector<192x32xf32> -> vector<192x32xf32>
    %39 = vector.broadcast %4 : vector<1x32xf32> to vector<192x32xf32>
    %40 = arith.addf %38, %39 : vector<192x32xf32>
    %cst_11 = arith.constant 0.000000e+00 : f32
    %41 = vector.broadcast %cst_11 : f32 to vector<192x32xf32>
    %42 = arith.maximumf %40, %41 : vector<192x32xf32>
    %43 = vector.shape_cast %42 : vector<192x32xf32> to vector<96x2x32xf32>
    %44 = vector.extract_strided_slice %43 {offsets = [0, 0, 0], sizes = [96, 1, 32], strides = [1, 1, 1]} : vector<96x2x32xf32> to vector<96x1x32xf32>
    %45 = vector.shape_cast %44 : vector<96x1x32xf32> to vector<96x32xf32>
    %46 = vector.extract_strided_slice %43 {offsets = [0, 1, 0], sizes = [96, 1, 32], strides = [1, 1, 1]} : vector<96x2x32xf32> to vector<96x1x32xf32>
    %47 = vector.shape_cast %46 : vector<96x1x32xf32> to vector<96x32xf32>
    %48 = arith.addf %45, %47 : vector<96x32xf32>
    %c0_12 = arith.constant 0 : index
    %c0_13 = arith.constant 0 : index
    %49 = vector.load %arg5[%c0_12, %c0_13] : memref<96x64xbf16, #tpu.memory_space<vmem>>, vector<96x64xbf16>
    %c0_14 = arith.constant 0 : index
    %c0_15 = arith.constant 0 : index
    %50 = vector.load %arg6[%c0_14, %c0_15] : memref<1x64xf32, #tpu.memory_space<vmem>>, vector<1x64xf32>
    %51 = tpu.iota {dimensions = array<i32: 0>} : vector<96x1xi32>
    %c48_i32 = arith.constant 48 : i32
    %c0_i32_16 = arith.constant 0 : i32
    %52 = arith.cmpi eq, %c48_i32, %c0_i32_16 : i32
    %c1_i32_17 = arith.constant 1 : i32
    %53 = arith.select %52, %c1_i32_17, %c48_i32 : i32
    %54 = vector.broadcast %53 : i32 to vector<96x1xi32>
    %55 = arith.remsi %51, %54 : vector<96x1xi32>
    %c0_i32_18 = arith.constant 0 : i32
    %56 = vector.broadcast %c0_i32_18 : i32 to vector<96x1xi32>
    %57 = arith.cmpi ne, %55, %56 : vector<96x1xi32>
    %c0_i32_19 = arith.constant 0 : i32
    %58 = vector.broadcast %c0_i32_19 : i32 to vector<96x1xi32>
    %59 = arith.cmpi slt, %55, %58 : vector<96x1xi32>
    %c0_i32_20 = arith.constant 0 : i32
    %60 = arith.cmpi slt, %53, %c0_i32_20 : i32
    %61 = vector.broadcast %60 : i1 to vector<96x1xi1>
    %62 = vector.broadcast %61 : vector<96x1xi1> to vector<96x1xi1>
    %63 = arith.xori %59, %62 : vector<96x1xi1>
    %64 = arith.andi %63, %57 : vector<96x1xi1>
    %65 = vector.broadcast %53 : i32 to vector<96x1xi32>
    %66 = arith.addi %55, %65 : vector<96x1xi32>
    %67 = arith.select %64, %66, %55 : vector<96x1xi1>, vector<96x1xi32>
    %c0_i32_21 = arith.constant 0 : i32
    %68 = vector.broadcast %c0_i32_21 : i32 to vector<96x1xi32>
    %69 = arith.cmpi ne, %67, %68 : vector<96x1xi32>
    %70 = arith.extui %69 : vector<96x1xi1> to vector<96x1xi32>
    %71 = arith.sitofp %70 : vector<96x1xi32> to vector<96x1xf32>
    %c47_i32 = arith.constant 47 : i32
    %72 = vector.broadcast %c47_i32 : i32 to vector<96x1xi32>
    %73 = arith.cmpi ne, %67, %72 : vector<96x1xi32>
    %74 = arith.extui %73 : vector<96x1xi1> to vector<96x1xi32>
    %75 = arith.sitofp %74 : vector<96x1xi32> to vector<96x1xf32>
    %c1_i32_22 = arith.constant 1 : i32
    %76 = tpu.dynamic_rotate %48 by %c1_i32_22 dim 0 : vector<96x32xf32>, i32 -> vector<96x32xf32>
    %77 = vector.broadcast %71 : vector<96x1xf32> to vector<96x32xf32>
    %78 = arith.mulf %76, %77 : vector<96x32xf32>
    %c95_i32_23 = arith.constant 95 : i32
    %79 = tpu.dynamic_rotate %48 by %c95_i32_23 dim 0 : vector<96x32xf32>, i32 -> vector<96x32xf32>
    %80 = vector.broadcast %75 : vector<96x1xf32> to vector<96x32xf32>
    %81 = arith.mulf %79, %80 : vector<96x32xf32>
    %82 = tpu.concatenate %78, %48, %81 in 1 : vector<96x32xf32>, vector<96x32xf32>, vector<96x32xf32> -> vector<96x96xf32>
    %83 = arith.truncf %82 : vector<96x96xf32> to vector<96x96xbf16>
    %cst_24 = arith.constant dense<0.000000e+00> : vector<96x64xf32>
    %84 = tpu.matmul %83, %49, %cst_24 {dimension_numbers = #tpu.dot_dimension_numbers<[1], [0], [0], [1], [0, 0, 1, 1], [], []>} : vector<96x96xbf16>, vector<96x64xbf16>, vector<96x64xf32> -> vector<96x64xf32>
    %85 = vector.broadcast %50 : vector<1x64xf32> to vector<96x64xf32>
    %86 = arith.addf %84, %85 : vector<96x64xf32>
    %cst_25 = arith.constant 0.000000e+00 : f32
    %87 = vector.broadcast %cst_25 : f32 to vector<96x64xf32>
    %88 = arith.maximumf %86, %87 : vector<96x64xf32>
    %89 = vector.shape_cast %88 : vector<96x64xf32> to vector<48x2x64xf32>
    %90 = vector.extract_strided_slice %89 {offsets = [0, 0, 0], sizes = [48, 1, 64], strides = [1, 1, 1]} : vector<48x2x64xf32> to vector<48x1x64xf32>
    %91 = vector.shape_cast %90 : vector<48x1x64xf32> to vector<48x64xf32>
    %92 = vector.extract_strided_slice %89 {offsets = [0, 1, 0], sizes = [48, 1, 64], strides = [1, 1, 1]} : vector<48x2x64xf32> to vector<48x1x64xf32>
    %93 = vector.shape_cast %92 : vector<48x1x64xf32> to vector<48x64xf32>
    %94 = arith.addf %91, %93 : vector<48x64xf32>
    %c0_26 = arith.constant 0 : index
    %c0_27 = arith.constant 0 : index
    %95 = vector.load %arg7[%c0_26, %c0_27] : memref<192x128xbf16, #tpu.memory_space<vmem>>, vector<192x128xbf16>
    %c0_28 = arith.constant 0 : index
    %c0_29 = arith.constant 0 : index
    %96 = vector.load %arg8[%c0_28, %c0_29] : memref<1x128xf32, #tpu.memory_space<vmem>>, vector<1x128xf32>
    %97 = tpu.iota {dimensions = array<i32: 0>} : vector<48x1xi32>
    %c24_i32 = arith.constant 24 : i32
    %c0_i32_30 = arith.constant 0 : i32
    %98 = arith.cmpi eq, %c24_i32, %c0_i32_30 : i32
    %c1_i32_31 = arith.constant 1 : i32
    %99 = arith.select %98, %c1_i32_31, %c24_i32 : i32
    %100 = vector.broadcast %99 : i32 to vector<48x1xi32>
    %101 = arith.remsi %97, %100 : vector<48x1xi32>
    %c0_i32_32 = arith.constant 0 : i32
    %102 = vector.broadcast %c0_i32_32 : i32 to vector<48x1xi32>
    %103 = arith.cmpi ne, %101, %102 : vector<48x1xi32>
    %c0_i32_33 = arith.constant 0 : i32
    %104 = vector.broadcast %c0_i32_33 : i32 to vector<48x1xi32>
    %105 = arith.cmpi slt, %101, %104 : vector<48x1xi32>
    %c0_i32_34 = arith.constant 0 : i32
    %106 = arith.cmpi slt, %99, %c0_i32_34 : i32
    %107 = vector.broadcast %106 : i1 to vector<48x1xi1>
    %108 = vector.broadcast %107 : vector<48x1xi1> to vector<48x1xi1>
    %109 = arith.xori %105, %108 : vector<48x1xi1>
    %110 = arith.andi %109, %103 : vector<48x1xi1>
    %111 = vector.broadcast %99 : i32 to vector<48x1xi32>
    %112 = arith.addi %101, %111 : vector<48x1xi32>
    %113 = arith.select %110, %112, %101 : vector<48x1xi1>, vector<48x1xi32>
    %c0_i32_35 = arith.constant 0 : i32
    %114 = vector.broadcast %c0_i32_35 : i32 to vector<48x1xi32>
    %115 = arith.cmpi ne, %113, %114 : vector<48x1xi32>
    %116 = arith.extui %115 : vector<48x1xi1> to vector<48x1xi32>
    %117 = arith.sitofp %116 : vector<48x1xi32> to vector<48x1xf32>
    %c23_i32 = arith.constant 23 : i32
    %118 = vector.broadcast %c23_i32 : i32 to vector<48x1xi32>
    %119 = arith.cmpi ne, %113, %118 : vector<48x1xi32>
    %120 = arith.extui %119 : vector<48x1xi1> to vector<48x1xi32>
    %121 = arith.sitofp %120 : vector<48x1xi32> to vector<48x1xf32>
    %c1_i32_36 = arith.constant 1 : i32
    %122 = tpu.dynamic_rotate %94 by %c1_i32_36 dim 0 : vector<48x64xf32>, i32 -> vector<48x64xf32>
    %123 = vector.broadcast %117 : vector<48x1xf32> to vector<48x64xf32>
    %124 = arith.mulf %122, %123 : vector<48x64xf32>
    %c47_i32_37 = arith.constant 47 : i32
    %125 = tpu.dynamic_rotate %94 by %c47_i32_37 dim 0 : vector<48x64xf32>, i32 -> vector<48x64xf32>
    %126 = vector.broadcast %121 : vector<48x1xf32> to vector<48x64xf32>
    %127 = arith.mulf %125, %126 : vector<48x64xf32>
    %128 = tpu.concatenate %124, %94, %127 in 1 : vector<48x64xf32>, vector<48x64xf32>, vector<48x64xf32> -> vector<48x192xf32>
    %129 = arith.truncf %128 : vector<48x192xf32> to vector<48x192xbf16>
    %cst_38 = arith.constant dense<0.000000e+00> : vector<48x128xf32>
    %130 = tpu.matmul %129, %95, %cst_38 {dimension_numbers = #tpu.dot_dimension_numbers<[1], [0], [0], [1], [0, 0, 1, 1], [], []>} : vector<48x192xbf16>, vector<192x128xbf16>, vector<48x128xf32> -> vector<48x128xf32>
    %131 = vector.broadcast %96 : vector<1x128xf32> to vector<48x128xf32>
    %132 = arith.addf %130, %131 : vector<48x128xf32>
    %cst_39 = arith.constant 0.000000e+00 : f32
    %133 = vector.broadcast %cst_39 : f32 to vector<48x128xf32>
    %134 = arith.maximumf %132, %133 : vector<48x128xf32>
    %135 = vector.shape_cast %134 : vector<48x128xf32> to vector<24x2x128xf32>
    %136 = vector.extract_strided_slice %135 {offsets = [0, 0, 0], sizes = [24, 1, 128], strides = [1, 1, 1]} : vector<24x2x128xf32> to vector<24x1x128xf32>
    %137 = vector.shape_cast %136 : vector<24x1x128xf32> to vector<24x128xf32>
    %138 = vector.extract_strided_slice %135 {offsets = [0, 1, 0], sizes = [24, 1, 128], strides = [1, 1, 1]} : vector<24x2x128xf32> to vector<24x1x128xf32>
    %139 = vector.shape_cast %138 : vector<24x1x128xf32> to vector<24x128xf32>
    %140 = arith.addf %137, %139 : vector<24x128xf32>
    %141 = vector.shape_cast %140 : vector<24x128xf32> to vector<2x1536xf32>
    %c0_40 = arith.constant 0 : index
    %c0_41 = arith.constant 0 : index
    %142 = vector.load %arg2[%c0_40, %c0_41] : memref<2x8xf32, #tpu.memory_space<vmem>>, vector<2x8xf32>
    %143 = tpu.concatenate %141, %142 in 1 : vector<2x1536xf32>, vector<2x8xf32> -> vector<2x1544xf32>
    %144 = arith.truncf %143 : vector<2x1544xf32> to vector<2x1544xbf16>
    %c0_42 = arith.constant 0 : index
    %c0_43 = arith.constant 0 : index
    %145 = vector.load %arg9[%c0_42, %c0_43] : memref<1544x200xbf16, #tpu.memory_space<vmem>>, vector<1544x200xbf16>
    %cst_44 = arith.constant dense<0.000000e+00> : vector<2x200xf32>
    %146 = tpu.matmul %144, %145, %cst_44 {dimension_numbers = #tpu.dot_dimension_numbers<[1], [0], [0], [1], [0, 0, 1, 1], [], []>} : vector<2x1544xbf16>, vector<1544x200xbf16>, vector<2x200xf32> -> vector<2x200xf32>
    %c0_45 = arith.constant 0 : index
    %c0_46 = arith.constant 0 : index
    %147 = vector.load %arg10[%c0_45, %c0_46] : memref<1x200xf32, #tpu.memory_space<vmem>>, vector<1x200xf32>
    %148 = vector.broadcast %147 : vector<1x200xf32> to vector<2x200xf32>
    %149 = arith.addf %146, %148 : vector<2x200xf32>
    %cst_47 = arith.constant 0.000000e+00 : f32
    %150 = vector.broadcast %cst_47 : f32 to vector<2x200xf32>
    %151 = arith.maximumf %149, %150 : vector<2x200xf32>
    %c0_48 = arith.constant 0 : index
    %c0_49 = arith.constant 0 : index
    %152 = vector.load %arg11[%c0_48, %c0_49] : memref<1x200xf32, #tpu.memory_space<vmem>>, vector<1x200xf32>
    %153 = vector.broadcast %152 : vector<1x200xf32> to vector<2x200xf32>
    %154 = arith.mulf %151, %153 : vector<2x200xf32>
    %cst_50 = arith.constant dense<0.000000e+00> : vector<2xf32>
    %155 = vector.multi_reduction <add>, %154, %cst_50 [1] : vector<2x200xf32> to vector<2xf32>
    %156 = vector.shape_cast %155 : vector<2xf32> to vector<2x1xf32>
    %c0_51 = arith.constant 0 : index
    %c0_52 = arith.constant 0 : index
    %157 = vector.load %arg12[%c0_51, %c0_52] : memref<1x1xf32, #tpu.memory_space<vmem>>, vector<1x1xf32>
    %158 = vector.broadcast %157 : vector<1x1xf32> to vector<2x1xf32>
    %159 = arith.addf %156, %158 : vector<2x1xf32>
    %c0_53 = arith.constant 0 : index
    %c0_54 = arith.constant 0 : index
    %160 = vector.load %arg13[%c0_53, %c0_54] : memref<2x1xf32, #tpu.memory_space<vmem>>, vector<2x1xf32>
    tpu.vector_store %arg13[%c0_53, %c0_54], %159 {strides = array<i32>} : memref<2x1xf32, #tpu.memory_space<vmem>>, vector<2x1xf32>,
    return
  }
  func.func @transform_0(%arg0: i32) -> (i32, i32, i32) {
    %c0_i32 = arith.constant 0 : i32
    %c0_i32_0 = arith.constant 0 : i32
    %c0_i32_1 = arith.constant 0 : i32
    return %arg0, %c0_i32, %c0_i32_0 : i32, i32, i32
  }
  func.func @transform_1(%arg0: i32) -> (i32, i32) {
    %c0_i32 = arith.constant 0 : i32
    %c0_i32_0 = arith.constant 0 : i32
    return %arg0, %c0_i32 : i32, i32
  }
  func.func @transform_2(%arg0: i32) -> (i32, i32) {
    %c0_i32 = arith.constant 0 : i32
    %c0_i32_0 = arith.constant 0 : i32
    %c0_i32_1 = arith.constant 0 : i32
    return %c0_i32, %c0_i32_0 : i32, i32
  }
  func.func @transform_3(%arg0: i32) -> (i32, i32) {
    %c0_i32 = arith.constant 0 : i32
    %c0_i32_0 = arith.constant 0 : i32
    %c0_i32_1 = arith.constant 0 : i32
    return %c0_i32, %c0_i32_0 : i32, i32
  }
  func.func @transform_4(%arg0: i32) -> (i32, i32) {
    %c0_i32 = arith.constant 0 : i32
    %c0_i32_0 = arith.constant 0 : i32
    %c0_i32_1 = arith.constant 0 : i32
    return %c0_i32, %c0_i32_0 : i32, i32
  }
  func.func @transform_5(%arg0: i32) -> (i32, i32) {
    %c0_i32 = arith.constant 0 : i32
    %c0_i32_0 = arith.constant 0 : i32
    %c0_i32_1 = arith.constant 0 : i32
    return %c0_i32, %c0_i32_0 : i32, i32
  }
  func.func @transform_6(%arg0: i32) -> (i32, i32) {
    %c0_i32 = arith.constant 0 : i32
    %c0_i32_0 = arith.constant 0 : i32
    %c0_i32_1 = arith.constant 0 : i32
    return %c0_i32, %c0_i32_0 : i32, i32
  }
  func.func @transform_7(%arg0: i32) -> (i32, i32) {
    %c0_i32 = arith.constant 0 : i32
    %c0_i32_0 = arith.constant 0 : i32
    %c0_i32_1 = arith.constant 0 : i32
    return %c0_i32, %c0_i32_0 : i32, i32
  }
  func.func @transform_8(%arg0: i32) -> (i32, i32) {
    %c0_i32 = arith.constant 0 : i32
    %c0_i32_0 = arith.constant 0 : i32
    %c0_i32_1 = arith.constant 0 : i32
    return %c0_i32, %c0_i32_0 : i32, i32
  }
  func.func @transform_9(%arg0: i32) -> (i32, i32) {
    %c0_i32 = arith.constant 0 : i32
    %c0_i32_0 = arith.constant 0 : i32
    %c0_i32_1 = arith.constant 0 : i32
    return %c0_i32, %c0_i32_0 : i32, i32
  }
  func.func @transform_10(%arg0: i32) -> (i32, i32) {
    %c0_i32 = arith.constant 0 : i32
    %c0_i32_0 = arith.constant 0 : i32
    %c0_i32_1 = arith.constant 0 : i32
    return %c0_i32, %c0_i32_0 : i32, i32
  }
  func.func @transform_11(%arg0: i32) -> (i32, i32) {
    %c0_i32 = arith.constant 0 : i32
    %c0_i32_0 = arith.constant 0 : i32
    %c0_i32_1 = arith.constant 0 : i32
    return %c0_i32, %c0_i32_0 : i32, i32
  }
  func.func @transform_12(%arg0: i32) -> (i32, i32) {
    %c0_i32 = arith.constant 0 : i32
    %c0_i32_0 = arith.constant 0 : i32
    return %arg0, %c0_i32 : i32, i32
  }
}

</mosaic_0001>

<llo_original>
// kernel: convnet_forward.1
$region0: #{convnet_forward.1}
  #allocation0 [shape = 'u32[]', space=smem, size = 0x4, offset = 0x4, fixed_abs, tag = 'smem constant byte address 0x4 - core index']
  #allocation1 [shape = 'u32[144,128]{1,0:T(1,128)}', space=vmem, size = 0x12000, scoped, tag = 'internal scratch']
  #allocation2 [shape = 'f32[1,1]{1,0:T(1,128)S(1)}', space=vmem, size = 0x200, scoped, tag = 'scoped memory for convnet_forward.1']
  %s0 = inlined_call_operand.vmem [shape: f32[2,3,96], index: 0, kind: input, shape index: {}]
  %s1 = inlined_call_operand.vmem [shape: f32[2,8], index: 1, kind: input, shape index: {}]
  %s2 = inlined_call_operand.vmem [shape: bf16[9,32], index: 2, kind: input, shape index: {}]
  %s3 = inlined_call_operand.vmem [shape: f32[1,32], index: 3, kind: input, shape index: {}]
  %s4 = inlined_call_operand.vmem [shape: bf16[96,64], index: 4, kind: input, shape index: {}]
  %s5 = inlined_call_operand.vmem [shape: f32[1,64], index: 5, kind: input, shape index: {}]
  %s6 = inlined_call_operand.vmem [shape: bf16[192,128], index: 6, kind: input, shape index: {}]
  %s7 = inlined_call_operand.vmem [shape: f32[1,128], index: 7, kind: input, shape index: {}]
  %s8 = inlined_call_operand.vmem [shape: bf16[1544,200], index: 8, kind: input, shape index: {}]
  %s9 = inlined_call_operand.vmem [shape: f32[1,200], index: 9, kind: input, shape index: {}]
  %s10 = inlined_call_operand.vmem [shape: f32[1,200], index: 10, kind: input, shape index: {}]
  %s11 = inlined_call_operand.<no memory space> [shape: f32[1,1], index: 11, kind: input, shape index: {}]
  %s12 = inlined_call_operand.vmem [shape: f32[2,1], index: 12, kind: output, shape index: {}]
  %s13 = sld [smem:[#allocation0]]
  $region58: #{convnet_forward.1} parent=0
    _
  %s15 = ssub.s32 1, %s13
  %s16 = scalar_select 0, %s15, %s13
  %v17 = vstv %s11
  %18 = vst [vmem:[#allocation2] sm:$0x1] %v17
  // Predicated region
  $region2: #{convnet_forward.1} parent=0 // pred_check
    _
  $region3: #{convnet_forward.1} parent=0 // pred_check_branch
    %20 = sbr.rel (0) target = $region5
  $region4: #{convnet_forward.1} parent=0 // pred_region
    _
  $region5: #{convnet_forward.1} parent=0 // pred_fallthru
    _
  // Predicated region
  $region6: #{convnet_forward.1} parent=0 // pred_check
    _
  $region7: #{convnet_forward.1} parent=0 // pred_check_branch
    %22 = sbr.rel (0) target = $region9
  $region8: #{convnet_forward.1} parent=0 // pred_region
    _
  $region9: #{convnet_forward.1} parent=0 // pred_fallthru
    _
  // Predicated region
  $region10: #{convnet_forward.1} parent=0 // pred_check
    _
  $region11: #{convnet_forward.1} parent=0 // pred_check_branch
    %24 = sbr.rel (0) target = $region13
  $region12: #{convnet_forward.1} parent=0 // pred_region
    _
  $region13: #{convnet_forward.1} parent=0 // pred_fallthru
    _
  // Predicated region
  $region14: #{convnet_forward.1} parent=0 // pred_check
    _
  $region15: #{convnet_forward.1} parent=0 // pred_check_branch
    %26 = sbr.rel (0) target = $region17
  $region16: #{convnet_forward.1} parent=0 // pred_region
    _
  $region17: #{convnet_forward.1} parent=0 // pred_fallthru
    _
  // Predicated region
  $region18: #{convnet_forward.1} parent=0 // pred_check
    _
  $region19: #{convnet_forward.1} parent=0 // pred_check_branch
    %28 = sbr.rel (0) target = $region21
  $region20: #{convnet_forward.1} parent=0 // pred_region
    _
  $region21: #{convnet_forward.1} parent=0 // pred_fallthru
    _
  // Predicated region
  $region22: #{convnet_forward.1} parent=0 // pred_check
    _
  $region23: #{convnet_forward.1} parent=0 // pred_check_branch
    %30 = sbr.rel (0) target = $region25
  $region24: #{convnet_forward.1} parent=0 // pred_region
    _
  $region25: #{convnet_forward.1} parent=0 // pred_fallthru
    _
  // Predicated region
  $region26: #{convnet_forward.1} parent=0 // pred_check
    _
  $region27: #{convnet_forward.1} parent=0 // pred_check_branch
    %32 = sbr.rel (0) target = $region29
  $region28: #{convnet_forward.1} parent=0 // pred_region
    _
  $region29: #{convnet_forward.1} parent=0 // pred_fallthru
    _
  // Predicated region
  $region30: #{convnet_forward.1} parent=0 // pred_check
    _
  $region31: #{convnet_forward.1} parent=0 // pred_check_branch
    %34 = sbr.rel (0) target = $region33
  $region32: #{convnet_forward.1} parent=0 // pred_region
    _
  $region33: #{convnet_forward.1} parent=0 // pred_fallthru
    _
  // Predicated region
  $region34: #{convnet_forward.1} parent=0 // pred_check
    _
  $region35: #{convnet_forward.1} parent=0 // pred_check_branch
    %36 = sbr.rel (0) target = $region37
  $region36: #{convnet_forward.1} parent=0 // pred_region
    _
  $region37: #{convnet_forward.1} parent=0 // pred_fallthru
    _
  // Predicated region
  $region38: #{convnet_forward.1} parent=0 // pred_check
    _
  $region39: #{convnet_forward.1} parent=0 // pred_check_branch
    %38 = sbr.rel (0) target = $region41
  $region40: #{convnet_forward.1} parent=0 // pred_region
    _
  $region41: #{convnet_forward.1} parent=0 // pred_fallthru
    _
  // Predicated region
  $region42: #{convnet_forward.1} parent=0 // pred_check
    _
  $region43: #{convnet_forward.1} parent=0 // pred_check_branch
    %40 = sbr.rel (0) target = $region45
  $region44: #{convnet_forward.1} parent=0 // pred_region
    _
  $region45: #{convnet_forward.1} parent=0 // pred_fallthru
    _
  // Predicated region
  $region46: #{convnet_forward.1} parent=0 // pred_check
    _
  $region47: #{convnet_forward.1} parent=0 // pred_check_branch
    %42 = sbr.rel (0) target = $region49
  $region48: #{convnet_forward.1} parent=0 // pred_region
    _
  $region49: #{convnet_forward.1} parent=0 // pred_fallthru
    _
  %v44 = vld [vmem:[%s0] sm:$0x7]
  %v45 = vld [vmem:[%s0 + $0x4] sm:$0x7]
  %46 = vxpose.xlu0.b32.start [1/16] %v44, 128
  %47 = vxpose.xlu0.b32.cont [2/16] 0.0, 128
  %48 = vxpose.xlu0.b32.cont [3/16] 0.0, 128
  %49 = vxpose.xlu0.b32.cont [4/16] 0.0, 128
  %50 = vxpose.xlu0.b32.cont [5/16] 0.0, 128
  %51 = vxpose.xlu0.b32.cont [6/16] 0.0, 128
  %52 = vxpose.xlu0.b32.cont [7/16] 0.0, 128
  %53 = vxpose.xlu0.b32.cont [8/16] 0.0, 128
  %54 = vxpose.xlu0.b32.cont [9/16] 0.0, 128
  %55 = vxpose.xlu0.b32.cont [10/16] 0.0, 128
  %56 = vxpose.xlu0.b32.cont [11/16] 0.0, 128
  %57 = vxpose.xlu0.b32.cont [12/16] 0.0, 128
  %58 = vxpose.xlu0.b32.cont [13/16] 0.0, 128
  %59 = vxpose.xlu0.b32.cont [14/16] 0.0, 128
  %60 = vxpose.xlu0.b32.cont [15/16] 0.0, 128
  %61 = vxpose.xlu0.b32.end [16/16] 0.0, 128
  %v62 = vpop.trf.xlu0
  %v63 = vpop.trf.xlu0
  %v64 = vpop.trf.xlu0
  %v65 = vpop.trf.xlu0
  %v66 = vpop.trf.xlu0
  %v67 = vpop.trf.xlu0
  %v68 = vpop.trf.xlu0
  %v69 = vpop.trf.xlu0
  %v70 = vpop.trf.xlu0
  %v71 = vpop.trf.xlu0
  %v72 = vpop.trf.xlu0
  %v73 = vpop.trf.xlu0
  %v74 = vpop.trf.xlu0
  %v75 = vpop.trf.xlu0
  %v76 = vpop.trf.xlu0
  %v77 = vpop.trf.xlu0
  %78 = vxpose.xlu0.b32.start [1/16] %v45, 128
  %79 = vxpose.xlu0.b32.cont [2/16] 0.0, 128
  %80 = vxpose.xlu0.b32.cont [3/16] 0.0, 128
  %81 = vxpose.xlu0.b32.cont [4/16] 0.0, 128
  %82 = vxpose.xlu0.b32.cont [5/16] 0.0, 128
  %83 = vxpose.xlu0.b32.cont [6/16] 0.0, 128
  %84 = vxpose.xlu0.b32.cont [7/16] 0.0, 128
  %85 = vxpose.xlu0.b32.cont [8/16] 0.0, 128
  %86 = vxpose.xlu0.b32.cont [9/16] 0.0, 128
  %87 = vxpose.xlu0.b32.cont [10/16] 0.0, 128
  %88 = vxpose.xlu0.b32.cont [11/16] 0.0, 128
  %89 = vxpose.xlu0.b32.cont [12/16] 0.0, 128
  %90 = vxpose.xlu0.b32.cont [13/16] 0.0, 128
  %91 = vxpose.xlu0.b32.cont [14/16] 0.0, 128
  %92 = vxpose.xlu0.b32.cont [15/16] 0.0, 128
  %93 = vxpose.xlu0.b32.end [16/16] 0.0, 128
  %v94 = vpop.trf.xlu0
  %v95 = vpop.trf.xlu0
  %v96 = vpop.trf.xlu0
  %v97 = vpop.trf.xlu0
  %v98 = vpop.trf.xlu0
  %v99 = vpop.trf.xlu0
  %v100 = vpop.trf.xlu0
  %v101 = vpop.trf.xlu0
  %v102 = vpop.trf.xlu0
  %v103 = vpop.trf.xlu0
  %v104 = vpop.trf.xlu0
  %v105 = vpop.trf.xlu0
  %v106 = vpop.trf.xlu0
  %v107 = vpop.trf.xlu0
  %v108 = vpop.trf.xlu0
  %v109 = vpop.trf.xlu0
  %v110 = vld [vmem:[%s2] sm:$0xf]
  %v111 = vld [vmem:[%s2 + $0x4] sm:$0x1]
  %v112 = vld [vmem:[%s3] sm:$0x1]
  %v113 = vlaneseq
  %v114 = vshrl.u32 %v113, 7
  %v115 = vadd.s32 %v114, 8
  %v116 = vadd.s32 %v114, 16
  %v117 = vadd.s32 %v114, 24
  %v118 = vadd.s32 %v114, 32
  %v119 = vadd.s32 %v114, 40
  %v120 = vadd.s32 %v114, 48
  %v121 = vadd.s32 %v114, 56
  %v122 = vadd.s32 %v114, 64
  %v123 = vadd.s32 %v114, 72
  %v124 = vadd.s32 %v114, 80
  %v125 = vadd.s32 %v114, 88
  %v126 = vadd.s32 %v114, 96
  %v127 = vadd.s32 %v114, 104
  %v128 = vadd.s32 %v114, 112
  %v129 = vadd.s32 %v114, 120
  %v130 = vadd.s32 %v114, 128
  %v131 = vadd.s32 %v114, 136
  %v132 = vadd.s32 %v114, 144
  %v133 = vadd.s32 %v114, 152
  %v134 = vadd.s32 %v114, 160
  %v135 = vadd.s32 %v114, 168
  %v136 = vadd.s32 %v114, 176
  %v137 = vadd.s32 %v114, 184
  %vm138 = vcmp.lt.s32.totalorder %v114, 0
  %v139 = vsub.s32 0, %v114
  %v140 = vsel %vm138, %v139, %v114
  %v141 = vmul.u32.u64.compose %v140, 2863311531
  %v142 = vextract.low.u32 %v141
  %v143 = vextract.high.u32 %v141
  %v144 = vshrl.u32 %v143, 6
  %v145 = vmul.u32 %v144, 96
  %v146 = vsub.s32 %v140, %v145
  %v147 = vsub.s32 0, %v146
  %v148 = vsel %vm138, %v147, %v146
  %vm149 = vcmp.lt.s32.totalorder %v115, 0
  %v150 = vsub.s32 0, %v115
  %v151 = vsel %vm149, %v150, %v115
  %v152 = vmul.u32.u64.compose %v151, 2863311531
  %v153 = vextract.low.u32 %v152
  %v154 = vextract.high.u32 %v152
  %v155 = vshrl.u32 %v154, 6
  %v156 = vmul.u32 %v155, 96
  %v157 = vsub.s32 %v151, %v156
  %v158 = vsub.s32 0, %v157
  %v159 = vsel %vm149, %v158, %v157
  %vm160 = vcmp.lt.s32.totalorder %v116, 0
  %v161 = vsub.s32 0, %v116
  %v162 = vsel %vm160, %v161, %v116
  %v163 = vmul.u32.u64.compose %v162, 2863311531
  %v164 = vextract.low.u32 %v163
  %v165 = vextract.high.u32 %v163
  %v166 = vshrl.u32 %v165, 6
  %v167 = vmul.u32 %v166, 96
  %v168 = vsub.s32 %v162, %v167
  %v169 = vsub.s32 0, %v168
  %v170 = vsel %vm160, %v169, %v168
  %vm171 = vcmp.lt.s32.totalorder %v117, 0
  %v172 = vsub.s32 0, %v117
  %v173 = vsel %vm171, %v172, %v117
  %v174 = vmul.u32.u64.compose %v173, 2863311531
  %v175 = vextract.low.u32 %v174
  %v176 = vextract.high.u32 %v174
  %v177 = vshrl.u32 %v176, 6
  %v178 = vmul.u32 %v177, 96
  %v179 = vsub.s32 %v173, %v178
  %v180 = vsub.s32 0, %v179
  %v181 = vsel %vm171, %v180, %v179
  %vm182 = vcmp.lt.s32.totalorder %v118, 0
  %v183 = vsub.s32 0, %v118
  %v184 = vsel %vm182, %v183, %v118
  %v185 = vmul.u32.u64.compose %v184, 2863311531
  %v186 = vextract.low.u32 %v185
  %v187 = vextract.high.u32 %v185
  %v188 = vshrl.u32 %v187, 6
  %v189 = vmul.u32 %v188, 96
  %v190 = vsub.s32 %v184, %v189
  %v191 = vsub.s32 0, %v190
  %v192 = vsel %vm182, %v191, %v190
  %vm193 = vcmp.lt.s32.totalorder %v119, 0
  %v194 = vsub.s32 0, %v119
  %v195 = vsel %vm193, %v194, %v119
  %v196 = vmul.u32.u64.compose %v195, 2863311531
  %v197 = vextract.low.u32 %v196
  %v198 = vextract.high.u32 %v196
  %v199 = vshrl.u32 %v198, 6
  %v200 = vmul.u32 %v199, 96
  %v201 = vsub.s32 %v195, %v200
  %v202 = vsub.s32 0, %v201
  %v203 = vsel %vm193, %v202, %v201
  %vm204 = vcmp.lt.s32.totalorder %v120, 0
  %v205 = vsub.s32 0, %v120
  %v206 = vsel %vm204, %v205, %v120
  %v207 = vmul.u32.u64.compose %v206, 2863311531
  %v208 = vextract.low.u32 %v207
  %v209 = vextract.high.u32 %v207
  %v210 = vshrl.u32 %v209, 6
  %v211 = vmul.u32 %v210, 96
  %v212 = vsub.s32 %v206, %v211
  %v213 = vsub.s32 0, %v212
  %v214 = vsel %vm204, %v213, %v212
  %vm215 = vcmp.lt.s32.totalorder %v121, 0
  %v216 = vsub.s32 0, %v121
  %v217 = vsel %vm215, %v216, %v121
  %v218 = vmul.u32.u64.compose %v217, 2863311531
  %v219 = vextract.low.u32 %v218
  %v220 = vextract.high.u32 %v218
  %v221 = vshrl.u32 %v220, 6
  %v222 = vmul.u32 %v221, 96
  %v223 = vsub.s32 %v217, %v222
  %v224 = vsub.s32 0, %v223
  %v225 = vsel %vm215, %v224, %v223
  %vm226 = vcmp.lt.s32.totalorder %v122, 0
  %v227 = vsub.s32 0, %v122
  %v228 = vsel %vm226, %v227, %v122
  %v229 = vmul.u32.u64.compose %v228, 2863311531
  %v230 = vextract.low.u32 %v229
  %v231 = vextract.high.u32 %v229
  %v232 = vshrl.u32 %v231, 6
  %v233 = vmul.u32 %v232, 96
  %v234 = vsub.s32 %v228, %v233
  %v235 = vsub.s32 0, %v234
  %v236 = vsel %vm226, %v235, %v234
  %vm237 = vcmp.lt.s32.totalorder %v123, 0
  %v238 = vsub.s32 0, %v123
  %v239 = vsel %vm237, %v238, %v123
  %v240 = vmul.u32.u64.compose %v239, 2863311531
  %v241 = vextract.low.u32 %v240
  %v242 = vextract.high.u32 %v240
  %v243 = vshrl.u32 %v242, 6
  %v244 = vmul.u32 %v243, 96
  %v245 = vsub.s32 %v239, %v244
  %v246 = vsub.s32 0, %v245
  %v247 = vsel %vm237, %v246, %v245
  %vm248 = vcmp.lt.s32.totalorder %v124, 0
  %v249 = vsub.s32 0, %v124
  %v250 = vsel %vm248, %v249, %v124
  %v251 = vmul.u32.u64.compose %v250, 2863311531
  %v252 = vextract.low.u32 %v251
  %v253 = vextract.high.u32 %v251
  %v254 = vshrl.u32 %v253, 6
  %v255 = vmul.u32 %v254, 96
  %v256 = vsub.s32 %v250, %v255
  %v257 = vsub.s32 0, %v256
  %v258 = vsel %vm248, %v257, %v256
  %vm259 = vcmp.lt.s32.totalorder %v125, 0
  %v260 = vsub.s32 0, %v125
  %v261 = vsel %vm259, %v260, %v125
  %v262 = vmul.u32.u64.compose %v261, 2863311531
  %v263 = vextract.low.u32 %v262
  %v264 = vextract.high.u32 %v262
  %v265 = vshrl.u32 %v264, 6
  %v266 = vmul.u32 %v265, 96
  %v267 = vsub.s32 %v261, %v266
  %v268 = vsub.s32 0, %v267
  %v269 = vsel %vm259, %v268, %v267
  %vm270 = vcmp.lt.s32.totalorder %v126, 0
  %v271 = vsub.s32 0, %v126
  %v272 = vsel %vm270, %v271, %v126
  %v273 = vmul.u32.u64.compose %v272, 2863311531
  %v274 = vextract.low.u32 %v273
  %v275 = vextract.high.u32 %v273
  %v276 = vshrl.u32 %v275, 6
  %v277 = vmul.u32 %v276, 96
  %v278 = vsub.s32 %v272, %v277
  %v279 = vsub.s32 0, %v278
  %v280 = vsel %vm270, %v279, %v278
  %vm281 = vcmp.lt.s32.totalorder %v127, 0
  %v282 = vsub.s32 0, %v127
  %v283 = vsel %vm281, %v282, %v127
  %v284 = vmul.u32.u64.compose %v283, 2863311531
  %v285 = vextract.low.u32 %v284
  %v286 = vextract.high.u32 %v284
  %v287 = vshrl.u32 %v286, 6
  %v288 = vmul.u32 %v287, 96
  %v289 = vsub.s32 %v283, %v288
  %v290 = vsub.s32 0, %v289
  %v291 = vsel %vm281, %v290, %v289
  %vm292 = vcmp.lt.s32.totalorder %v128, 0
  %v293 = vsub.s32 0, %v128
  %v294 = vsel %vm292, %v293, %v128
  %v295 = vmul.u32.u64.compose %v294, 2863311531
  %v296 = vextract.low.u32 %v295
  %v297 = vextract.high.u32 %v295
  %v298 = vshrl.u32 %v297, 6
  %v299 = vmul.u32 %v298, 96
  %v300 = vsub.s32 %v294, %v299
  %v301 = vsub.s32 0, %v300
  %v302 = vsel %vm292, %v301, %v300
  %vm303 = vcmp.lt.s32.totalorder %v129, 0
  %v304 = vsub.s32 0, %v129
  %v305 = vsel %vm303, %v304, %v129
  %v306 = vmul.u32.u64.compose %v305, 2863311531
  %v307 = vextract.low.u32 %v306
  %v308 = vextract.high.u32 %v306
  %v309 = vshrl.u32 %v308, 6
  %v310 = vmul.u32 %v309, 96
  %v311 = vsub.s32 %v305, %v310
  %v312 = vsub.s32 0, %v311
  %v313 = vsel %vm303, %v312, %v311
  %vm314 = vcmp.lt.s32.totalorder %v130, 0
  %v315 = vsub.s32 0, %v130
  %v316 = vsel %vm314, %v315, %v130
  %v317 = vmul.u32.u64.compose %v316, 2863311531
  %v318 = vextract.low.u32 %v317
  %v319 = vextract.high.u32 %v317
  %v320 = vshrl.u32 %v319, 6
  %v321 = vmul.u32 %v320, 96
  %v322 = vsub.s32 %v316, %v321
  %v323 = vsub.s32 0, %v322
  %v324 = vsel %vm314, %v323, %v322
  %vm325 = vcmp.lt.s32.totalorder %v131, 0
  %v326 = vsub.s32 0, %v131
  %v327 = vsel %vm325, %v326, %v131
  %v328 = vmul.u32.u64.compose %v327, 2863311531
  %v329 = vextract.low.u32 %v328
  %v330 = vextract.high.u32 %v328
  %v331 = vshrl.u32 %v330, 6
  %v332 = vmul.u32 %v331, 96
  %v333 = vsub.s32 %v327, %v332
  %v334 = vsub.s32 0, %v333
  %v335 = vsel %vm325, %v334, %v333
  %vm336 = vcmp.lt.s32.totalorder %v132, 0
  %v337 = vsub.s32 0, %v132
  %v338 = vsel %vm336, %v337, %v132
  %v339 = vmul.u32.u64.compose %v338, 2863311531
  %v340 = vextract.low.u32 %v339
  %v341 = vextract.high.u32 %v339
  %v342 = vshrl.u32 %v341, 6
  %v343 = vmul.u32 %v342, 96
  %v344 = vsub.s32 %v338, %v343
  %v345 = vsub.s32 0, %v344
  %v346 = vsel %vm336, %v345, %v344
  %vm347 = vcmp.lt.s32.totalorder %v133, 0
  %v348 = vsub.s32 0, %v133
  %v349 = vsel %vm347, %v348, %v133
  %v350 = vmul.u32.u64.compose %v349, 2863311531
  %v351 = vextract.low.u32 %v350
  %v352 = vextract.high.u32 %v350
  %v353 = vshrl.u32 %v352, 6
  %v354 = vmul.u32 %v353, 96
  %v355 = vsub.s32 %v349, %v354
  %v356 = vsub.s32 0, %v355
  %v357 = vsel %vm347, %v356, %v355
  %vm358 = vcmp.lt.s32.totalorder %v134, 0
  %v359 = vsub.s32 0, %v134
  %v360 = vsel %vm358, %v359, %v134
  %v361 = vmul.u32.u64.compose %v360, 2863311531
  %v362 = vextract.low.u32 %v361
  %v363 = vextract.high.u32 %v361
  %v364 = vshrl.u32 %v363, 6
  %v365 = vmul.u32 %v364, 96
  %v366 = vsub.s32 %v360, %v365
  %v367 = vsub.s32 0, %v366
  %v368 = vsel %vm358, %v367, %v366
  %vm369 = vcmp.lt.s32.totalorder %v135, 0
  %v370 = vsub.s32 0, %v135
  %v371 = vsel %vm369, %v370, %v135
  %v372 = vmul.u32.u64.compose %v371, 2863311531
  %v373 = vextract.low.u32 %v372
  %v374 = vextract.high.u32 %v372
  %v375 = vshrl.u32 %v374, 6
  %v376 = vmul.u32 %v375, 96
  %v377 = vsub.s32 %v371, %v376
  %v378 = vsub.s32 0, %v377
  %v379 = vsel %vm369, %v378, %v377
  %vm380 = vcmp.lt.s32.totalorder %v136, 0
  %v381 = vsub.s32 0, %v136
  %v382 = vsel %vm380, %v381, %v136
  %v383 = vmul.u32.u64.compose %v382, 2863311531
  %v384 = vextract.low.u32 %v383
  %v385 = vextract.high.u32 %v383
  %v386 = vshrl.u32 %v385, 6
  %v387 = vmul.u32 %v386, 96
  %v388 = vsub.s32 %v382, %v387
  %v389 = vsub.s32 0, %v388
  %v390 = vsel %vm380, %v389, %v388
  %vm391 = vcmp.lt.s32.totalorder %v137, 0
  %v392 = vsub.s32 0, %v137
  %v393 = vsel %vm391, %v392, %v137
  %v394 = vmul.u32.u64.compose %v393, 2863311531
  %v395 = vextract.low.u32 %v394
  %v396 = vextract.high.u32 %v394
  %v397 = vshrl.u32 %v396, 6
  %v398 = vmul.u32 %v397, 96
  %v399 = vsub.s32 %v393, %v398
  %v400 = vsub.s32 0, %v399
  %v401 = vsel %vm391, %v400, %v399
  %vm402 = vcmp.ne.s32.totalorder %v148, 0
  %vm403 = vcmp.ne.s32.totalorder %v159, 0
  %vm404 = vcmp.ne.s32.totalorder %v170, 0
  %vm405 = vcmp.ne.s32.totalorder %v181, 0
  %vm406 = vcmp.ne.s32.totalorder %v192, 0
  %vm407 = vcmp.ne.s32.totalorder %v203, 0
  %vm408 = vcmp.ne.s32.totalorder %v214, 0
  %vm409 = vcmp.ne.s32.totalorder %v225, 0
  %vm410 = vcmp.ne.s32.totalorder %v236, 0
  %vm411 = vcmp.ne.s32.totalorder %v247, 0
  %vm412 = vcmp.ne.s32.totalorder %v258, 0
  %vm413 = vcmp.ne.s32.totalorder %v269, 0
  %vm414 = vcmp.ne.s32.totalorder %v280, 0
  %vm415 = vcmp.ne.s32.totalorder %v291, 0
  %vm416 = vcmp.ne.s32.totalorder %v302, 0
  %vm417 = vcmp.ne.s32.totalorder %v313, 0
  %vm418 = vcmp.ne.s32.totalorder %v324, 0
  %vm419 = vcmp.ne.s32.totalorder %v335, 0
  %vm420 = vcmp.ne.s32.totalorder %v346, 0
  %vm421 = vcmp.ne.s32.totalorder %v357, 0
  %vm422 = vcmp.ne.s32.totalorder %v368, 0
  %vm423 = vcmp.ne.s32.totalorder %v379, 0
  %vm424 = vcmp.ne.s32.totalorder %v390, 0
  %vm425 = vcmp.ne.s32.totalorder %v401, 0
  %vm426 = vcmp.lt.s32.totalorder %v148, 0
  %vm427 = vcmp.lt.s32.totalorder %v159, 0
  %vm428 = vcmp.lt.s32.totalorder %v170, 0
  %vm429 = vcmp.lt.s32.totalorder %v181, 0
  %vm430 = vcmp.lt.s32.totalorder %v192, 0
  %vm431 = vcmp.lt.s32.totalorder %v203, 0
  %vm432 = vcmp.lt.s32.totalorder %v214, 0
  %vm433 = vcmp.lt.s32.totalorder %v225, 0
  %vm434 = vcmp.lt.s32.totalorder %v236, 0
  %vm435 = vcmp.lt.s32.totalorder %v247, 0
  %vm436 = vcmp.lt.s32.totalorder %v258, 0
  %vm437 = vcmp.lt.s32.totalorder %v269, 0
  %vm438 = vcmp.lt.s32.totalorder %v280, 0
  %vm439 = vcmp.lt.s32.totalorder %v291, 0
  %vm440 = vcmp.lt.s32.totalorder %v302, 0
  %vm441 = vcmp.lt.s32.totalorder %v313, 0
  %vm442 = vcmp.lt.s32.totalorder %v324, 0
  %vm443 = vcmp.lt.s32.totalorder %v335, 0
  %vm444 = vcmp.lt.s32.totalorder %v346, 0
  %vm445 = vcmp.lt.s32.totalorder %v357, 0
  %vm446 = vcmp.lt.s32.totalorder %v368, 0
  %vm447 = vcmp.lt.s32.totalorder %v379, 0
  %vm448 = vcmp.lt.s32.totalorder %v390, 0
  %vm449 = vcmp.lt.s32.totalorder %v401, 0
  %vm450 = vmand %vm426, %vm402
  %vm451 = vmand %vm427, %vm403
  %vm452 = vmand %vm428, %vm404
  %vm453 = vmand %vm429, %vm405
  %vm454 = vmand %vm430, %vm406
  %vm455 = vmand %vm431, %vm407
  %vm456 = vmand %vm432, %vm408
  %vm457 = vmand %vm433, %vm409
  %vm458 = vmand %vm434, %vm410
  %vm459 = vmand %vm435, %vm411
  %vm460 = vmand %vm436, %vm412
  %vm461 = vmand %vm437, %vm413
  %vm462 = vmand %vm438, %vm414
  %vm463 = vmand %vm439, %vm415
  %vm464 = vmand %vm440, %vm416
  %vm465 = vmand %vm441, %vm417
  %vm466 = vmand %vm442, %vm418
  %vm467 = vmand %vm443, %vm419
  %vm468 = vmand %vm444, %vm420
  %vm469 = vmand %vm445, %vm421
  %vm470 = vmand %vm446, %vm422
  %vm471 = vmand %vm447, %vm423
  %vm472 = vmand %vm448, %vm424
  %vm473 = vmand %vm449, %vm425
  %v474 = vadd.s32 %v148, 96
  %v475 = vadd.s32 %v159, 96
  %v476 = vadd.s32 %v170, 96
  %v477 = vadd.s32 %v181, 96
  %v478 = vadd.s32 %v192, 96
  %v479 = vadd.s32 %v203, 96
  %v480 = vadd.s32 %v214, 96
  %v481 = vadd.s32 %v225, 96
  %v482 = vadd.s32 %v236, 96
  %v483 = vadd.s32 %v247, 96
  %v484 = vadd.s32 %v258, 96
  %v485 = vadd.s32 %v269, 96
  %v486 = vadd.s32 %v280, 96
  %v487 = vadd.s32 %v291, 96
  %v488 = vadd.s32 %v302, 96
  %v489 = vadd.s32 %v313, 96
  %v490 = vadd.s32 %v324, 96
  %v491 = vadd.s32 %v335, 96
  %v492 = vadd.s32 %v346, 96
  %v493 = vadd.s32 %v357, 96
  %v494 = vadd.s32 %v368, 96
  %v495 = vadd.s32 %v379, 96
  %v496 = vadd.s32 %v390, 96
  %v497 = vadd.s32 %v401, 96
  %v498 = vsel %vm450, %v474, %v148
  %v499 = vsel %vm451, %v475, %v159
  %v500 = vsel %vm452, %v476, %v170
  %v501 = vsel %vm453, %v477, %v181
  %v502 = vsel %vm454, %v478, %v192
  %v503 = vsel %vm455, %v479, %v203
  %v504 = vsel %vm456, %v480, %v214
  %v505 = vsel %vm457, %v481, %v225
  %v506 = vsel %vm458, %v482, %v236
  %v507 = vsel %vm459, %v483, %v247
  %v508 = vsel %vm460, %v484, %v258
  %v509 = vsel %vm461, %v485, %v269
  %v510 = vsel %vm462, %v486, %v280
  %v511 = vsel %vm463, %v487, %v291
  %v512 = vsel %vm464, %v488, %v302
  %v513 = vsel %vm465, %v489, %v313
  %v514 = vsel %vm466, %v490, %v324
  %v515 = vsel %vm467, %v491, %v335
  %v516 = vsel %vm468, %v492, %v346
  %v517 = vsel %vm469, %v493, %v357
  %v518 = vsel %vm470, %v494, %v368
  %v519 = vsel %vm471, %v495, %v379
  %v520 = vsel %vm472, %v496, %v390
  %v521 = vsel %vm473, %v497, %v401
  %vm522 = vcmp.ne.s32.totalorder %v498, 0
  %vm523 = vcmp.ne.s32.totalorder %v499, 0
  %vm524 = vcmp.ne.s32.totalorder %v500, 0
  %vm525 = vcmp.ne.s32.totalorder %v501, 0
  %vm526 = vcmp.ne.s32.totalorder %v502, 0
  %vm527 = vcmp.ne.s32.totalorder %v503, 0
  %vm528 = vcmp.ne.s32.totalorder %v504, 0
  %vm529 = vcmp.ne.s32.totalorder %v505, 0
  %vm530 = vcmp.ne.s32.totalorder %v506, 0
  %vm531 = vcmp.ne.s32.totalorder %v507, 0
  %vm532 = vcmp.ne.s32.totalorder %v508, 0
  %vm533 = vcmp.ne.s32.totalorder %v509, 0
  %vm534 = vcmp.ne.s32.totalorder %v510, 0
  %vm535 = vcmp.ne.s32.totalorder %v511, 0
  %vm536 = vcmp.ne.s32.totalorder %v512, 0
  %vm537 = vcmp.ne.s32.totalorder %v513, 0
  %vm538 = vcmp.ne.s32.totalorder %v514, 0
  %vm539 = vcmp.ne.s32.totalorder %v515, 0
  %vm540 = vcmp.ne.s32.totalorder %v516, 0
  %vm541 = vcmp.ne.s32.totalorder %v517, 0
  %vm542 = vcmp.ne.s32.totalorder %v518, 0
  %vm543 = vcmp.ne.s32.totalorder %v519, 0
  %vm544 = vcmp.ne.s32.totalorder %v520, 0
  %vm545 = vcmp.ne.s32.totalorder %v521, 0
  %v546 = vsel %vm522, 1, 0
  %v547 = vsel %vm523, 1, 0
  %v548 = vsel %vm524, 1, 0
  %v549 = vsel %vm525, 1, 0
  %v550 = vsel %vm526, 1, 0
  %v551 = vsel %vm527, 1, 0
  %v552 = vsel %vm528, 1, 0
  %v553 = vsel %vm529, 1, 0
  %v554 = vsel %vm530, 1, 0
  %v555 = vsel %vm531, 1, 0
  %v556 = vsel %vm532, 1, 0
  %v557 = vsel %vm533, 1, 0
  %v558 = vsel %vm534, 1, 0
  %v559 = vsel %vm535, 1, 0
  %v560 = vsel %vm536, 1, 0
  %v561 = vsel %vm537, 1, 0
  %v562 = vsel %vm538, 1, 0
  %v563 = vsel %vm539, 1, 0
  %v564 = vsel %vm540, 1, 0
  %v565 = vsel %vm541, 1, 0
  %v566 = vsel %vm542, 1, 0
  %v567 = vsel %vm543, 1, 0
  %v568 = vsel %vm544, 1, 0
  %v569 = vsel %vm545, 1, 0
  %v570 = vcvt.s32.f32 %v546
  %v571 = vcvt.s32.f32 %v547
  %v572 = vcvt.s32.f32 %v548
  %v573 = vcvt.s32.f32 %v549
  %v574 = vcvt.s32.f32 %v550
  %v575 = vcvt.s32.f32 %v551
  %v576 = vcvt.s32.f32 %v552
  %v577 = vcvt.s32.f32 %v553
  %v578 = vcvt.s32.f32 %v554
  %v579 = vcvt.s32.f32 %v555
  %v580 = vcvt.s32.f32 %v556
  %v581 = vcvt.s32.f32 %v557
  %v582 = vcvt.s32.f32 %v558
  %v583 = vcvt.s32.f32 %v559
  %v584 = vcvt.s32.f32 %v560
  %v585 = vcvt.s32.f32 %v561
  %v586 = vcvt.s32.f32 %v562
  %v587 = vcvt.s32.f32 %v563
  %v588 = vcvt.s32.f32 %v564
  %v589 = vcvt.s32.f32 %v565
  %v590 = vcvt.s32.f32 %v566
  %v591 = vcvt.s32.f32 %v567
  %v592 = vcvt.s32.f32 %v568
  %v593 = vcvt.s32.f32 %v569
  %vm594 = vcmp.ne.s32.totalorder %v498, 95
  %vm595 = vcmp.ne.s32.totalorder %v499, 95
  %vm596 = vcmp.ne.s32.totalorder %v500, 95
  %vm597 = vcmp.ne.s32.totalorder %v501, 95
  %vm598 = vcmp.ne.s32.totalorder %v502, 95
  %vm599 = vcmp.ne.s32.totalorder %v503, 95
  %vm600 = vcmp.ne.s32.totalorder %v504, 95
  %vm601 = vcmp.ne.s32.totalorder %v505, 95
  %vm602 = vcmp.ne.s32.totalorder %v506, 95
  %vm603 = vcmp.ne.s32.totalorder %v507, 95
  %vm604 = vcmp.ne.s32.totalorder %v508, 95
  %vm605 = vcmp.ne.s32.totalorder %v509, 95
  %vm606 = vcmp.ne.s32.totalorder %v510, 95
  %vm607 = vcmp.ne.s32.totalorder %v511, 95
  %vm608 = vcmp.ne.s32.totalorder %v512, 95
  %vm609 = vcmp.ne.s32.totalorder %v513, 95
  %vm610 = vcmp.ne.s32.totalorder %v514, 95
  %vm611 = vcmp.ne.s32.totalorder %v515, 95
  %vm612 = vcmp.ne.s32.totalorder %v516, 95
  %vm613 = vcmp.ne.s32.totalorder %v517, 95
  %vm614 = vcmp.ne.s32.totalorder %v518, 95
  %vm615 = vcmp.ne.s32.totalorder %v519, 95
  %vm616 = vcmp.ne.s32.totalorder %v520, 95
  %vm617 = vcmp.ne.s32.totalorder %v521, 95
  %v618 = vsel %vm594, 1, 0
  %v619 = vsel %vm595, 1, 0
  %v620 = vsel %vm596, 1, 0
  %v621 = vsel %vm597, 1, 0
  %v622 = vsel %vm598, 1, 0
  %v623 = vsel %vm599, 1, 0
  %v624 = vsel %vm600, 1, 0
  %v625 = vsel %vm601, 1, 0
  %v626 = vsel %vm602, 1, 0
  %v627 = vsel %vm603, 1, 0
  %v628 = vsel %vm604, 1, 0
  %v629 = vsel %vm605, 1, 0
  %v630 = vsel %vm606, 1, 0
  %v631 = vsel %vm607, 1, 0
  %v632 = vsel %vm608, 1, 0
  %v633 = vsel %vm609, 1, 0
  %v634 = vsel %vm610, 1, 0
  %v635 = vsel %vm611, 1, 0
  %v636 = vsel %vm612, 1, 0
  %v637 = vsel %vm613, 1, 0
  %v638 = vsel %vm614, 1, 0
  %v639 = vsel %vm615, 1, 0
  %v640 = vsel %vm616, 1, 0
  %v641 = vsel %vm617, 1, 0
  %v642 = vcvt.s32.f32 %v618
  %v643 = vcvt.s32.f32 %v619
  %v644 = vcvt.s32.f32 %v620
  %v645 = vcvt.s32.f32 %v621
  %v646 = vcvt.s32.f32 %v622
  %v647 = vcvt.s32.f32 %v623
  %v648 = vcvt.s32.f32 %v624
  %v649 = vcvt.s32.f32 %v625
  %v650 = vcvt.s32.f32 %v626
  %v651 = vcvt.s32.f32 %v627
  %v652 = vcvt.s32.f32 %v628
  %v653 = vcvt.s32.f32 %v629
  %v654 = vcvt.s32.f32 %v630
  %v655 = vcvt.s32.f32 %v631
  %v656 = vcvt.s32.f32 %v632
  %v657 = vcvt.s32.f32 %v633
  %v658 = vcvt.s32.f32 %v634
  %v659 = vcvt.s32.f32 %v635
  %v660 = vcvt.s32.f32 %v636
  %v661 = vcvt.s32.f32 %v637
  %v662 = vcvt.s32.f32 %v638
  %v663 = vcvt.s32.f32 %v639
  %v664 = vcvt.s32.f32 %v640
  %v665 = vcvt.s32.f32 %v641
  %v666 = vrot.slane %v62, 7
  %v667 = vrot.slane %v63, 7
  %v668 = vrot.slane %v64, 7
  %v669 = vrot.slane %v65, 7
  %v670 = vrot.slane %v66, 7
  %v671 = vrot.slane %v67, 7
  %v672 = vrot.slane %v68, 7
  %v673 = vrot.slane %v69, 7
  %v674 = vrot.slane %v70, 7
  %v675 = vrot.slane %v71, 7
  %v676 = vrot.slane %v72, 7
  %v677 = vrot.slane %v73, 7
  %v678 = vrot.slane %v94, 7
  %v679 = vrot.slane %v95, 7
  %v680 = vrot.slane %v96, 7
  %v681 = vrot.slane %v97, 7
  %v682 = vrot.slane %v98, 7
  %v683 = vrot.slane %v99, 7
  %v684 = vrot.slane %v100, 7
  %v685 = vrot.slane %v101, 7
  %v686 = vrot.slane %v102, 7
  %v687 = vrot.slane %v103, 7
  %v688 = vrot.slane %v104, 7
  %v689 = vrot.slane %v105, 7
  %vm690 = vcmp.lt.s32.totalorder %v114, 1
  %v691 = vsel %vm690, %v688, %v689
  %v692 = vsel %vm690, %v687, %v688
  %v693 = vsel %vm690, %v686, %v687
  %v694 = vsel %vm690, %v685, %v686
  %v695 = vsel %vm690, %v684, %v685
  %v696 = vsel %vm690, %v683, %v684
  %v697 = vsel %vm690, %v682, %v683
  %v698 = vsel %vm690, %v681, %v682
  %v699 = vsel %vm690, %v680, %v681
  %v700 = vsel %vm690, %v679, %v680
  %v701 = vsel %vm690, %v678, %v679
  %v702 = vsel %vm690, %v677, %v678
  %v703 = vsel %vm690, %v676, %v677
  %v704 = vsel %vm690, %v675, %v676
  %v705 = vsel %vm690, %v674, %v675
  %v706 = vsel %vm690, %v673, %v674
  %v707 = vsel %vm690, %v672, %v673
  %v708 = vsel %vm690, %v671, %v672
  %v709 = vsel %vm690, %v670, %v671
  %v710 = vsel %vm690, %v669, %v670
  %v711 = vsel %vm690, %v668, %v669
  %v712 = vsel %vm690, %v667, %v668
  %v713 = vsel %vm690, %v666, %v667
  %v714 = vsel %vm690, %v689, %v666
  %v715 = vmul.f32 %v714, %v570
  %v716 = vmul.f32 %v713, %v571
  %v717 = vmul.f32 %v712, %v572
  %v718 = vmul.f32 %v711, %v573
  %v719 = vmul.f32 %v710, %v574
  %v720 = vmul.f32 %v709, %v575
  %v721 = vmul.f32 %v708, %v576
  %v722 = vmul.f32 %v707, %v577
  %v723 = vmul.f32 %v706, %v578
  %v724 = vmul.f32 %v705, %v579
  %v725 = vmul.f32 %v704, %v580
  %v726 = vmul.f32 %v703, %v581
  %v727 = vmul.f32 %v702, %v582
  %v728 = vmul.f32 %v701, %v583
  %v729 = vmul.f32 %v700, %v584
  %v730 = vmul.f32 %v699, %v585
  %v731 = vmul.f32 %v698, %v586
  %v732 = vmul.f32 %v697, %v587
  %v733 = vmul.f32 %v696, %v588
  %v734 = vmul.f32 %v695, %v589
  %v735 = vmul.f32 %v694, %v590
  %v736 = vmul.f32 %v693, %v591
  %v737 = vmul.f32 %v692, %v592
  %v738 = vmul.f32 %v691, %v593
  %v739 = vrot.slane %v62, 1
  %v740 = vrot.slane %v63, 1
  %v741 = vrot.slane %v64, 1
  %v742 = vrot.slane %v65, 1
  %v743 = vrot.slane %v66, 1
  %v744 = vrot.slane %v67, 1
  %v745 = vrot.slane %v68, 1
  %v746 = vrot.slane %v69, 1
  %v747 = vrot.slane %v70, 1
  %v748 = vrot.slane %v71, 1
  %v749 = vrot.slane %v72, 1
  %v750 = vrot.slane %v73, 1
  %v751 = vrot.slane %v94, 1
  %v752 = vrot.slane %v95, 1
  %v753 = vrot.slane %v96, 1
  %v754 = vrot.slane %v97, 1
  %v755 = vrot.slane %v98, 1
  %v756 = vrot.slane %v99, 1
  %v757 = vrot.slane %v100, 1
  %v758 = vrot.slane %v101, 1
  %v759 = vrot.slane %v102, 1
  %v760 = vrot.slane %v103, 1
  %v761 = vrot.slane %v104, 1
  %v762 = vrot.slane %v105, 1
  %vm763 = vcmp.lt.s32.totalorder %v114, 7
  %v764 = vsel %vm763, %v761, %v762
  %v765 = vsel %vm763, %v760, %v761
  %v766 = vsel %vm763, %v759, %v760
  %v767 = vsel %vm763, %v758, %v759
  %v768 = vsel %vm763, %v757, %v758
  %v769 = vsel %vm763, %v756, %v757
  %v770 = vsel %vm763, %v755, %v756
  %v771 = vsel %vm763, %v754, %v755
  %v772 = vsel %vm763, %v753, %v754
  %v773 = vsel %vm763, %v752, %v753
  %v774 = vsel %vm763, %v751, %v752
  %v775 = vsel %vm763, %v750, %v751
  %v776 = vsel %vm763, %v749, %v750
  %v777 = vsel %vm763, %v748, %v749
  %v778 = vsel %vm763, %v747, %v748
  %v779 = vsel %vm763, %v746, %v747
  %v780 = vsel %vm763, %v745, %v746
  %v781 = vsel %vm763, %v744, %v745
  %v782 = vsel %vm763, %v743, %v744
  %v783 = vsel %vm763, %v742, %v743
  %v784 = vsel %vm763, %v741, %v742
  %v785 = vsel %vm763, %v740, %v741
  %v786 = vsel %vm763, %v739, %v740
  %v787 = vsel %vm763, %v762, %v739
  %v788 = vmul.f32 %v786, %v642
  %v789 = vmul.f32 %v785, %v643
  %v790 = vmul.f32 %v784, %v644
  %v791 = vmul.f32 %v783, %v645
  %v792 = vmul.f32 %v782, %v646
  %v793 = vmul.f32 %v781, %v647
  %v794 = vmul.f32 %v780, %v648
  %v795 = vmul.f32 %v779, %v649
  %v796 = vmul.f32 %v778, %v650
  %v797 = vmul.f32 %v777, %v651
  %v798 = vmul.f32 %v776, %v652
  %v799 = vmul.f32 %v775, %v653
  %v800 = vmul.f32 %v774, %v654
  %v801 = vmul.f32 %v773, %v655
  %v802 = vmul.f32 %v772, %v656
  %v803 = vmul.f32 %v771, %v657
  %v804 = vmul.f32 %v770, %v658
  %v805 = vmul.f32 %v769, %v659
  %v806 = vmul.f32 %v768, %v660
  %v807 = vmul.f32 %v767, %v661
  %v808 = vmul.f32 %v766, %v662
  %v809 = vmul.f32 %v765, %v663
  %v810 = vmul.f32 %v764, %v664
  %v811 = vmul.f32 %v787, %v665
  %836 = vrot.lane.b32.xlu0 %v62, 3
  %v837 = vpop.permute.xlu0 %836
  %838 = vrot.lane.b32.xlu0 %v63, 3
  %v839 = vpop.permute.xlu0 %838
  %840 = vrot.lane.b32.xlu0 %v64, 3
  %v841 = vpop.permute.xlu0 %840
  %842 = vrot.lane.b32.xlu0 %v65, 3
  %v843 = vpop.permute.xlu0 %842
  %844 = vrot.lane.b32.xlu0 %v66, 3
  %v845 = vpop.permute.xlu0 %844
  %846 = vrot.lane.b32.xlu0 %v67, 3
  %v847 = vpop.permute.xlu0 %846
  %848 = vrot.lane.b32.xlu0 %v68, 3
  %v849 = vpop.permute.xlu0 %848
  %850 = vrot.lane.b32.xlu0 %v69, 3
  %v851 = vpop.permute.xlu0 %850
  %852 = vrot.lane.b32.xlu0 %v70, 3
  %v853 = vpop.permute.xlu0 %852
  %854 = vrot.lane.b32.xlu0 %v71, 3
  %v855 = vpop.permute.xlu0 %854
  %856 = vrot.lane.b32.xlu0 %v72, 3
  %v857 = vpop.permute.xlu0 %856
  %858 = vrot.lane.b32.xlu0 %v73, 3
  %v859 = vpop.permute.xlu0 %858
  %860 = vrot.lane.b32.xlu0 %v94, 3
  %v861 = vpop.permute.xlu0 %860
  %862 = vrot.lane.b32.xlu0 %v95, 3
  %v863 = vpop.permute.xlu0 %862
  %864 = vrot.lane.b32.xlu0 %v96, 3
  %v865 = vpop.permute.xlu0 %864
  %866 = vrot.lane.b32.xlu0 %v97, 3
  %v867 = vpop.permute.xlu0 %866
  %868 = vrot.lane.b32.xlu0 %v98, 3
  %v869 = vpop.permute.xlu0 %868
  %870 = vrot.lane.b32.xlu0 %v99, 3
  %v871 = vpop.permute.xlu0 %870
  %872 = vrot.lane.b32.xlu0 %v100, 3
  %v873 = vpop.permute.xlu0 %872
  %874 = vrot.lane.b32.xlu0 %v101, 3
  %v875 = vpop.permute.xlu0 %874
  %876 = vrot.lane.b32.xlu0 %v102, 3
  %v877 = vpop.permute.xlu0 %876
  %878 = vrot.lane.b32.xlu0 %v103, 3
  %v879 = vpop.permute.xlu0 %878
  %880 = vrot.lane.b32.xlu0 %v104, 3
  %v881 = vpop.permute.xlu0 %880
  %882 = vrot.lane.b32.xlu0 %v105, 3
  %v883 = vpop.permute.xlu0 %882
  %932 = vrot.lane.b32.xlu0 %v788, 6
  %v933 = vpop.permute.xlu0 %932
  %934 = vrot.lane.b32.xlu0 %v789, 6
  %v935 = vpop.permute.xlu0 %934
  %936 = vrot.lane.b32.xlu0 %v790, 6
  %v937 = vpop.permute.xlu0 %936
  %938 = vrot.lane.b32.xlu0 %v791, 6
  %v939 = vpop.permute.xlu0 %938
  %940 = vrot.lane.b32.xlu0 %v792, 6
  %v941 = vpop.permute.xlu0 %940
  %942 = vrot.lane.b32.xlu0 %v793, 6
  %v943 = vpop.permute.xlu0 %942
  %944 = vrot.lane.b32.xlu0 %v794, 6
  %v945 = vpop.permute.xlu0 %944
  %946 = vrot.lane.b32.xlu0 %v795, 6
  %v947 = vpop.permute.xlu0 %946
  %948 = vrot.lane.b32.xlu0 %v796, 6
  %v949 = vpop.permute.xlu0 %948
  %950 = vrot.lane.b32.xlu0 %v797, 6
  %v951 = vpop.permute.xlu0 %950
  %952 = vrot.lane.b32.xlu0 %v798, 6
  %v953 = vpop.permute.xlu0 %952
  %954 = vrot.lane.b32.xlu0 %v799, 6
  %v955 = vpop.permute.xlu0 %954
  %956 = vrot.lane.b32.xlu0 %v800, 6
  %v957 = vpop.permute.xlu0 %956
  %958 = vrot.lane.b32.xlu0 %v801, 6
  %v959 = vpop.permute.xlu0 %958
  %960 = vrot.lane.b32.xlu0 %v802, 6
  %v961 = vpop.permute.xlu0 %960
  %962 = vrot.lane.b32.xlu0 %v803, 6
  %v963 = vpop.permute.xlu0 %962
  %964 = vrot.lane.b32.xlu0 %v804, 6
  %v965 = vpop.permute.xlu0 %964
  %966 = vrot.lane.b32.xlu0 %v805, 6
  %v967 = vpop.permute.xlu0 %966
  %968 = vrot.lane.b32.xlu0 %v806, 6
  %v969 = vpop.permute.xlu0 %968
  %970 = vrot.lane.b32.xlu0 %v807, 6
  %v971 = vpop.permute.xlu0 %970
  %972 = vrot.lane.b32.xlu0 %v808, 6
  %v973 = vpop.permute.xlu0 %972
  %974 = vrot.lane.b32.xlu0 %v809, 6
  %v975 = vpop.permute.xlu0 %974
  %976 = vrot.lane.b32.xlu0 %v810, 6
  %v977 = vpop.permute.xlu0 %976
  %978 = vrot.lane.b32.xlu0 %v811, 6
  %v979 = vpop.permute.xlu0 %978
  %vm1004 = vcmask 23552
  %v1005 = vsel %vm1004, %v715, %v837
  %v1006 = vsel %vm1004, %v716, %v839
  %v1007 = vsel %vm1004, %v717, %v841
  %v1008 = vsel %vm1004, %v718, %v843
  %v1009 = vsel %vm1004, %v719, %v845
  %v1010 = vsel %vm1004, %v720, %v847
  %v1011 = vsel %vm1004, %v721, %v849
  %v1012 = vsel %vm1004, %v722, %v851
  %v1013 = vsel %vm1004, %v723, %v853
  %v1014 = vsel %vm1004, %v724, %v855
  %v1015 = vsel %vm1004, %v725, %v857
  %v1016 = vsel %vm1004, %v726, %v859
  %v1017 = vsel %vm1004, %v727, %v861
  %v1018 = vsel %vm1004, %v728, %v863
  %v1019 = vsel %vm1004, %v729, %v865
  %v1020 = vsel %vm1004, %v730, %v867
  %v1021 = vsel %vm1004, %v731, %v869
  %v1022 = vsel %vm1004, %v732, %v871
  %v1023 = vsel %vm1004, %v733, %v873
  %v1024 = vsel %vm1004, %v734, %v875
  %v1025 = vsel %vm1004, %v735, %v877
  %v1026 = vsel %vm1004, %v736, %v879
  %v1027 = vsel %vm1004, %v737, %v881
  %v1028 = vsel %vm1004, %v738, %v883
  %vm1029 = vcmask 48128
  %v1030 = vsel %vm1029, %v1005, %v933
  %v1031 = vsel %vm1029, %v1006, %v935
  %v1032 = vsel %vm1029, %v1007, %v937
  %v1033 = vsel %vm1029, %v1008, %v939
  %v1034 = vsel %vm1029, %v1009, %v941
  %v1035 = vsel %vm1029, %v1010, %v943
  %v1036 = vsel %vm1029, %v1011, %v945
  %v1037 = vsel %vm1029, %v1012, %v947
  %v1038 = vsel %vm1029, %v1013, %v949
  %v1039 = vsel %vm1029, %v1014, %v951
  %v1040 = vsel %vm1029, %v1015, %v953
  %v1041 = vsel %vm1029, %v1016, %v955
  %v1042 = vsel %vm1029, %v1017, %v957
  %v1043 = vsel %vm1029, %v1018, %v959
  %v1044 = vsel %vm1029, %v1019, %v961
  %v1045 = vsel %vm1029, %v1020, %v963
  %v1046 = vsel %vm1029, %v1021, %v965
  %v1047 = vsel %vm1029, %v1022, %v967
  %v1048 = vsel %vm1029, %v1023, %v969
  %v1049 = vsel %vm1029, %v1024, %v971
  %v1050 = vsel %vm1029, %v1025, %v973
  %v1051 = vsel %vm1029, %v1026, %v975
  %v1052 = vsel %vm1029, %v1027, %v977
  %v1053 = vsel %vm1029, %v1028, %v979
  %v1054 = vpack.c.bf16 %v1031, %v1030
  %v1055 = vpack.c.bf16 %v1033, %v1032
  %v1056 = vpack.c.bf16 %v1035, %v1034
  %v1057 = vpack.c.bf16 %v1037, %v1036
  %v1058 = vpack.c.bf16 %v1039, %v1038
  %v1059 = vpack.c.bf16 %v1041, %v1040
  %v1060 = vpack.c.bf16 %v1043, %v1042
  %v1061 = vpack.c.bf16 %v1045, %v1044
  %v1062 = vpack.c.bf16 %v1047, %v1046
  %v1063 = vpack.c.bf16 %v1049, %v1048
  %v1064 = vpack.c.bf16 %v1051, %v1050
  %v1065 = vpack.c.bf16 %v1053, %v1052
  %v1067 = vlaneseq
  %v1068 = vshrl.u32 %v1067, 7
  %v1069 = vsub.s32 0, %v1068
  %v1070 = vrot.slane %v112, %v1069
  %v1074 = vunpack.c.l.b16 %v110
  %v1075 = vunpack.c.l.b16 %v111
  %v1076 = vpack.c.b16 %v1075, %v1074
  %vm1077 = vcmask 72704
  %v1079 = vsel %vm1077, %v1054, 0
  %v1082 = vsel %vm1077, %v1055, 0
  %v1085 = vsel %vm1077, %v1056, 0
  %v1088 = vsel %vm1077, %v1057, 0
  %v1091 = vsel %vm1077, %v1058, 0
  %v1094 = vsel %vm1077, %v1059, 0
  %v1097 = vsel %vm1077, %v1060, 0
  %v1100 = vsel %vm1077, %v1061, 0
  %v1103 = vsel %vm1077, %v1062, 0
  %v1106 = vsel %vm1077, %v1063, 0
  %v1109 = vsel %vm1077, %v1064, 0
  %v1112 = vsel %vm1077, %v1065, 0
  %vm1114 = vcmask 1043456
  %vm1115 = vcmask 1044480
  %v1116 = vsel %vm1114, 4294967295, 65535
  %v1117 = vsel %vm1115, %v1116, 0
  %v1119 = vand.u32 %v1076, %v1117
  %1121 = vmatprep.subr.bf16.mxu0 0
  %1122 = vmatpush1.bf16.msra.mxu0 0
  %1123 = vmatprep.subr.bf16.mxu0 0
  %1124 = vmatpush1.bf16.msra.mxu0 0
  %1125 = vmatprep.subr.bf16.mxu0 0
  %1126 = vmatpush1.bf16.msra.mxu0 0
  %1127 = vmatprep.subr.bf16.mxu0 0
  %1128 = vmatpush1.bf16.msra.mxu0 0
  %1129 = vmatprep.subr.bf16.mxu0 0
  %1130 = vmatpush1.bf16.msra.mxu0 0
  %1131 = vmatprep.subr.bf16.mxu0 0
  %1132 = vmatpush1.bf16.msra.mxu0 0
  %1133 = vmatprep.subr.bf16.mxu0 0
  %1134 = vmatpush1.bf16.msra.mxu0 0
  %1135 = vmatprep.subr.bf16.mxu0 0
  %1136 = vmatpush1.bf16.msra.mxu0 %v1119
  %1137 = vmatprep.subr.bf16.mxu0 0
  %1138 = vmatpush2.bf16.msra.mxu0 0
  %1139 = vmatprep.subr.bf16.mxu0 0
  %1140 = vmatpush2.bf16.msra.mxu0 0
  %1141 = vmatprep.subr.bf16.mxu0 0
  %1142 = vmatpush2.bf16.msra.mxu0 0
  %1143 = vmatprep.subr.bf16.mxu0 0
  %1144 = vmatpush2.bf16.msra.mxu0 0
  %1145 = vmatprep.subr.bf16.mxu0 0
  %1146 = vmatpush2.bf16.msra.mxu0 0
  %1147 = vmatprep.subr.bf16.mxu0 0
  %1148 = vmatpush2.bf16.msra.mxu0 0
  %1149 = vmatprep.subr.bf16.mxu0 0
  %1150 = vmatpush2.bf16.msra.mxu0 0
  %1151 = vmatprep.subr.bf16.mxu0 0
  %1152 = vmatpush2.bf16.msra.mxu0 0
  %1153 = vmatprep.mubr.bf16.mxu0 0
  %1154 = vmatmul.mubr.bf16.gmra.mxu0 %v1079
  %v1155 = vpop.f32.mrf.mxu0
  %v1156 = vadd.f32 %v1070, %v1155
  %v1157 = vpop.f32.mrf.mxu0
  %v1158 = vpop.f32.mrf.mxu0
  %v1159 = vadd.f32 %v1070, %v1158
  %v1160 = vpop.f32.mrf.mxu0
  %1161 = vmatprep.mubr.bf16.mxu0 0
  %1162 = vmatmul.mubr.bf16.gmra.mxu0 %v1082
  %v1163 = vpop.f32.mrf.mxu0
  %v1164 = vadd.f32 %v1070, %v1163
  %v1165 = vpop.f32.mrf.mxu0
  %v1166 = vpop.f32.mrf.mxu0
  %v1167 = vadd.f32 %v1070, %v1166
  %v1168 = vpop.f32.mrf.mxu0
  %1169 = vmatprep.mubr.bf16.mxu0 0
  %1170 = vmatmul.mubr.bf16.gmra.mxu0 %v1085
  %v1171 = vpop.f32.mrf.mxu0
  %v1172 = vadd.f32 %v1070, %v1171
  %v1173 = vpop.f32.mrf.mxu0
  %v1174 = vpop.f32.mrf.mxu0
  %v1175 = vadd.f32 %v1070, %v1174
  %v1176 = vpop.f32.mrf.mxu0
  %1177 = vmatprep.mubr.bf16.mxu0 0
  %1178 = vmatmul.mubr.bf16.gmra.mxu0 %v1088
  %v1179 = vpop.f32.mrf.mxu0
  %v1180 = vadd.f32 %v1070, %v1179
  %v1181 = vpop.f32.mrf.mxu0
  %v1182 = vpop.f32.mrf.mxu0
  %v1183 = vadd.f32 %v1070, %v1182
  %v1184 = vpop.f32.mrf.mxu0
  %1185 = vmatprep.mubr.bf16.mxu0 0
  %1186 = vmatmul.mubr.bf16.gmra.mxu0 %v1091
  %v1187 = vpop.f32.mrf.mxu0
  %v1188 = vadd.f32 %v1070, %v1187
  %v1189 = vpop.f32.mrf.mxu0
  %v1190 = vpop.f32.mrf.mxu0
  %v1191 = vadd.f32 %v1070, %v1190
  %v1192 = vpop.f32.mrf.mxu0
  %1193 = vmatprep.mubr.bf16.mxu0 0
  %1194 = vmatmul.mubr.bf16.gmra.mxu0 %v1094
  %v1195 = vpop.f32.mrf.mxu0
  %v1196 = vadd.f32 %v1070, %v1195
  %v1197 = vpop.f32.mrf.mxu0
  %v1198 = vpop.f32.mrf.mxu0
  %v1199 = vadd.f32 %v1070, %v1198
  %v1200 = vpop.f32.mrf.mxu0
  %1201 = vmatprep.mubr.bf16.mxu0 0
  %1202 = vmatmul.mubr.bf16.gmra.mxu0 %v1097
  %v1203 = vpop.f32.mrf.mxu0
  %v1204 = vadd.f32 %v1070, %v1203
  %v1205 = vpop.f32.mrf.mxu0
  %v1206 = vpop.f32.mrf.mxu0
  %v1207 = vadd.f32 %v1070, %v1206
  %v1208 = vpop.f32.mrf.mxu0
  %1209 = vmatprep.mubr.bf16.mxu0 0
  %1210 = vmatmul.mubr.bf16.gmra.mxu0 %v1100
  %v1211 = vpop.f32.mrf.mxu0
  %v1212 = vadd.f32 %v1070, %v1211
  %v1213 = vpop.f32.mrf.mxu0
  %v1214 = vpop.f32.mrf.mxu0
  %v1215 = vadd.f32 %v1070, %v1214
  %v1216 = vpop.f32.mrf.mxu0
  %1217 = vmatprep.mubr.bf16.mxu0 0
  %1218 = vmatmul.mubr.bf16.gmra.mxu0 %v1103
  %v1219 = vpop.f32.mrf.mxu0
  %v1220 = vadd.f32 %v1070, %v1219
  %v1221 = vpop.f32.mrf.mxu0
  %v1222 = vpop.f32.mrf.mxu0
  %v1223 = vadd.f32 %v1070, %v1222
  %v1224 = vpop.f32.mrf.mxu0
  %1225 = vmatprep.mubr.bf16.mxu0 0
  %1226 = vmatmul.mubr.bf16.gmra.mxu0 %v1106
  %v1227 = vpop.f32.mrf.mxu0
  %v1228 = vadd.f32 %v1070, %v1227
  %v1229 = vpop.f32.mrf.mxu0
  %v1230 = vpop.f32.mrf.mxu0
  %v1231 = vadd.f32 %v1070, %v1230
  %v1232 = vpop.f32.mrf.mxu0
  %1233 = vmatprep.mubr.bf16.mxu0 0
  %1234 = vmatmul.mubr.bf16.gmra.mxu0 %v1109
  %v1235 = vpop.f32.mrf.mxu0
  %v1236 = vadd.f32 %v1070, %v1235
  %v1237 = vpop.f32.mrf.mxu0
  %v1238 = vpop.f32.mrf.mxu0
  %v1239 = vadd.f32 %v1070, %v1238
  %v1240 = vpop.f32.mrf.mxu0
  %1241 = vmatprep.mubr.bf16.mxu0 0
  %1242 = vmatmul.mubr.bf16.gmra.mxu0 %v1112
  %v1243 = vpop.f32.mrf.mxu0
  %v1244 = vadd.f32 %v1070, %v1243
  %v1245 = vpop.f32.mrf.mxu0
  %v1246 = vpop.f32.mrf.mxu0
  %v1247 = vadd.f32 %v1070, %v1246
  %v1248 = vpop.f32.mrf.mxu0
  %1249 = vdwg.mxu0
  %v1250 = vmax.f32 %v1156, 0.0
  %v1251 = vmax.f32 %v1159, 0.0
  %v1252 = vmax.f32 %v1164, 0.0
  %v1253 = vmax.f32 %v1167, 0.0
  %v1254 = vmax.f32 %v1172, 0.0
  %v1255 = vmax.f32 %v1175, 0.0
  %v1256 = vmax.f32 %v1180, 0.0
  %v1257 = vmax.f32 %v1183, 0.0
  %v1258 = vmax.f32 %v1188, 0.0
  %v1259 = vmax.f32 %v1191, 0.0
  %v1260 = vmax.f32 %v1196, 0.0
  %v1261 = vmax.f32 %v1199, 0.0
  %v1262 = vmax.f32 %v1204, 0.0
  %v1263 = vmax.f32 %v1207, 0.0
  %v1264 = vmax.f32 %v1212, 0.0
  %v1265 = vmax.f32 %v1215, 0.0
  %v1266 = vmax.f32 %v1220, 0.0
  %v1267 = vmax.f32 %v1223, 0.0
  %v1268 = vmax.f32 %v1228, 0.0
  %v1269 = vmax.f32 %v1231, 0.0
  %v1270 = vmax.f32 %v1236, 0.0
  %v1271 = vmax.f32 %v1239, 0.0
  %v1272 = vmax.f32 %v1244, 0.0
  %v1273 = vmax.f32 %v1247, 0.0
  %v1298 = vcombine.high %v1250, %v1250
  %v1300 = vunpack.c.l.s4 1983009808
  %v1301 = vunpack.c.0.s8 %v1300
  %v1302 = vlaneseq
  %v1303 = vshrl.u32 %v1302, 7
  %v1304 = vsub.s32 %v1301, %v1303
  %v1305 = vrot.slane %v1250, %v1304
  %v1307 = vunpack.c.l.s4 1983009808
  %v1308 = vunpack.c.0.s8 %v1307
  %v1309 = vlaneseq
  %v1310 = vshrl.u32 %v1309, 7
  %v1311 = vsub.s32 %v1308, %v1310
  %v1312 = vrot.slane %v1298, %v1311
  %v1313 = vcombine.high %v1305, %v1305
  %v1314 = vcombine.high %v1312, %v1312
  %v1315 = vcombine.high %v1251, %v1251
  %v1317 = vunpack.c.l.s4 1983009808
  %v1318 = vunpack.c.0.s8 %v1317
  %v1319 = vlaneseq
  %v1320 = vshrl.u32 %v1319, 7
  %v1321 = vsub.s32 %v1318, %v1320
  %v1322 = vrot.slane %v1251, %v1321
  %v1324 = vunpack.c.l.s4 1983009808
  %v1325 = vunpack.c.0.s8 %v1324
  %v1326 = vlaneseq
  %v1327 = vshrl.u32 %v1326, 7
  %v1328 = vsub.s32 %v1325, %v1327
  %v1329 = vrot.slane %v1315, %v1328
  %v1330 = vcombine.high %v1322, %v1322
  %v1331 = vcombine.high %v1329, %v1329
  %v1332 = vcombine.high %v1252, %v1252
  %v1334 = vunpack.c.l.s4 1983009808
  %v1335 = vunpack.c.0.s8 %v1334
  %v1336 = vlaneseq
  %v1337 = vshrl.u32 %v1336, 7
  %v1338 = vsub.s32 %v1335, %v1337
  %v1339 = vrot.slane %v1252, %v1338
  %v1341 = vunpack.c.l.s4 1983009808
  %v1342 = vunpack.c.0.s8 %v1341
  %v1343 = vlaneseq
  %v1344 = vshrl.u32 %v1343, 7
  %v1345 = vsub.s32 %v1342, %v1344
  %v1346 = vrot.slane %v1332, %v1345
  %v1347 = vcombine.high %v1339, %v1339
  %v1348 = vcombine.high %v1346, %v1346
  %v1349 = vcombine.high %v1253, %v1253
  %v1351 = vunpack.c.l.s4 1983009808
  %v1352 = vunpack.c.0.s8 %v1351
  %v1353 = vlaneseq
  %v1354 = vshrl.u32 %v1353, 7
  %v1355 = vsub.s32 %v1352, %v1354
  %v1356 = vrot.slane %v1253, %v1355
  %v1358 = vunpack.c.l.s4 1983009808
  %v1359 = vunpack.c.0.s8 %v1358
  %v1360 = vlaneseq
  %v1361 = vshrl.u32 %v1360, 7
  %v1362 = vsub.s32 %v1359, %v1361
  %v1363 = vrot.slane %v1349, %v1362
  %v1364 = vcombine.high %v1356, %v1356
  %v1365 = vcombine.high %v1363, %v1363
  %v1366 = vcombine.high %v1254, %v1254
  %v1368 = vunpack.c.l.s4 1983009808
  %v1369 = vunpack.c.0.s8 %v1368
  %v1370 = vlaneseq
  %v1371 = vshrl.u32 %v1370, 7
  %v1372 = vsub.s32 %v1369, %v1371
  %v1373 = vrot.slane %v1254, %v1372
  %v1375 = vunpack.c.l.s4 1983009808
  %v1376 = vunpack.c.0.s8 %v1375
  %v1377 = vlaneseq
  %v1378 = vshrl.u32 %v1377, 7
  %v1379 = vsub.s32 %v1376, %v1378
  %v1380 = vrot.slane %v1366, %v1379
  %v1381 = vcombine.high %v1373, %v1373
  %v1382 = vcombine.high %v1380, %v1380
  %v1383 = vcombine.high %v1255, %v1255
  %v1385 = vunpack.c.l.s4 1983009808
  %v1386 = vunpack.c.0.s8 %v1385
  %v1387 = vlaneseq
  %v1388 = vshrl.u32 %v1387, 7
  %v1389 = vsub.s32 %v1386, %v1388
  %v1390 = vrot.slane %v1255, %v1389
  %v1392 = vunpack.c.l.s4 1983009808
  %v1393 = vunpack.c.0.s8 %v1392
  %v1394 = vlaneseq
  %v1395 = vshrl.u32 %v1394, 7
  %v1396 = vsub.s32 %v1393, %v1395
  %v1397 = vrot.slane %v1383, %v1396
  %v1398 = vcombine.high %v1390, %v1390
  %v1399 = vcombine.high %v1397, %v1397
  %v1400 = vcombine.high %v1256, %v1256
  %v1402 = vunpack.c.l.s4 1983009808
  %v1403 = vunpack.c.0.s8 %v1402
  %v1404 = vlaneseq
  %v1405 = vshrl.u32 %v1404, 7
  %v1406 = vsub.s32 %v1403, %v1405
  %v1407 = vrot.slane %v1256, %v1406
  %v1409 = vunpack.c.l.s4 1983009808
  %v1410 = vunpack.c.0.s8 %v1409
  %v1411 = vlaneseq
  %v1412 = vshrl.u32 %v1411, 7
  %v1413 = vsub.s32 %v1410, %v1412
  %v1414 = vrot.slane %v1400, %v1413
  %v1415 = vcombine.high %v1407, %v1407
  %v1416 = vcombine.high %v1414, %v1414
  %v1417 = vcombine.high %v1257, %v1257
  %v1419 = vunpack.c.l.s4 1983009808
  %v1420 = vunpack.c.0.s8 %v1419
  %v1421 = vlaneseq
  %v1422 = vshrl.u32 %v1421, 7
  %v1423 = vsub.s32 %v1420, %v1422
  %v1424 = vrot.slane %v1257, %v1423
  %v1426 = vunpack.c.l.s4 1983009808
  %v1427 = vunpack.c.0.s8 %v1426
  %v1428 = vlaneseq
  %v1429 = vshrl.u32 %v1428, 7
  %v1430 = vsub.s32 %v1427, %v1429
  %v1431 = vrot.slane %v1417, %v1430
  %v1432 = vcombine.high %v1424, %v1424
  %v1433 = vcombine.high %v1431, %v1431
  %v1434 = vcombine.high %v1258, %v1258
  %v1436 = vunpack.c.l.s4 1983009808
  %v1437 = vunpack.c.0.s8 %v1436
  %v1438 = vlaneseq
  %v1439 = vshrl.u32 %v1438, 7
  %v1440 = vsub.s32 %v1437, %v1439
  %v1441 = vrot.slane %v1258, %v1440
  %v1443 = vunpack.c.l.s4 1983009808
  %v1444 = vunpack.c.0.s8 %v1443
  %v1445 = vlaneseq
  %v1446 = vshrl.u32 %v1445, 7
  %v1447 = vsub.s32 %v1444, %v1446
  %v1448 = vrot.slane %v1434, %v1447
  %v1449 = vcombine.high %v1441, %v1441
  %v1450 = vcombine.high %v1448, %v1448
  %v1451 = vcombine.high %v1259, %v1259
  %v1453 = vunpack.c.l.s4 1983009808
  %v1454 = vunpack.c.0.s8 %v1453
  %v1455 = vlaneseq
  %v1456 = vshrl.u32 %v1455, 7
  %v1457 = vsub.s32 %v1454, %v1456
  %v1458 = vrot.slane %v1259, %v1457
  %v1460 = vunpack.c.l.s4 1983009808
  %v1461 = vunpack.c.0.s8 %v1460
  %v1462 = vlaneseq
  %v1463 = vshrl.u32 %v1462, 7
  %v1464 = vsub.s32 %v1461, %v1463
  %v1465 = vrot.slane %v1451, %v1464
  %v1466 = vcombine.high %v1458, %v1458
  %v1467 = vcombine.high %v1465, %v1465
  %v1468 = vcombine.high %v1260, %v1260
  %v1470 = vunpack.c.l.s4 1983009808
  %v1471 = vunpack.c.0.s8 %v1470
  %v1472 = vlaneseq
  %v1473 = vshrl.u32 %v1472, 7
  %v1474 = vsub.s32 %v1471, %v1473
  %v1475 = vrot.slane %v1260, %v1474
  %v1477 = vunpack.c.l.s4 1983009808
  %v1478 = vunpack.c.0.s8 %v1477
  %v1479 = vlaneseq
  %v1480 = vshrl.u32 %v1479, 7
  %v1481 = vsub.s32 %v1478, %v1480
  %v1482 = vrot.slane %v1468, %v1481
  %v1483 = vcombine.high %v1475, %v1475
  %v1484 = vcombine.high %v1482, %v1482
  %v1485 = vcombine.high %v1261, %v1261
  %v1487 = vunpack.c.l.s4 1983009808
  %v1488 = vunpack.c.0.s8 %v1487
  %v1489 = vlaneseq
  %v1490 = vshrl.u32 %v1489, 7
  %v1491 = vsub.s32 %v1488, %v1490
  %v1492 = vrot.slane %v1261, %v1491
  %v1494 = vunpack.c.l.s4 1983009808
  %v1495 = vunpack.c.0.s8 %v1494
  %v1496 = vlaneseq
  %v1497 = vshrl.u32 %v1496, 7
  %v1498 = vsub.s32 %v1495, %v1497
  %v1499 = vrot.slane %v1485, %v1498
  %v1500 = vcombine.high %v1492, %v1492
  %v1501 = vcombine.high %v1499, %v1499
  %v1502 = vcombine.high %v1262, %v1262
  %v1504 = vunpack.c.l.s4 1983009808
  %v1505 = vunpack.c.0.s8 %v1504
  %v1506 = vlaneseq
  %v1507 = vshrl.u32 %v1506, 7
  %v1508 = vsub.s32 %v1505, %v1507
  %v1509 = vrot.slane %v1262, %v1508
  %v1511 = vunpack.c.l.s4 1983009808
  %v1512 = vunpack.c.0.s8 %v1511
  %v1513 = vlaneseq
  %v1514 = vshrl.u32 %v1513, 7
  %v1515 = vsub.s32 %v1512, %v1514
  %v1516 = vrot.slane %v1502, %v1515
  %v1517 = vcombine.high %v1509, %v1509
  %v1518 = vcombine.high %v1516, %v1516
  %v1519 = vcombine.high %v1263, %v1263
  %v1521 = vunpack.c.l.s4 1983009808
  %v1522 = vunpack.c.0.s8 %v1521
  %v1523 = vlaneseq
  %v1524 = vshrl.u32 %v1523, 7
  %v1525 = vsub.s32 %v1522, %v1524
  %v1526 = vrot.slane %v1263, %v1525
  %v1528 = vunpack.c.l.s4 1983009808
  %v1529 = vunpack.c.0.s8 %v1528
  %v1530 = vlaneseq
  %v1531 = vshrl.u32 %v1530, 7
  %v1532 = vsub.s32 %v1529, %v1531
  %v1533 = vrot.slane %v1519, %v1532
  %v1534 = vcombine.high %v1526, %v1526
  %v1535 = vcombine.high %v1533, %v1533
  %v1536 = vcombine.high %v1264, %v1264
  %v1538 = vunpack.c.l.s4 1983009808
  %v1539 = vunpack.c.0.s8 %v1538
  %v1540 = vlaneseq
  %v1541 = vshrl.u32 %v1540, 7
  %v1542 = vsub.s32 %v1539, %v1541
  %v1543 = vrot.slane %v1264, %v1542
  %v1545 = vunpack.c.l.s4 1983009808
  %v1546 = vunpack.c.0.s8 %v1545
  %v1547 = vlaneseq
  %v1548 = vshrl.u32 %v1547, 7
  %v1549 = vsub.s32 %v1546, %v1548
  %v1550 = vrot.slane %v1536, %v1549
  %v1551 = vcombine.high %v1543, %v1543
  %v1552 = vcombine.high %v1550, %v1550
  %v1553 = vcombine.high %v1265, %v1265
  %v1555 = vunpack.c.l.s4 1983009808
  %v1556 = vunpack.c.0.s8 %v1555
  %v1557 = vlaneseq
  %v1558 = vshrl.u32 %v1557, 7
  %v1559 = vsub.s32 %v1556, %v1558
  %v1560 = vrot.slane %v1265, %v1559
  %v1562 = vunpack.c.l.s4 1983009808
  %v1563 = vunpack.c.0.s8 %v1562
  %v1564 = vlaneseq
  %v1565 = vshrl.u32 %v1564, 7
  %v1566 = vsub.s32 %v1563, %v1565
  %v1567 = vrot.slane %v1553, %v1566
  %v1568 = vcombine.high %v1560, %v1560
  %v1569 = vcombine.high %v1567, %v1567
  %v1570 = vcombine.high %v1266, %v1266
  %v1572 = vunpack.c.l.s4 1983009808
  %v1573 = vunpack.c.0.s8 %v1572
  %v1574 = vlaneseq
  %v1575 = vshrl.u32 %v1574, 7
  %v1576 = vsub.s32 %v1573, %v1575
  %v1577 = vrot.slane %v1266, %v1576
  %v1579 = vunpack.c.l.s4 1983009808
  %v1580 = vunpack.c.0.s8 %v1579
  %v1581 = vlaneseq
  %v1582 = vshrl.u32 %v1581, 7
  %v1583 = vsub.s32 %v1580, %v1582
  %v1584 = vrot.slane %v1570, %v1583
  %v1585 = vcombine.high %v1577, %v1577
  %v1586 = vcombine.high %v1584, %v1584
  %v1587 = vcombine.high %v1267, %v1267
  %v1589 = vunpack.c.l.s4 1983009808
  %v1590 = vunpack.c.0.s8 %v1589
  %v1591 = vlaneseq
  %v1592 = vshrl.u32 %v1591, 7
  %v1593 = vsub.s32 %v1590, %v1592
  %v1594 = vrot.slane %v1267, %v1593
  %v1596 = vunpack.c.l.s4 1983009808
  %v1597 = vunpack.c.0.s8 %v1596
  %v1598 = vlaneseq
  %v1599 = vshrl.u32 %v1598, 7
  %v1600 = vsub.s32 %v1597, %v1599
  %v1601 = vrot.slane %v1587, %v1600
  %v1602 = vcombine.high %v1594, %v1594
  %v1603 = vcombine.high %v1601, %v1601
  %v1604 = vcombine.high %v1268, %v1268
  %v1606 = vunpack.c.l.s4 1983009808
  %v1607 = vunpack.c.0.s8 %v1606
  %v1608 = vlaneseq
  %v1609 = vshrl.u32 %v1608, 7
  %v1610 = vsub.s32 %v1607, %v1609
  %v1611 = vrot.slane %v1268, %v1610
  %v1613 = vunpack.c.l.s4 1983009808
  %v1614 = vunpack.c.0.s8 %v1613
  %v1615 = vlaneseq
  %v1616 = vshrl.u32 %v1615, 7
  %v1617 = vsub.s32 %v1614, %v1616
  %v1618 = vrot.slane %v1604, %v1617
  %v1619 = vcombine.high %v1611, %v1611
  %v1620 = vcombine.high %v1618, %v1618
  %v1621 = vcombine.high %v1269, %v1269
  %v1623 = vunpack.c.l.s4 1983009808
  %v1624 = vunpack.c.0.s8 %v1623
  %v1625 = vlaneseq
  %v1626 = vshrl.u32 %v1625, 7
  %v1627 = vsub.s32 %v1624, %v1626
  %v1628 = vrot.slane %v1269, %v1627
  %v1630 = vunpack.c.l.s4 1983009808
  %v1631 = vunpack.c.0.s8 %v1630
  %v1632 = vlaneseq
  %v1633 = vshrl.u32 %v1632, 7
  %v1634 = vsub.s32 %v1631, %v1633
  %v1635 = vrot.slane %v1621, %v1634
  %v1636 = vcombine.high %v1628, %v1628
  %v1637 = vcombine.high %v1635, %v1635
  %v1638 = vcombine.high %v1270, %v1270
  %v1640 = vunpack.c.l.s4 1983009808
  %v1641 = vunpack.c.0.s8 %v1640
  %v1642 = vlaneseq
  %v1643 = vshrl.u32 %v1642, 7
  %v1644 = vsub.s32 %v1641, %v1643
  %v1645 = vrot.slane %v1270, %v1644
  %v1647 = vunpack.c.l.s4 1983009808
  %v1648 = vunpack.c.0.s8 %v1647
  %v1649 = vlaneseq
  %v1650 = vshrl.u32 %v1649, 7
  %v1651 = vsub.s32 %v1648, %v1650
  %v1652 = vrot.slane %v1638, %v1651
  %v1653 = vcombine.high %v1645, %v1645
  %v1654 = vcombine.high %v1652, %v1652
  %v1655 = vcombine.high %v1271, %v1271
  %v1657 = vunpack.c.l.s4 1983009808
  %v1658 = vunpack.c.0.s8 %v1657
  %v1659 = vlaneseq
  %v1660 = vshrl.u32 %v1659, 7
  %v1661 = vsub.s32 %v1658, %v1660
  %v1662 = vrot.slane %v1271, %v1661
  %v1664 = vunpack.c.l.s4 1983009808
  %v1665 = vunpack.c.0.s8 %v1664
  %v1666 = vlaneseq
  %v1667 = vshrl.u32 %v1666, 7
  %v1668 = vsub.s32 %v1665, %v1667
  %v1669 = vrot.slane %v1655, %v1668
  %v1670 = vcombine.high %v1662, %v1662
  %v1671 = vcombine.high %v1669, %v1669
  %v1672 = vcombine.high %v1272, %v1272
  %v1674 = vunpack.c.l.s4 1983009808
  %v1675 = vunpack.c.0.s8 %v1674
  %v1676 = vlaneseq
  %v1677 = vshrl.u32 %v1676, 7
  %v1678 = vsub.s32 %v1675, %v1677
  %v1679 = vrot.slane %v1272, %v1678
  %v1681 = vunpack.c.l.s4 1983009808
  %v1682 = vunpack.c.0.s8 %v1681
  %v1683 = vlaneseq
  %v1684 = vshrl.u32 %v1683, 7
  %v1685 = vsub.s32 %v1682, %v1684
  %v1686 = vrot.slane %v1672, %v1685
  %v1687 = vcombine.high %v1679, %v1679
  %v1688 = vcombine.high %v1686, %v1686
  %v1689 = vcombine.high %v1273, %v1273
  %v1691 = vunpack.c.l.s4 1983009808
  %v1692 = vunpack.c.0.s8 %v1691
  %v1693 = vlaneseq
  %v1694 = vshrl.u32 %v1693, 7
  %v1695 = vsub.s32 %v1692, %v1694
  %v1696 = vrot.slane %v1273, %v1695
  %v1698 = vunpack.c.l.s4 1983009808
  %v1699 = vunpack.c.0.s8 %v1698
  %v1700 = vlaneseq
  %v1701 = vshrl.u32 %v1700, 7
  %v1702 = vsub.s32 %v1699, %v1701
  %v1703 = vrot.slane %v1689, %v1702
  %v1704 = vcombine.high %v1696, %v1696
  %v1705 = vcombine.high %v1703, %v1703
  %v1802 = vrot.slane %v1305, 7
  %v1803 = vrot.slane %v1802, 2
  %v1804 = vrot.slane %v1313, 7
  %v1805 = vrot.slane %v1804, 2
  %v1806 = vrot.slane %v1312, 7
  %v1807 = vrot.slane %v1806, 2
  %v1808 = vrot.slane %v1314, 7
  %v1809 = vrot.slane %v1808, 2
  %v1810 = vrot.slane %v1322, 7
  %v1811 = vrot.slane %v1810, 2
  %v1812 = vrot.slane %v1330, 7
  %v1813 = vrot.slane %v1812, 2
  %v1814 = vrot.slane %v1329, 7
  %v1815 = vrot.slane %v1814, 2
  %v1816 = vrot.slane %v1331, 7
  %v1817 = vrot.slane %v1816, 2
  %v1818 = vrot.slane %v1339, 7
  %v1819 = vrot.slane %v1818, 2
  %v1820 = vrot.slane %v1347, 7
  %v1821 = vrot.slane %v1820, 2
  %v1822 = vrot.slane %v1346, 7
  %v1823 = vrot.slane %v1822, 2
  %v1824 = vrot.slane %v1348, 7
  %v1825 = vrot.slane %v1824, 2
  %v1826 = vrot.slane %v1356, 7
  %v1827 = vrot.slane %v1826, 2
  %v1828 = vrot.slane %v1364, 7
  %v1829 = vrot.slane %v1828, 2
  %v1830 = vrot.slane %v1363, 7
  %v1831 = vrot.slane %v1830, 2
  %v1832 = vrot.slane %v1365, 7
  %v1833 = vrot.slane %v1832, 2
  %v1834 = vrot.slane %v1373, 7
  %v1835 = vrot.slane %v1834, 2
  %v1836 = vrot.slane %v1381, 7
  %v1837 = vrot.slane %v1836, 2
  %v1838 = vrot.slane %v1380, 7
  %v1839 = vrot.slane %v1838, 2
  %v1840 = vrot.slane %v1382, 7
  %v1841 = vrot.slane %v1840, 2
  %v1842 = vrot.slane %v1390, 7
  %v1843 = vrot.slane %v1842, 2
  %v1844 = vrot.slane %v1398, 7
  %v1845 = vrot.slane %v1844, 2
  %v1846 = vrot.slane %v1397, 7
  %v1847 = vrot.slane %v1846, 2
  %v1848 = vrot.slane %v1399, 7
  %v1849 = vrot.slane %v1848, 2
  %v1850 = vrot.slane %v1407, 7
  %v1851 = vrot.slane %v1850, 2
  %v1852 = vrot.slane %v1415, 7
  %v1853 = vrot.slane %v1852, 2
  %v1854 = vrot.slane %v1414, 7
  %v1855 = vrot.slane %v1854, 2
  %v1856 = vrot.slane %v1416, 7
  %v1857 = vrot.slane %v1856, 2
  %v1858 = vrot.slane %v1424, 7
  %v1859 = vrot.slane %v1858, 2
  %v1860 = vrot.slane %v1432, 7
  %v1861 = vrot.slane %v1860, 2
  %v1862 = vrot.slane %v1431, 7
  %v1863 = vrot.slane %v1862, 2
  %v1864 = vrot.slane %v1433, 7
  %v1865 = vrot.slane %v1864, 2
  %v1866 = vrot.slane %v1441, 7
  %v1867 = vrot.slane %v1866, 2
  %v1868 = vrot.slane %v1449, 7
  %v1869 = vrot.slane %v1868, 2
  %v1870 = vrot.slane %v1448, 7
  %v1871 = vrot.slane %v1870, 2
  %v1872 = vrot.slane %v1450, 7
  %v1873 = vrot.slane %v1872, 2
  %v1874 = vrot.slane %v1458, 7
  %v1875 = vrot.slane %v1874, 2
  %v1876 = vrot.slane %v1466, 7
  %v1877 = vrot.slane %v1876, 2
  %v1878 = vrot.slane %v1465, 7
  %v1879 = vrot.slane %v1878, 2
  %v1880 = vrot.slane %v1467, 7
  %v1881 = vrot.slane %v1880, 2
  %v1882 = vrot.slane %v1475, 7
  %v1883 = vrot.slane %v1882, 2
  %v1884 = vrot.slane %v1483, 7
  %v1885 = vrot.slane %v1884, 2
  %v1886 = vrot.slane %v1482, 7
  %v1887 = vrot.slane %v1886, 2
  %v1888 = vrot.slane %v1484, 7
  %v1889 = vrot.slane %v1888, 2
  %v1890 = vrot.slane %v1492, 7
  %v1891 = vrot.slane %v1890, 2
  %v1892 = vrot.slane %v1500, 7
  %v1893 = vrot.slane %v1892, 2
  %v1894 = vrot.slane %v1499, 7
  %v1895 = vrot.slane %v1894, 2
  %v1896 = vrot.slane %v1501, 7
  %v1897 = vrot.slane %v1896, 2
  %v1898 = vrot.slane %v1509, 7
  %v1899 = vrot.slane %v1898, 2
  %v1900 = vrot.slane %v1517, 7
  %v1901 = vrot.slane %v1900, 2
  %v1902 = vrot.slane %v1516, 7
  %v1903 = vrot.slane %v1902, 2
  %v1904 = vrot.slane %v1518, 7
  %v1905 = vrot.slane %v1904, 2
  %v1906 = vrot.slane %v1526, 7
  %v1907 = vrot.slane %v1906, 2
  %v1908 = vrot.slane %v1534, 7
  %v1909 = vrot.slane %v1908, 2
  %v1910 = vrot.slane %v1533, 7
  %v1911 = vrot.slane %v1910, 2
  %v1912 = vrot.slane %v1535, 7
  %v1913 = vrot.slane %v1912, 2
  %v1914 = vrot.slane %v1543, 7
  %v1915 = vrot.slane %v1914, 2
  %v1916 = vrot.slane %v1551, 7
  %v1917 = vrot.slane %v1916, 2
  %v1918 = vrot.slane %v1550, 7
  %v1919 = vrot.slane %v1918, 2
  %v1920 = vrot.slane %v1552, 7
  %v1921 = vrot.slane %v1920, 2
  %v1922 = vrot.slane %v1560, 7
  %v1923 = vrot.slane %v1922, 2
  %v1924 = vrot.slane %v1568, 7
  %v1925 = vrot.slane %v1924, 2
  %v1926 = vrot.slane %v1567, 7
  %v1927 = vrot.slane %v1926, 2
  %v1928 = vrot.slane %v1569, 7
  %v1929 = vrot.slane %v1928, 2
  %v1930 = vrot.slane %v1577, 7
  %v1931 = vrot.slane %v1930, 2
  %v1932 = vrot.slane %v1585, 7
  %v1933 = vrot.slane %v1932, 2
  %v1934 = vrot.slane %v1584, 7
  %v1935 = vrot.slane %v1934, 2
  %v1936 = vrot.slane %v1586, 7
  %v1937 = vrot.slane %v1936, 2
  %v1938 = vrot.slane %v1594, 7
  %v1939 = vrot.slane %v1938, 2
  %v1940 = vrot.slane %v1602, 7
  %v1941 = vrot.slane %v1940, 2
  %v1942 = vrot.slane %v1601, 7
  %v1943 = vrot.slane %v1942, 2
  %v1944 = vrot.slane %v1603, 7
  %v1945 = vrot.slane %v1944, 2
  %v1946 = vrot.slane %v1611, 7
  %v1947 = vrot.slane %v1946, 2
  %v1948 = vrot.slane %v1619, 7
  %v1949 = vrot.slane %v1948, 2
  %v1950 = vrot.slane %v1618, 7
  %v1951 = vrot.slane %v1950, 2
  %v1952 = vrot.slane %v1620, 7
  %v1953 = vrot.slane %v1952, 2
  %v1954 = vrot.slane %v1628, 7
  %v1955 = vrot.slane %v1954, 2
  %v1956 = vrot.slane %v1636, 7
  %v1957 = vrot.slane %v1956, 2
  %v1958 = vrot.slane %v1635, 7
  %v1959 = vrot.slane %v1958, 2
  %v1960 = vrot.slane %v1637, 7
  %v1961 = vrot.slane %v1960, 2
  %v1962 = vrot.slane %v1645, 7
  %v1963 = vrot.slane %v1962, 2
  %v1964 = vrot.slane %v1653, 7
  %v1965 = vrot.slane %v1964, 2
  %v1966 = vrot.slane %v1652, 7
  %v1967 = vrot.slane %v1966, 2
  %v1968 = vrot.slane %v1654, 7
  %v1969 = vrot.slane %v1968, 2
  %v1970 = vrot.slane %v1662, 7
  %v1971 = vrot.slane %v1970, 2
  %v1972 = vrot.slane %v1670, 7
  %v1973 = vrot.slane %v1972, 2
  %v1974 = vrot.slane %v1669, 7
  %v1975 = vrot.slane %v1974, 2
  %v1976 = vrot.slane %v1671, 7
  %v1977 = vrot.slane %v1976, 2
  %v1978 = vrot.slane %v1679, 7
  %v1979 = vrot.slane %v1978, 2
  %v1980 = vrot.slane %v1687, 7
  %v1981 = vrot.slane %v1980, 2
  %v1982 = vrot.slane %v1686, 7
  %v1983 = vrot.slane %v1982, 2
  %v1984 = vrot.slane %v1688, 7
  %v1985 = vrot.slane %v1984, 2
  %v1986 = vrot.slane %v1696, 7
  %v1987 = vrot.slane %v1986, 2
  %v1988 = vrot.slane %v1704, 7
  %v1989 = vrot.slane %v1988, 2
  %v1990 = vrot.slane %v1703, 7
  %v1991 = vrot.slane %v1990, 2
  %v1992 = vrot.slane %v1705, 7
  %v1993 = vrot.slane %v1992, 2
  %v2090 = vadd.f32 %v1305, %v1803
  %v2091 = vadd.f32 %v1313, %v1805
  %v2092 = vadd.f32 %v1312, %v1807
  %v2093 = vadd.f32 %v1314, %v1809
  %v2094 = vadd.f32 %v1322, %v1811
  %v2095 = vadd.f32 %v1330, %v1813
  %v2096 = vadd.f32 %v1329, %v1815
  %v2097 = vadd.f32 %v1331, %v1817
  %v2098 = vadd.f32 %v1339, %v1819
  %v2099 = vadd.f32 %v1347, %v1821
  %v2100 = vadd.f32 %v1346, %v1823
  %v2101 = vadd.f32 %v1348, %v1825
  %v2102 = vadd.f32 %v1356, %v1827
  %v2103 = vadd.f32 %v1364, %v1829
  %v2104 = vadd.f32 %v1363, %v1831
  %v2105 = vadd.f32 %v1365, %v1833
  %v2106 = vadd.f32 %v1373, %v1835
  %v2107 = vadd.f32 %v1381, %v1837
  %v2108 = vadd.f32 %v1380, %v1839
  %v2109 = vadd.f32 %v1382, %v1841
  %v2110 = vadd.f32 %v1390, %v1843
  %v2111 = vadd.f32 %v1398, %v1845
  %v2112 = vadd.f32 %v1397, %v1847
  %v2113 = vadd.f32 %v1399, %v1849
  %v2114 = vadd.f32 %v1407, %v1851
  %v2115 = vadd.f32 %v1415, %v1853
  %v2116 = vadd.f32 %v1414, %v1855
  %v2117 = vadd.f32 %v1416, %v1857
  %v2118 = vadd.f32 %v1424, %v1859
  %v2119 = vadd.f32 %v1432, %v1861
  %v2120 = vadd.f32 %v1431, %v1863
  %v2121 = vadd.f32 %v1433, %v1865
  %v2122 = vadd.f32 %v1441, %v1867
  %v2123 = vadd.f32 %v1449, %v1869
  %v2124 = vadd.f32 %v1448, %v1871
  %v2125 = vadd.f32 %v1450, %v1873
  %v2126 = vadd.f32 %v1458, %v1875
  %v2127 = vadd.f32 %v1466, %v1877
  %v2128 = vadd.f32 %v1465, %v1879
  %v2129 = vadd.f32 %v1467, %v1881
  %v2130 = vadd.f32 %v1475, %v1883
  %v2131 = vadd.f32 %v1483, %v1885
  %v2132 = vadd.f32 %v1482, %v1887
  %v2133 = vadd.f32 %v1484, %v1889
  %v2134 = vadd.f32 %v1492, %v1891
  %v2135 = vadd.f32 %v1500, %v1893
  %v2136 = vadd.f32 %v1499, %v1895
  %v2137 = vadd.f32 %v1501, %v1897
  %v2138 = vadd.f32 %v1509, %v1899
  %v2139 = vadd.f32 %v1517, %v1901
  %v2140 = vadd.f32 %v1516, %v1903
  %v2141 = vadd.f32 %v1518, %v1905
  %v2142 = vadd.f32 %v1526, %v1907
  %v2143 = vadd.f32 %v1534, %v1909
  %v2144 = vadd.f32 %v1533, %v1911
  %v2145 = vadd.f32 %v1535, %v1913
  %v2146 = vadd.f32 %v1543, %v1915
  %v2147 = vadd.f32 %v1551, %v1917
  %v2148 = vadd.f32 %v1550, %v1919
  %v2149 = vadd.f32 %v1552, %v1921
  %v2150 = vadd.f32 %v1560, %v1923
  %v2151 = vadd.f32 %v1568, %v1925
  %v2152 = vadd.f32 %v1567, %v1927
  %v2153 = vadd.f32 %v1569, %v1929
  %v2154 = vadd.f32 %v1577, %v1931
  %v2155 = vadd.f32 %v1585, %v1933
  %v2156 = vadd.f32 %v1584, %v1935
  %v2157 = vadd.f32 %v1586, %v1937
  %v2158 = vadd.f32 %v1594, %v1939
  %v2159 = vadd.f32 %v1602, %v1941
  %v2160 = vadd.f32 %v1601, %v1943
  %v2161 = vadd.f32 %v1603, %v1945
  %v2162 = vadd.f32 %v1611, %v1947
  %v2163 = vadd.f32 %v1619, %v1949
  %v2164 = vadd.f32 %v1618, %v1951
  %v2165 = vadd.f32 %v1620, %v1953
  %v2166 = vadd.f32 %v1628, %v1955
  %v2167 = vadd.f32 %v1636, %v1957
  %v2168 = vadd.f32 %v1635, %v1959
  %v2169 = vadd.f32 %v1637, %v1961
  %v2170 = vadd.f32 %v1645, %v1963
  %v2171 = vadd.f32 %v1653, %v1965
  %v2172 = vadd.f32 %v1652, %v1967
  %v2173 = vadd.f32 %v1654, %v1969
  %v2174 = vadd.f32 %v1662, %v1971
  %v2175 = vadd.f32 %v1670, %v1973
  %v2176 = vadd.f32 %v1669, %v1975
  %v2177 = vadd.f32 %v1671, %v1977
  %v2178 = vadd.f32 %v1679, %v1979
  %v2179 = vadd.f32 %v1687, %v1981
  %v2180 = vadd.f32 %v1686, %v1983
  %v2181 = vadd.f32 %v1688, %v1985
  %v2182 = vadd.f32 %v1696, %v1987
  %v2183 = vadd.f32 %v1704, %v1989
  %v2184 = vadd.f32 %v1703, %v1991
  %v2185 = vadd.f32 %v1705, %v1993
  %v2186 = vld [vmem:[%s4] sm:$0xf]
  %v2187 = vld [vmem:[%s4 + $0x4] sm:$0xf]
  %v2188 = vld [vmem:[%s4 + $0x8] sm:$0xf]
  %v2189 = vld [vmem:[%s4 + $0xc] sm:$0xf]
  %v2190 = vld [vmem:[%s4 + $0x10] sm:$0xf]
  %v2191 = vld [vmem:[%s4 + $0x14] sm:$0xf]
  %v2192 = vld [vmem:[%s4 + $0x18] sm:$0xf]
  %v2193 = vld [vmem:[%s4 + $0x1c] sm:$0xf]
  %v2194 = vld [vmem:[%s4 + $0x20] sm:$0xf]
  %v2195 = vld [vmem:[%s4 + $0x24] sm:$0xf]
  %v2196 = vld [vmem:[%s4 + $0x28] sm:$0xf]
  %v2197 = vld [vmem:[%s4 + $0x2c] sm:$0xf]
  %v2198 = vld [vmem:[%s5] sm:$0x1]
  %vm2199 = vcmp.lt.s32.totalorder %v114, 0
  %v2200 = vsub.s32 0, %v114
  %v2201 = vsel %vm2199, %v2200, %v114
  %v2202 = vmul.u32.u64.compose %v2201, 2863311531
  %v2203 = vextract.low.u32 %v2202
  %v2204 = vextract.high.u32 %v2202
  %v2205 = vshrl.u32 %v2204, 5
  %v2206 = vmul.u32 %v2205, 48
  %v2207 = vsub.s32 %v2201, %v2206
  %v2208 = vsub.s32 0, %v2207
  %v2209 = vsel %vm2199, %v2208, %v2207
  %vm2210 = vcmp.lt.s32.totalorder %v115, 0
  %v2211 = vsub.s32 0, %v115
  %v2212 = vsel %vm2210, %v2211, %v115
  %v2213 = vmul.u32.u64.compose %v2212, 2863311531
  %v2214 = vextract.low.u32 %v2213
  %v2215 = vextract.high.u32 %v2213
  %v2216 = vshrl.u32 %v2215, 5
  %v2217 = vmul.u32 %v2216, 48
  %v2218 = vsub.s32 %v2212, %v2217
  %v2219 = vsub.s32 0, %v2218
  %v2220 = vsel %vm2210, %v2219, %v2218
  %vm2221 = vcmp.lt.s32.totalorder %v116, 0
  %v2222 = vsub.s32 0, %v116
  %v2223 = vsel %vm2221, %v2222, %v116
  %v2224 = vmul.u32.u64.compose %v2223, 2863311531
  %v2225 = vextract.low.u32 %v2224
  %v2226 = vextract.high.u32 %v2224
  %v2227 = vshrl.u32 %v2226, 5
  %v2228 = vmul.u32 %v2227, 48
  %v2229 = vsub.s32 %v2223, %v2228
  %v2230 = vsub.s32 0, %v2229
  %v2231 = vsel %vm2221, %v2230, %v2229
  %vm2232 = vcmp.lt.s32.totalorder %v117, 0
  %v2233 = vsub.s32 0, %v117
  %v2234 = vsel %vm2232, %v2233, %v117
  %v2235 = vmul.u32.u64.compose %v2234, 2863311531
  %v2236 = vextract.low.u32 %v2235
  %v2237 = vextract.high.u32 %v2235
  %v2238 = vshrl.u32 %v2237, 5
  %v2239 = vmul.u32 %v2238, 48
  %v2240 = vsub.s32 %v2234, %v2239
  %v2241 = vsub.s32 0, %v2240
  %v2242 = vsel %vm2232, %v2241, %v2240
  %vm2243 = vcmp.lt.s32.totalorder %v118, 0
  %v2244 = vsub.s32 0, %v118
  %v2245 = vsel %vm2243, %v2244, %v118
  %v2246 = vmul.u32.u64.compose %v2245, 2863311531
  %v2247 = vextract.low.u32 %v2246
  %v2248 = vextract.high.u32 %v2246
  %v2249 = vshrl.u32 %v2248, 5
  %v2250 = vmul.u32 %v2249, 48
  %v2251 = vsub.s32 %v2245, %v2250
  %v2252 = vsub.s32 0, %v2251
  %v2253 = vsel %vm2243, %v2252, %v2251
  %vm2254 = vcmp.lt.s32.totalorder %v119, 0
  %v2255 = vsub.s32 0, %v119
  %v2256 = vsel %vm2254, %v2255, %v119
  %v2257 = vmul.u32.u64.compose %v2256, 2863311531
  %v2258 = vextract.low.u32 %v2257
  %v2259 = vextract.high.u32 %v2257
  %v2260 = vshrl.u32 %v2259, 5
  %v2261 = vmul.u32 %v2260, 48
  %v2262 = vsub.s32 %v2256, %v2261
  %v2263 = vsub.s32 0, %v2262
  %v2264 = vsel %vm2254, %v2263, %v2262
  %vm2265 = vcmp.lt.s32.totalorder %v120, 0
  %v2266 = vsub.s32 0, %v120
  %v2267 = vsel %vm2265, %v2266, %v120
  %v2268 = vmul.u32.u64.compose %v2267, 2863311531
  %v2269 = vextract.low.u32 %v2268
  %v2270 = vextract.high.u32 %v2268
  %v2271 = vshrl.u32 %v2270, 5
  %v2272 = vmul.u32 %v2271, 48
  %v2273 = vsub.s32 %v2267, %v2272
  %v2274 = vsub.s32 0, %v2273
  %v2275 = vsel %vm2265, %v2274, %v2273
  %vm2276 = vcmp.lt.s32.totalorder %v121, 0
  %v2277 = vsub.s32 0, %v121
  %v2278 = vsel %vm2276, %v2277, %v121
  %v2279 = vmul.u32.u64.compose %v2278, 2863311531
  %v2280 = vextract.low.u32 %v2279
  %v2281 = vextract.high.u32 %v2279
  %v2282 = vshrl.u32 %v2281, 5
  %v2283 = vmul.u32 %v2282, 48
  %v2284 = vsub.s32 %v2278, %v2283
  %v2285 = vsub.s32 0, %v2284
  %v2286 = vsel %vm2276, %v2285, %v2284
  %vm2287 = vcmp.lt.s32.totalorder %v122, 0
  %v2288 = vsub.s32 0, %v122
  %v2289 = vsel %vm2287, %v2288, %v122
  %v2290 = vmul.u32.u64.compose %v2289, 2863311531
  %v2291 = vextract.low.u32 %v2290
  %v2292 = vextract.high.u32 %v2290
  %v2293 = vshrl.u32 %v2292, 5
  %v2294 = vmul.u32 %v2293, 48
  %v2295 = vsub.s32 %v2289, %v2294
  %v2296 = vsub.s32 0, %v2295
  %v2297 = vsel %vm2287, %v2296, %v2295
  %vm2298 = vcmp.lt.s32.totalorder %v123, 0
  %v2299 = vsub.s32 0, %v123
  %v2300 = vsel %vm2298, %v2299, %v123
  %v2301 = vmul.u32.u64.compose %v2300, 2863311531
  %v2302 = vextract.low.u32 %v2301
  %v2303 = vextract.high.u32 %v2301
  %v2304 = vshrl.u32 %v2303, 5
  %v2305 = vmul.u32 %v2304, 48
  %v2306 = vsub.s32 %v2300, %v2305
  %v2307 = vsub.s32 0, %v2306
  %v2308 = vsel %vm2298, %v2307, %v2306
  %vm2309 = vcmp.lt.s32.totalorder %v124, 0
  %v2310 = vsub.s32 0, %v124
  %v2311 = vsel %vm2309, %v2310, %v124
  %v2312 = vmul.u32.u64.compose %v2311, 2863311531
  %v2313 = vextract.low.u32 %v2312
  %v2314 = vextract.high.u32 %v2312
  %v2315 = vshrl.u32 %v2314, 5
  %v2316 = vmul.u32 %v2315, 48
  %v2317 = vsub.s32 %v2311, %v2316
  %v2318 = vsub.s32 0, %v2317
  %v2319 = vsel %vm2309, %v2318, %v2317
  %vm2320 = vcmp.lt.s32.totalorder %v125, 0
  %v2321 = vsub.s32 0, %v125
  %v2322 = vsel %vm2320, %v2321, %v125
  %v2323 = vmul.u32.u64.compose %v2322, 2863311531
  %v2324 = vextract.low.u32 %v2323
  %v2325 = vextract.high.u32 %v2323
  %v2326 = vshrl.u32 %v2325, 5
  %v2327 = vmul.u32 %v2326, 48
  %v2328 = vsub.s32 %v2322, %v2327
  %v2329 = vsub.s32 0, %v2328
  %v2330 = vsel %vm2320, %v2329, %v2328
  %vm2331 = vcmp.ne.s32.totalorder %v2209, 0
  %vm2332 = vcmp.ne.s32.totalorder %v2220, 0
  %vm2333 = vcmp.ne.s32.totalorder %v2231, 0
  %vm2334 = vcmp.ne.s32.totalorder %v2242, 0
  %vm2335 = vcmp.ne.s32.totalorder %v2253, 0
  %vm2336 = vcmp.ne.s32.totalorder %v2264, 0
  %vm2337 = vcmp.ne.s32.totalorder %v2275, 0
  %vm2338 = vcmp.ne.s32.totalorder %v2286, 0
  %vm2339 = vcmp.ne.s32.totalorder %v2297, 0
  %vm2340 = vcmp.ne.s32.totalorder %v2308, 0
  %vm2341 = vcmp.ne.s32.totalorder %v2319, 0
  %vm2342 = vcmp.ne.s32.totalorder %v2330, 0
  %vm2343 = vcmp.lt.s32.totalorder %v2209, 0
  %vm2344 = vcmp.lt.s32.totalorder %v2220, 0
  %vm2345 = vcmp.lt.s32.totalorder %v2231, 0
  %vm2346 = vcmp.lt.s32.totalorder %v2242, 0
  %vm2347 = vcmp.lt.s32.totalorder %v2253, 0
  %vm2348 = vcmp.lt.s32.totalorder %v2264, 0
  %vm2349 = vcmp.lt.s32.totalorder %v2275, 0
  %vm2350 = vcmp.lt.s32.totalorder %v2286, 0
  %vm2351 = vcmp.lt.s32.totalorder %v2297, 0
  %vm2352 = vcmp.lt.s32.totalorder %v2308, 0
  %vm2353 = vcmp.lt.s32.totalorder %v2319, 0
  %vm2354 = vcmp.lt.s32.totalorder %v2330, 0
  %vm2355 = vmand %vm2343, %vm2331
  %vm2356 = vmand %vm2344, %vm2332
  %vm2357 = vmand %vm2345, %vm2333
  %vm2358 = vmand %vm2346, %vm2334
  %vm2359 = vmand %vm2347, %vm2335
  %vm2360 = vmand %vm2348, %vm2336
  %vm2361 = vmand %vm2349, %vm2337
  %vm2362 = vmand %vm2350, %vm2338
  %vm2363 = vmand %vm2351, %vm2339
  %vm2364 = vmand %vm2352, %vm2340
  %vm2365 = vmand %vm2353, %vm2341
  %vm2366 = vmand %vm2354, %vm2342
  %v2367 = vadd.s32 %v2209, 48
  %v2368 = vadd.s32 %v2220, 48
  %v2369 = vadd.s32 %v2231, 48
  %v2370 = vadd.s32 %v2242, 48
  %v2371 = vadd.s32 %v2253, 48
  %v2372 = vadd.s32 %v2264, 48
  %v2373 = vadd.s32 %v2275, 48
  %v2374 = vadd.s32 %v2286, 48
  %v2375 = vadd.s32 %v2297, 48
  %v2376 = vadd.s32 %v2308, 48
  %v2377 = vadd.s32 %v2319, 48
  %v2378 = vadd.s32 %v2330, 48
  %v2379 = vsel %vm2355, %v2367, %v2209
  %v2380 = vsel %vm2356, %v2368, %v2220
  %v2381 = vsel %vm2357, %v2369, %v2231
  %v2382 = vsel %vm2358, %v2370, %v2242
  %v2383 = vsel %vm2359, %v2371, %v2253
  %v2384 = vsel %vm2360, %v2372, %v2264
  %v2385 = vsel %vm2361, %v2373, %v2275
  %v2386 = vsel %vm2362, %v2374, %v2286
  %v2387 = vsel %vm2363, %v2375, %v2297
  %v2388 = vsel %vm2364, %v2376, %v2308
  %v2389 = vsel %vm2365, %v2377, %v2319
  %v2390 = vsel %vm2366, %v2378, %v2330
  %vm2391 = vcmp.ne.s32.totalorder %v2379, 0
  %vm2392 = vcmp.ne.s32.totalorder %v2380, 0
  %vm2393 = vcmp.ne.s32.totalorder %v2381, 0
  %vm2394 = vcmp.ne.s32.totalorder %v2382, 0
  %vm2395 = vcmp.ne.s32.totalorder %v2383, 0
  %vm2396 = vcmp.ne.s32.totalorder %v2384, 0
  %vm2397 = vcmp.ne.s32.totalorder %v2385, 0
  %vm2398 = vcmp.ne.s32.totalorder %v2386, 0
  %vm2399 = vcmp.ne.s32.totalorder %v2387, 0
  %vm2400 = vcmp.ne.s32.totalorder %v2388, 0
  %vm2401 = vcmp.ne.s32.totalorder %v2389, 0
  %vm2402 = vcmp.ne.s32.totalorder %v2390, 0
  %v2403 = vsel %vm2391, 1, 0
  %v2404 = vsel %vm2392, 1, 0
  %v2405 = vsel %vm2393, 1, 0
  %v2406 = vsel %vm2394, 1, 0
  %v2407 = vsel %vm2395, 1, 0
  %v2408 = vsel %vm2396, 1, 0
  %v2409 = vsel %vm2397, 1, 0
  %v2410 = vsel %vm2398, 1, 0
  %v2411 = vsel %vm2399, 1, 0
  %v2412 = vsel %vm2400, 1, 0
  %v2413 = vsel %vm2401, 1, 0
  %v2414 = vsel %vm2402, 1, 0
  %v2415 = vcvt.s32.f32 %v2403
  %v2416 = vcvt.s32.f32 %v2404
  %v2417 = vcvt.s32.f32 %v2405
  %v2418 = vcvt.s32.f32 %v2406
  %v2419 = vcvt.s32.f32 %v2407
  %v2420 = vcvt.s32.f32 %v2408
  %v2421 = vcvt.s32.f32 %v2409
  %v2422 = vcvt.s32.f32 %v2410
  %v2423 = vcvt.s32.f32 %v2411
  %v2424 = vcvt.s32.f32 %v2412
  %v2425 = vcvt.s32.f32 %v2413
  %v2426 = vcvt.s32.f32 %v2414
  %vm2427 = vcmp.ne.s32.totalorder %v2379, 47
  %vm2428 = vcmp.ne.s32.totalorder %v2380, 47
  %vm2429 = vcmp.ne.s32.totalorder %v2381, 47
  %vm2430 = vcmp.ne.s32.totalorder %v2382, 47
  %vm2431 = vcmp.ne.s32.totalorder %v2383, 47
  %vm2432 = vcmp.ne.s32.totalorder %v2384, 47
  %vm2433 = vcmp.ne.s32.totalorder %v2385, 47
  %vm2434 = vcmp.ne.s32.totalorder %v2386, 47
  %vm2435 = vcmp.ne.s32.totalorder %v2387, 47
  %vm2436 = vcmp.ne.s32.totalorder %v2388, 47
  %vm2437 = vcmp.ne.s32.totalorder %v2389, 47
  %vm2438 = vcmp.ne.s32.totalorder %v2390, 47
  %v2439 = vsel %vm2427, 1, 0
  %v2440 = vsel %vm2428, 1, 0
  %v2441 = vsel %vm2429, 1, 0
  %v2442 = vsel %vm2430, 1, 0
  %v2443 = vsel %vm2431, 1, 0
  %v2444 = vsel %vm2432, 1, 0
  %v2445 = vsel %vm2433, 1, 0
  %v2446 = vsel %vm2434, 1, 0
  %v2447 = vsel %vm2435, 1, 0
  %v2448 = vsel %vm2436, 1, 0
  %v2449 = vsel %vm2437, 1, 0
  %v2450 = vsel %vm2438, 1, 0
  %v2451 = vcvt.s32.f32 %v2439
  %v2452 = vcvt.s32.f32 %v2440
  %v2453 = vcvt.s32.f32 %v2441
  %v2454 = vcvt.s32.f32 %v2442
  %v2455 = vcvt.s32.f32 %v2443
  %v2456 = vcvt.s32.f32 %v2444
  %v2457 = vcvt.s32.f32 %v2445
  %v2458 = vcvt.s32.f32 %v2446
  %v2459 = vcvt.s32.f32 %v2447
  %v2460 = vcvt.s32.f32 %v2448
  %v2461 = vcvt.s32.f32 %v2449
  %v2462 = vcvt.s32.f32 %v2450
  %v2559 = vlaneseq
  %v2560 = vshrl.u32 %v2559, 7
  %v2561 = vsub.s32 0, %v2560
  %v2562 = vrot.slane %v2090, %v2561
  %v2563 = vlaneseq
  %v2564 = vshrl.u32 %v2563, 7
  %v2565 = vsub.s32 0, %v2564
  %v2566 = vrot.slane %v2091, %v2565
  %v2567 = vlaneseq
  %v2568 = vshrl.u32 %v2567, 7
  %v2569 = vsub.s32 0, %v2568
  %v2570 = vrot.slane %v2092, %v2569
  %v2571 = vlaneseq
  %v2572 = vshrl.u32 %v2571, 7
  %v2573 = vsub.s32 0, %v2572
  %v2574 = vrot.slane %v2093, %v2573
  %v2575 = vlaneseq
  %v2576 = vshrl.u32 %v2575, 7
  %v2577 = vsub.s32 0, %v2576
  %v2578 = vrot.slane %v2094, %v2577
  %v2579 = vlaneseq
  %v2580 = vshrl.u32 %v2579, 7
  %v2581 = vsub.s32 0, %v2580
  %v2582 = vrot.slane %v2095, %v2581
  %v2583 = vlaneseq
  %v2584 = vshrl.u32 %v2583, 7
  %v2585 = vsub.s32 0, %v2584
  %v2586 = vrot.slane %v2096, %v2585
  %v2587 = vlaneseq
  %v2588 = vshrl.u32 %v2587, 7
  %v2589 = vsub.s32 0, %v2588
  %v2590 = vrot.slane %v2097, %v2589
  %v2591 = vlaneseq
  %v2592 = vshrl.u32 %v2591, 7
  %v2593 = vsub.s32 0, %v2592
  %v2594 = vrot.slane %v2098, %v2593
  %v2595 = vlaneseq
  %v2596 = vshrl.u32 %v2595, 7
  %v2597 = vsub.s32 0, %v2596
  %v2598 = vrot.slane %v2099, %v2597
  %v2599 = vlaneseq
  %v2600 = vshrl.u32 %v2599, 7
  %v2601 = vsub.s32 0, %v2600
  %v2602 = vrot.slane %v2100, %v2601
  %v2603 = vlaneseq
  %v2604 = vshrl.u32 %v2603, 7
  %v2605 = vsub.s32 0, %v2604
  %v2606 = vrot.slane %v2101, %v2605
  %v2607 = vlaneseq
  %v2608 = vshrl.u32 %v2607, 7
  %v2609 = vsub.s32 0, %v2608
  %v2610 = vrot.slane %v2102, %v2609
  %v2611 = vlaneseq
  %v2612 = vshrl.u32 %v2611, 7
  %v2613 = vsub.s32 0, %v2612
  %v2614 = vrot.slane %v2103, %v2613
  %v2615 = vlaneseq
  %v2616 = vshrl.u32 %v2615, 7
  %v2617 = vsub.s32 0, %v2616
  %v2618 = vrot.slane %v2104, %v2617
  %v2619 = vlaneseq
  %v2620 = vshrl.u32 %v2619, 7
  %v2621 = vsub.s32 0, %v2620
  %v2622 = vrot.slane %v2105, %v2621
  %v2623 = vlaneseq
  %v2624 = vshrl.u32 %v2623, 7
  %v2625 = vsub.s32 0, %v2624
  %v2626 = vrot.slane %v2106, %v2625
  %v2627 = vlaneseq
  %v2628 = vshrl.u32 %v2627, 7
  %v2629 = vsub.s32 0, %v2628
  %v2630 = vrot.slane %v2107, %v2629
  %v2631 = vlaneseq
  %v2632 = vshrl.u32 %v2631, 7
  %v2633 = vsub.s32 0, %v2632
  %v2634 = vrot.slane %v2108, %v2633
  %v2635 = vlaneseq
  %v2636 = vshrl.u32 %v2635, 7
  %v2637 = vsub.s32 0, %v2636
  %v2638 = vrot.slane %v2109, %v2637
  %v2639 = vlaneseq
  %v2640 = vshrl.u32 %v2639, 7
  %v2641 = vsub.s32 0, %v2640
  %v2642 = vrot.slane %v2110, %v2641
  %v2643 = vlaneseq
  %v2644 = vshrl.u32 %v2643, 7
  %v2645 = vsub.s32 0, %v2644
  %v2646 = vrot.slane %v2111, %v2645
  %v2647 = vlaneseq
  %v2648 = vshrl.u32 %v2647, 7
  %v2649 = vsub.s32 0, %v2648
  %v2650 = vrot.slane %v2112, %v2649
  %v2651 = vlaneseq
  %v2652 = vshrl.u32 %v2651, 7
  %v2653 = vsub.s32 0, %v2652
  %v2654 = vrot.slane %v2113, %v2653
  %v2655 = vlaneseq
  %v2656 = vshrl.u32 %v2655, 7
  %v2657 = vsub.s32 0, %v2656
  %v2658 = vrot.slane %v2114, %v2657
  %v2659 = vlaneseq
  %v2660 = vshrl.u32 %v2659, 7
  %v2661 = vsub.s32 0, %v2660
  %v2662 = vrot.slane %v2115, %v2661
  %v2663 = vlaneseq
  %v2664 = vshrl.u32 %v2663, 7
  %v2665 = vsub.s32 0, %v2664
  %v2666 = vrot.slane %v2116, %v2665
  %v2667 = vlaneseq
  %v2668 = vshrl.u32 %v2667, 7
  %v2669 = vsub.s32 0, %v2668
  %v2670 = vrot.slane %v2117, %v2669
  %v2671 = vlaneseq
  %v2672 = vshrl.u32 %v2671, 7
  %v2673 = vsub.s32 0, %v2672
  %v2674 = vrot.slane %v2118, %v2673
  %v2675 = vlaneseq
  %v2676 = vshrl.u32 %v2675, 7
  %v2677 = vsub.s32 0, %v2676
  %v2678 = vrot.slane %v2119, %v2677
  %v2679 = vlaneseq
  %v2680 = vshrl.u32 %v2679, 7
  %v2681 = vsub.s32 0, %v2680
  %v2682 = vrot.slane %v2120, %v2681
  %v2683 = vlaneseq
  %v2684 = vshrl.u32 %v2683, 7
  %v2685 = vsub.s32 0, %v2684
  %v2686 = vrot.slane %v2121, %v2685
  %v2687 = vlaneseq
  %v2688 = vshrl.u32 %v2687, 7
  %v2689 = vsub.s32 0, %v2688
  %v2690 = vrot.slane %v2122, %v2689
  %v2691 = vlaneseq
  %v2692 = vshrl.u32 %v2691, 7
  %v2693 = vsub.s32 0, %v2692
  %v2694 = vrot.slane %v2123, %v2693
  %v2695 = vlaneseq
  %v2696 = vshrl.u32 %v2695, 7
  %v2697 = vsub.s32 0, %v2696
  %v2698 = vrot.slane %v2124, %v2697
  %v2699 = vlaneseq
  %v2700 = vshrl.u32 %v2699, 7
  %v2701 = vsub.s32 0, %v2700
  %v2702 = vrot.slane %v2125, %v2701
  %v2703 = vlaneseq
  %v2704 = vshrl.u32 %v2703, 7
  %v2705 = vsub.s32 0, %v2704
  %v2706 = vrot.slane %v2126, %v2705
  %v2707 = vlaneseq
  %v2708 = vshrl.u32 %v2707, 7
  %v2709 = vsub.s32 0, %v2708
  %v2710 = vrot.slane %v2127, %v2709
  %v2711 = vlaneseq
  %v2712 = vshrl.u32 %v2711, 7
  %v2713 = vsub.s32 0, %v2712
  %v2714 = vrot.slane %v2128, %v2713
  %v2715 = vlaneseq
  %v2716 = vshrl.u32 %v2715, 7
  %v2717 = vsub.s32 0, %v2716
  %v2718 = vrot.slane %v2129, %v2717
  %v2719 = vlaneseq
  %v2720 = vshrl.u32 %v2719, 7
  %v2721 = vsub.s32 0, %v2720
  %v2722 = vrot.slane %v2130, %v2721
  %v2723 = vlaneseq
  %v2724 = vshrl.u32 %v2723, 7
  %v2725 = vsub.s32 0, %v2724
  %v2726 = vrot.slane %v2131, %v2725
  %v2727 = vlaneseq
  %v2728 = vshrl.u32 %v2727, 7
  %v2729 = vsub.s32 0, %v2728
  %v2730 = vrot.slane %v2132, %v2729
  %v2731 = vlaneseq
  %v2732 = vshrl.u32 %v2731, 7
  %v2733 = vsub.s32 0, %v2732
  %v2734 = vrot.slane %v2133, %v2733
  %v2735 = vlaneseq
  %v2736 = vshrl.u32 %v2735, 7
  %v2737 = vsub.s32 0, %v2736
  %v2738 = vrot.slane %v2134, %v2737
  %v2739 = vlaneseq
  %v2740 = vshrl.u32 %v2739, 7
  %v2741 = vsub.s32 0, %v2740
  %v2742 = vrot.slane %v2135, %v2741
  %v2743 = vlaneseq
  %v2744 = vshrl.u32 %v2743, 7
  %v2745 = vsub.s32 0, %v2744
  %v2746 = vrot.slane %v2136, %v2745
  %v2747 = vlaneseq
  %v2748 = vshrl.u32 %v2747, 7
  %v2749 = vsub.s32 0, %v2748
  %v2750 = vrot.slane %v2137, %v2749
  %v2751 = vlaneseq
  %v2752 = vshrl.u32 %v2751, 7
  %v2753 = vsub.s32 0, %v2752
  %v2754 = vrot.slane %v2138, %v2753
  %v2755 = vlaneseq
  %v2756 = vshrl.u32 %v2755, 7
  %v2757 = vsub.s32 0, %v2756
  %v2758 = vrot.slane %v2139, %v2757
  %v2759 = vlaneseq
  %v2760 = vshrl.u32 %v2759, 7
  %v2761 = vsub.s32 0, %v2760
  %v2762 = vrot.slane %v2140, %v2761
  %v2763 = vlaneseq
  %v2764 = vshrl.u32 %v2763, 7
  %v2765 = vsub.s32 0, %v2764
  %v2766 = vrot.slane %v2141, %v2765
  %v2767 = vlaneseq
  %v2768 = vshrl.u32 %v2767, 7
  %v2769 = vsub.s32 0, %v2768
  %v2770 = vrot.slane %v2142, %v2769
  %v2771 = vlaneseq
  %v2772 = vshrl.u32 %v2771, 7
  %v2773 = vsub.s32 0, %v2772
  %v2774 = vrot.slane %v2143, %v2773
  %v2775 = vlaneseq
  %v2776 = vshrl.u32 %v2775, 7
  %v2777 = vsub.s32 0, %v2776
  %v2778 = vrot.slane %v2144, %v2777
  %v2779 = vlaneseq
  %v2780 = vshrl.u32 %v2779, 7
  %v2781 = vsub.s32 0, %v2780
  %v2782 = vrot.slane %v2145, %v2781
  %v2783 = vlaneseq
  %v2784 = vshrl.u32 %v2783, 7
  %v2785 = vsub.s32 0, %v2784
  %v2786 = vrot.slane %v2146, %v2785
  %v2787 = vlaneseq
  %v2788 = vshrl.u32 %v2787, 7
  %v2789 = vsub.s32 0, %v2788
  %v2790 = vrot.slane %v2147, %v2789
  %v2791 = vlaneseq
  %v2792 = vshrl.u32 %v2791, 7
  %v2793 = vsub.s32 0, %v2792
  %v2794 = vrot.slane %v2148, %v2793
  %v2795 = vlaneseq
  %v2796 = vshrl.u32 %v2795, 7
  %v2797 = vsub.s32 0, %v2796
  %v2798 = vrot.slane %v2149, %v2797
  %v2799 = vlaneseq
  %v2800 = vshrl.u32 %v2799, 7
  %v2801 = vsub.s32 0, %v2800
  %v2802 = vrot.slane %v2150, %v2801
  %v2803 = vlaneseq
  %v2804 = vshrl.u32 %v2803, 7
  %v2805 = vsub.s32 0, %v2804
  %v2806 = vrot.slane %v2151, %v2805
  %v2807 = vlaneseq
  %v2808 = vshrl.u32 %v2807, 7
  %v2809 = vsub.s32 0, %v2808
  %v2810 = vrot.slane %v2152, %v2809
  %v2811 = vlaneseq
  %v2812 = vshrl.u32 %v2811, 7
  %v2813 = vsub.s32 0, %v2812
  %v2814 = vrot.slane %v2153, %v2813
  %v2815 = vlaneseq
  %v2816 = vshrl.u32 %v2815, 7
  %v2817 = vsub.s32 0, %v2816
  %v2818 = vrot.slane %v2154, %v2817
  %v2819 = vlaneseq
  %v2820 = vshrl.u32 %v2819, 7
  %v2821 = vsub.s32 0, %v2820
  %v2822 = vrot.slane %v2155, %v2821
  %v2823 = vlaneseq
  %v2824 = vshrl.u32 %v2823, 7
  %v2825 = vsub.s32 0, %v2824
  %v2826 = vrot.slane %v2156, %v2825
  %v2827 = vlaneseq
  %v2828 = vshrl.u32 %v2827, 7
  %v2829 = vsub.s32 0, %v2828
  %v2830 = vrot.slane %v2157, %v2829
  %v2831 = vlaneseq
  %v2832 = vshrl.u32 %v2831, 7
  %v2833 = vsub.s32 0, %v2832
  %v2834 = vrot.slane %v2158, %v2833
  %v2835 = vlaneseq
  %v2836 = vshrl.u32 %v2835, 7
  %v2837 = vsub.s32 0, %v2836
  %v2838 = vrot.slane %v2159, %v2837
  %v2839 = vlaneseq
  %v2840 = vshrl.u32 %v2839, 7
  %v2841 = vsub.s32 0, %v2840
  %v2842 = vrot.slane %v2160, %v2841
  %v2843 = vlaneseq
  %v2844 = vshrl.u32 %v2843, 7
  %v2845 = vsub.s32 0, %v2844
  %v2846 = vrot.slane %v2161, %v2845
  %v2847 = vlaneseq
  %v2848 = vshrl.u32 %v2847, 7
  %v2849 = vsub.s32 0, %v2848
  %v2850 = vrot.slane %v2162, %v2849
  %v2851 = vlaneseq
  %v2852 = vshrl.u32 %v2851, 7
  %v2853 = vsub.s32 0, %v2852
  %v2854 = vrot.slane %v2163, %v2853
  %v2855 = vlaneseq
  %v2856 = vshrl.u32 %v2855, 7
  %v2857 = vsub.s32 0, %v2856
  %v2858 = vrot.slane %v2164, %v2857
  %v2859 = vlaneseq
  %v2860 = vshrl.u32 %v2859, 7
  %v2861 = vsub.s32 0, %v2860
  %v2862 = vrot.slane %v2165, %v2861
  %v2863 = vlaneseq
  %v2864 = vshrl.u32 %v2863, 7
  %v2865 = vsub.s32 0, %v2864
  %v2866 = vrot.slane %v2166, %v2865
  %v2867 = vlaneseq
  %v2868 = vshrl.u32 %v2867, 7
  %v2869 = vsub.s32 0, %v2868
  %v2870 = vrot.slane %v2167, %v2869
  %v2871 = vlaneseq
  %v2872 = vshrl.u32 %v2871, 7
  %v2873 = vsub.s32 0, %v2872
  %v2874 = vrot.slane %v2168, %v2873
  %v2875 = vlaneseq
  %v2876 = vshrl.u32 %v2875, 7
  %v2877 = vsub.s32 0, %v2876
  %v2878 = vrot.slane %v2169, %v2877
  %v2879 = vlaneseq
  %v2880 = vshrl.u32 %v2879, 7
  %v2881 = vsub.s32 0, %v2880
  %v2882 = vrot.slane %v2170, %v2881
  %v2883 = vlaneseq
  %v2884 = vshrl.u32 %v2883, 7
  %v2885 = vsub.s32 0, %v2884
  %v2886 = vrot.slane %v2171, %v2885
  %v2887 = vlaneseq
  %v2888 = vshrl.u32 %v2887, 7
  %v2889 = vsub.s32 0, %v2888
  %v2890 = vrot.slane %v2172, %v2889
  %v2891 = vlaneseq
  %v2892 = vshrl.u32 %v2891, 7
  %v2893 = vsub.s32 0, %v2892
  %v2894 = vrot.slane %v2173, %v2893
  %v2895 = vlaneseq
  %v2896 = vshrl.u32 %v2895, 7
  %v2897 = vsub.s32 0, %v2896
  %v2898 = vrot.slane %v2174, %v2897
  %v2899 = vlaneseq
  %v2900 = vshrl.u32 %v2899, 7
  %v2901 = vsub.s32 0, %v2900
  %v2902 = vrot.slane %v2175, %v2901
  %v2903 = vlaneseq
  %v2904 = vshrl.u32 %v2903, 7
  %v2905 = vsub.s32 0, %v2904
  %v2906 = vrot.slane %v2176, %v2905
  %v2907 = vlaneseq
  %v2908 = vshrl.u32 %v2907, 7
  %v2909 = vsub.s32 0, %v2908
  %v2910 = vrot.slane %v2177, %v2909
  %v2911 = vlaneseq
  %v2912 = vshrl.u32 %v2911, 7
  %v2913 = vsub.s32 0, %v2912
  %v2914 = vrot.slane %v2178, %v2913
  %v2915 = vlaneseq
  %v2916 = vshrl.u32 %v2915, 7
  %v2917 = vsub.s32 0, %v2916
  %v2918 = vrot.slane %v2179, %v2917
  %v2919 = vlaneseq
  %v2920 = vshrl.u32 %v2919, 7
  %v2921 = vsub.s32 0, %v2920
  %v2922 = vrot.slane %v2180, %v2921
  %v2923 = vlaneseq
  %v2924 = vshrl.u32 %v2923, 7
  %v2925 = vsub.s32 0, %v2924
  %v2926 = vrot.slane %v2181, %v2925
  %v2927 = vlaneseq
  %v2928 = vshrl.u32 %v2927, 7
  %v2929 = vsub.s32 0, %v2928
  %v2930 = vrot.slane %v2182, %v2929
  %v2931 = vlaneseq
  %v2932 = vshrl.u32 %v2931, 7
  %v2933 = vsub.s32 0, %v2932
  %v2934 = vrot.slane %v2183, %v2933
  %v2935 = vlaneseq
  %v2936 = vshrl.u32 %v2935, 7
  %v2937 = vsub.s32 0, %v2936
  %v2938 = vrot.slane %v2184, %v2937
  %v2939 = vlaneseq
  %v2940 = vshrl.u32 %v2939, 7
  %v2941 = vsub.s32 0, %v2940
  %v2942 = vrot.slane %v2185, %v2941
  %vm2943 = vcmask 1041409
  %v2944 = vsel %vm2943, %v2566, %v2562
  %vm2945 = vcmask 1042434
  %v2946 = vsel %vm2945, %v2570, %v2944
  %vm2947 = vcmask 1043459
  %v2948 = vsel %vm2947, %v2574, %v2946
  %vm2949 = vcmask 1044484
  %v2950 = vsel %vm2949, %v2578, %v2948
  %vm2951 = vcmask 1045509
  %v2952 = vsel %vm2951, %v2582, %v2950
  %vm2953 = vcmask 1046534
  %v2954 = vsel %vm2953, %v2586, %v2952
  %vm2955 = vcmask 1047559
  %v2956 = vsel %vm2955, %v2590, %v2954
  %v2957 = vsel %vm2943, %v2598, %v2594
  %v2958 = vsel %vm2945, %v2602, %v2957
  %v2959 = vsel %vm2947, %v2606, %v2958
  %v2960 = vsel %vm2949, %v2610, %v2959
  %v2961 = vsel %vm2951, %v2614, %v2960
  %v2962 = vsel %vm2953, %v2618, %v2961
  %v2963 = vsel %vm2955, %v2622, %v2962
  %v2964 = vsel %vm2943, %v2630, %v2626
  %v2965 = vsel %vm2945, %v2634, %v2964
  %v2966 = vsel %vm2947, %v2638, %v2965
  %v2967 = vsel %vm2949, %v2642, %v2966
  %v2968 = vsel %vm2951, %v2646, %v2967
  %v2969 = vsel %vm2953, %v2650, %v2968
  %v2970 = vsel %vm2955, %v2654, %v2969
  %v2971 = vsel %vm2943, %v2662, %v2658
  %v2972 = vsel %vm2945, %v2666, %v2971
  %v2973 = vsel %vm2947, %v2670, %v2972
  %v2974 = vsel %vm2949, %v2674, %v2973
  %v2975 = vsel %vm2951, %v2678, %v2974
  %v2976 = vsel %vm2953, %v2682, %v2975
  %v2977 = vsel %vm2955, %v2686, %v2976
  %v2978 = vsel %vm2943, %v2694, %v2690
  %v2979 = vsel %vm2945, %v2698, %v2978
  %v2980 = vsel %vm2947, %v2702, %v2979
  %v2981 = vsel %vm2949, %v2706, %v2980
  %v2982 = vsel %vm2951, %v2710, %v2981
  %v2983 = vsel %vm2953, %v2714, %v2982
  %v2984 = vsel %vm2955, %v2718, %v2983
  %v2985 = vsel %vm2943, %v2726, %v2722
  %v2986 = vsel %vm2945, %v2730, %v2985
  %v2987 = vsel %vm2947, %v2734, %v2986
  %v2988 = vsel %vm2949, %v2738, %v2987
  %v2989 = vsel %vm2951, %v2742, %v2988
  %v2990 = vsel %vm2953, %v2746, %v2989
  %v2991 = vsel %vm2955, %v2750, %v2990
  %v2992 = vsel %vm2943, %v2758, %v2754
  %v2993 = vsel %vm2945, %v2762, %v2992
  %v2994 = vsel %vm2947, %v2766, %v2993
  %v2995 = vsel %vm2949, %v2770, %v2994
  %v2996 = vsel %vm2951, %v2774, %v2995
  %v2997 = vsel %vm2953, %v2778, %v2996
  %v2998 = vsel %vm2955, %v2782, %v2997
  %v2999 = vsel %vm2943, %v2790, %v2786
  %v3000 = vsel %vm2945, %v2794, %v2999
  %v3001 = vsel %vm2947, %v2798, %v3000
  %v3002 = vsel %vm2949, %v2802, %v3001
  %v3003 = vsel %vm2951, %v2806, %v3002
  %v3004 = vsel %vm2953, %v2810, %v3003
  %v3005 = vsel %vm2955, %v2814, %v3004
  %v3006 = vsel %vm2943, %v2822, %v2818
  %v3007 = vsel %vm2945, %v2826, %v3006
  %v3008 = vsel %vm2947, %v2830, %v3007
  %v3009 = vsel %vm2949, %v2834, %v3008
  %v3010 = vsel %vm2951, %v2838, %v3009
  %v3011 = vsel %vm2953, %v2842, %v3010
  %v3012 = vsel %vm2955, %v2846, %v3011
  %v3013 = vsel %vm2943, %v2854, %v2850
  %v3014 = vsel %vm2945, %v2858, %v3013
  %v3015 = vsel %vm2947, %v2862, %v3014
  %v3016 = vsel %vm2949, %v2866, %v3015
  %v3017 = vsel %vm2951, %v2870, %v3016
  %v3018 = vsel %vm2953, %v2874, %v3017
  %v3019 = vsel %vm2955, %v2878, %v3018
  %v3020 = vsel %vm2943, %v2886, %v2882
  %v3021 = vsel %vm2945, %v2890, %v3020
  %v3022 = vsel %vm2947, %v2894, %v3021
  %v3023 = vsel %vm2949, %v2898, %v3022
  %v3024 = vsel %vm2951, %v2902, %v3023
  %v3025 = vsel %vm2953, %v2906, %v3024
  %v3026 = vsel %vm2955, %v2910, %v3025
  %v3027 = vsel %vm2943, %v2918, %v2914
  %v3028 = vsel %vm2945, %v2922, %v3027
  %v3029 = vsel %vm2947, %v2926, %v3028
  %v3030 = vsel %vm2949, %v2930, %v3029
  %v3031 = vsel %vm2951, %v2934, %v3030
  %v3032 = vsel %vm2953, %v2938, %v3031
  %v3033 = vsel %vm2955, %v2942, %v3032
  %v3046 = vrot.slane %v2956, 7
  %v3047 = vrot.slane %v2963, 7
  %v3048 = vrot.slane %v2970, 7
  %v3049 = vrot.slane %v2977, 7
  %v3050 = vrot.slane %v2984, 7
  %v3051 = vrot.slane %v2991, 7
  %v3052 = vrot.slane %v2998, 7
  %v3053 = vrot.slane %v3005, 7
  %v3054 = vrot.slane %v3012, 7
  %v3055 = vrot.slane %v3019, 7
  %v3056 = vrot.slane %v3026, 7
  %v3057 = vrot.slane %v3033, 7
  %v3058 = vsel %vm690, %v3056, %v3057
  %v3059 = vsel %vm690, %v3055, %v3056
  %v3060 = vsel %vm690, %v3054, %v3055
  %v3061 = vsel %vm690, %v3053, %v3054
  %v3062 = vsel %vm690, %v3052, %v3053
  %v3063 = vsel %vm690, %v3051, %v3052
  %v3064 = vsel %vm690, %v3050, %v3051
  %v3065 = vsel %vm690, %v3049, %v3050
  %v3066 = vsel %vm690, %v3048, %v3049
  %v3067 = vsel %vm690, %v3047, %v3048
  %v3068 = vsel %vm690, %v3046, %v3047
  %v3069 = vsel %vm690, %v3057, %v3046
  %v3070 = vmul.f32 %v3069, %v2415
  %v3071 = vmul.f32 %v3068, %v2416
  %v3072 = vmul.f32 %v3067, %v2417
  %v3073 = vmul.f32 %v3066, %v2418
  %v3074 = vmul.f32 %v3065, %v2419
  %v3075 = vmul.f32 %v3064, %v2420
  %v3076 = vmul.f32 %v3063, %v2421
  %v3077 = vmul.f32 %v3062, %v2422
  %v3078 = vmul.f32 %v3061, %v2423
  %v3079 = vmul.f32 %v3060, %v2424
  %v3080 = vmul.f32 %v3059, %v2425
  %v3081 = vmul.f32 %v3058, %v2426
  %v3082 = vrot.slane %v2956, 1
  %v3083 = vrot.slane %v2963, 1
  %v3084 = vrot.slane %v2970, 1
  %v3085 = vrot.slane %v2977, 1
  %v3086 = vrot.slane %v2984, 1
  %v3087 = vrot.slane %v2991, 1
  %v3088 = vrot.slane %v2998, 1
  %v3089 = vrot.slane %v3005, 1
  %v3090 = vrot.slane %v3012, 1
  %v3091 = vrot.slane %v3019, 1
  %v3092 = vrot.slane %v3026, 1
  %v3093 = vrot.slane %v3033, 1
  %v3094 = vsel %vm763, %v3092, %v3093
  %v3095 = vsel %vm763, %v3091, %v3092
  %v3096 = vsel %vm763, %v3090, %v3091
  %v3097 = vsel %vm763, %v3089, %v3090
  %v3098 = vsel %vm763, %v3088, %v3089
  %v3099 = vsel %vm763, %v3087, %v3088
  %v3100 = vsel %vm763, %v3086, %v3087
  %v3101 = vsel %vm763, %v3085, %v3086
  %v3102 = vsel %vm763, %v3084, %v3085
  %v3103 = vsel %vm763, %v3083, %v3084
  %v3104 = vsel %vm763, %v3082, %v3083
  %v3105 = vsel %vm763, %v3093, %v3082
  %v3106 = vmul.f32 %v3104, %v2451
  %v3107 = vmul.f32 %v3103, %v2452
  %v3108 = vmul.f32 %v3102, %v2453
  %v3109 = vmul.f32 %v3101, %v2454
  %v3110 = vmul.f32 %v3100, %v2455
  %v3111 = vmul.f32 %v3099, %v2456
  %v3112 = vmul.f32 %v3098, %v2457
  %v3113 = vmul.f32 %v3097, %v2458
  %v3114 = vmul.f32 %v3096, %v2459
  %v3115 = vmul.f32 %v3095, %v2460
  %v3116 = vmul.f32 %v3094, %v2461
  %v3117 = vmul.f32 %v3105, %v2462
  %3118 = vrot.lane.b32.xlu0 %v2956, 32
  %v3119 = vpop.permute.xlu0 %3118
  %3120 = vrot.lane.b32.xlu0 %v2963, 32
  %v3121 = vpop.permute.xlu0 %3120
  %3122 = vrot.lane.b32.xlu0 %v2970, 32
  %v3123 = vpop.permute.xlu0 %3122
  %3124 = vrot.lane.b32.xlu0 %v2977, 32
  %v3125 = vpop.permute.xlu0 %3124
  %3126 = vrot.lane.b32.xlu0 %v2984, 32
  %v3127 = vpop.permute.xlu0 %3126
  %3128 = vrot.lane.b32.xlu0 %v2991, 32
  %v3129 = vpop.permute.xlu0 %3128
  %3130 = vrot.lane.b32.xlu0 %v2998, 32
  %v3131 = vpop.permute.xlu0 %3130
  %3132 = vrot.lane.b32.xlu0 %v3005, 32
  %v3133 = vpop.permute.xlu0 %3132
  %3134 = vrot.lane.b32.xlu0 %v3012, 32
  %v3135 = vpop.permute.xlu0 %3134
  %3136 = vrot.lane.b32.xlu0 %v3019, 32
  %v3137 = vpop.permute.xlu0 %3136
  %3138 = vrot.lane.b32.xlu0 %v3026, 32
  %v3139 = vpop.permute.xlu0 %3138
  %3140 = vrot.lane.b32.xlu0 %v3033, 32
  %v3141 = vpop.permute.xlu0 %3140
  %3166 = vrot.lane.b32.xlu0 %v3106, 64
  %v3167 = vpop.permute.xlu0 %3166
  %3168 = vrot.lane.b32.xlu0 %v3107, 64
  %v3169 = vpop.permute.xlu0 %3168
  %3170 = vrot.lane.b32.xlu0 %v3108, 64
  %v3171 = vpop.permute.xlu0 %3170
  %3172 = vrot.lane.b32.xlu0 %v3109, 64
  %v3173 = vpop.permute.xlu0 %3172
  %3174 = vrot.lane.b32.xlu0 %v3110, 64
  %v3175 = vpop.permute.xlu0 %3174
  %3176 = vrot.lane.b32.xlu0 %v3111, 64
  %v3177 = vpop.permute.xlu0 %3176
  %3178 = vrot.lane.b32.xlu0 %v3112, 64
  %v3179 = vpop.permute.xlu0 %3178
  %3180 = vrot.lane.b32.xlu0 %v3113, 64
  %v3181 = vpop.permute.xlu0 %3180
  %3182 = vrot.lane.b32.xlu0 %v3114, 64
  %v3183 = vpop.permute.xlu0 %3182
  %3184 = vrot.lane.b32.xlu0 %v3115, 64
  %v3185 = vpop.permute.xlu0 %3184
  %3186 = vrot.lane.b32.xlu0 %v3116, 64
  %v3187 = vpop.permute.xlu0 %3186
  %3188 = vrot.lane.b32.xlu0 %v3117, 64
  %v3189 = vpop.permute.xlu0 %3188
  %vm3202 = vcmask 261120
  %v3203 = vsel %vm3202, %v3070, %v3119
  %v3204 = vsel %vm3202, %v3071, %v3121
  %v3205 = vsel %vm3202, %v3072, %v3123
  %v3206 = vsel %vm3202, %v3073, %v3125
  %v3207 = vsel %vm3202, %v3074, %v3127
  %v3208 = vsel %vm3202, %v3075, %v3129
  %v3209 = vsel %vm3202, %v3076, %v3131
  %v3210 = vsel %vm3202, %v3077, %v3133
  %v3211 = vsel %vm3202, %v3078, %v3135
  %v3212 = vsel %vm3202, %v3079, %v3137
  %v3213 = vsel %vm3202, %v3080, %v3139
  %v3214 = vsel %vm3202, %v3081, %v3141
  %vm3215 = vcmask 523264
  %v3216 = vsel %vm3215, %v3203, %v3167
  %v3217 = vsel %vm3215, %v3204, %v3169
  %v3218 = vsel %vm3215, %v3205, %v3171
  %v3219 = vsel %vm3215, %v3206, %v3173
  %v3220 = vsel %vm3215, %v3207, %v3175
  %v3221 = vsel %vm3215, %v3208, %v3177
  %v3222 = vsel %vm3215, %v3209, %v3179
  %v3223 = vsel %vm3215, %v3210, %v3181
  %v3224 = vsel %vm3215, %v3211, %v3183
  %v3225 = vsel %vm3215, %v3212, %v3185
  %v3226 = vsel %vm3215, %v3213, %v3187
  %v3227 = vsel %vm3215, %v3214, %v3189
  %v3228 = vpack.c.bf16 %v3217, %v3216
  %v3229 = vpack.c.bf16 %v3219, %v3218
  %v3230 = vpack.c.bf16 %v3221, %v3220
  %v3231 = vpack.c.bf16 %v3223, %v3222
  %v3232 = vpack.c.bf16 %v3225, %v3224
  %v3233 = vpack.c.bf16 %v3227, %v3226
  %v3235 = vlaneseq
  %v3236 = vshrl.u32 %v3235, 7
  %v3237 = vsub.s32 0, %v3236
  %v3238 = vrot.slane %v2198, %v3237
  %v3252 = vunpack.c.l.b16 %v2186
  %v3253 = vunpack.c.l.b16 %v2187
  %v3254 = vunpack.c.l.b16 %v2188
  %v3255 = vunpack.c.l.b16 %v2189
  %v3256 = vunpack.c.l.b16 %v2190
  %v3257 = vunpack.c.l.b16 %v2191
  %v3258 = vunpack.c.l.b16 %v2192
  %v3259 = vunpack.c.l.b16 %v2193
  %v3260 = vunpack.c.l.b16 %v2194
  %v3261 = vunpack.c.l.b16 %v2195
  %v3262 = vunpack.c.l.b16 %v2196
  %v3263 = vunpack.c.l.b16 %v2197
  %v3264 = vpack.c.b16 %v3253, %v3252
  %v3265 = vpack.c.b16 %v3255, %v3254
  %v3266 = vpack.c.b16 %v3257, %v3256
  %v3267 = vpack.c.b16 %v3259, %v3258
  %v3268 = vpack.c.b16 %v3261, %v3260
  %v3269 = vpack.c.b16 %v3263, %v3262
  %vm3276 = vcmask 785408
  %v3278 = vsel %vm3276, %v3228, 0
  %v3281 = vsel %vm3276, %v3229, 0
  %v3284 = vsel %vm3276, %v3230, 0
  %v3287 = vsel %vm3276, %v3231, 0
  %v3290 = vsel %vm3276, %v3232, 0
  %v3293 = vsel %vm3276, %v3233, 0
  %3295 = vmatprep.subr.bf16.mxu0 0
  %3296 = vmatpush1.bf16.msra.mxu0 0
  %3297 = vmatprep.subr.bf16.mxu0 0
  %3298 = vmatpush1.bf16.msra.mxu0 0
  %3299 = vmatprep.subr.bf16.mxu0 0
  %3300 = vmatpush1.bf16.msra.mxu0 %v3269
  %3301 = vmatprep.subr.bf16.mxu0 0
  %3302 = vmatpush1.bf16.msra.mxu0 %v3268
  %3303 = vmatprep.subr.bf16.mxu0 0
  %3304 = vmatpush1.bf16.msra.mxu0 %v3267
  %3305 = vmatprep.subr.bf16.mxu0 0
  %3306 = vmatpush1.bf16.msra.mxu0 %v3266
  %3307 = vmatprep.subr.bf16.mxu0 0
  %3308 = vmatpush1.bf16.msra.mxu0 %v3265
  %3309 = vmatprep.subr.bf16.mxu0 0
  %3310 = vmatpush1.bf16.msra.mxu0 %v3264
  %3311 = vmatprep.subr.bf16.mxu0 0
  %3312 = vmatpush2.bf16.msra.mxu0 0
  %3313 = vmatprep.subr.bf16.mxu0 0
  %3314 = vmatpush2.bf16.msra.mxu0 0
  %3315 = vmatprep.subr.bf16.mxu0 0
  %3316 = vmatpush2.bf16.msra.mxu0 0
  %3317 = vmatprep.subr.bf16.mxu0 0
  %3318 = vmatpush2.bf16.msra.mxu0 0
  %3319 = vmatprep.subr.bf16.mxu0 0
  %3320 = vmatpush2.bf16.msra.mxu0 0
  %3321 = vmatprep.subr.bf16.mxu0 0
  %3322 = vmatpush2.bf16.msra.mxu0 0
  %3323 = vmatprep.subr.bf16.mxu0 0
  %3324 = vmatpush2.bf16.msra.mxu0 0
  %3325 = vmatprep.subr.bf16.mxu0 0
  %3326 = vmatpush2.bf16.msra.mxu0 0
  %3327 = vmatprep.mubr.bf16.mxu0 0
  %3328 = vmatmul.mubr.bf16.gmra.mxu0 %v3278
  %v3329 = vpop.f32.mrf.mxu0
  %v3330 = vadd.f32 %v3238, %v3329
  %v3331 = vpop.f32.mrf.mxu0
  %v3332 = vpop.f32.mrf.mxu0
  %v3333 = vadd.f32 %v3238, %v3332
  %v3334 = vpop.f32.mrf.mxu0
  %3335 = vmatprep.mubr.bf16.mxu0 0
  %3336 = vmatmul.mubr.bf16.gmra.mxu0 %v3281
  %v3337 = vpop.f32.mrf.mxu0
  %v3338 = vadd.f32 %v3238, %v3337
  %v3339 = vpop.f32.mrf.mxu0
  %v3340 = vpop.f32.mrf.mxu0
  %v3341 = vadd.f32 %v3238, %v3340
  %v3342 = vpop.f32.mrf.mxu0
  %3343 = vmatprep.mubr.bf16.mxu0 0
  %3344 = vmatmul.mubr.bf16.gmra.mxu0 %v3284
  %v3345 = vpop.f32.mrf.mxu0
  %v3346 = vadd.f32 %v3238, %v3345
  %v3347 = vpop.f32.mrf.mxu0
  %v3348 = vpop.f32.mrf.mxu0
  %v3349 = vadd.f32 %v3238, %v3348
  %v3350 = vpop.f32.mrf.mxu0
  %3351 = vmatprep.mubr.bf16.mxu0 0
  %3352 = vmatmul.mubr.bf16.gmra.mxu0 %v3287
  %v3353 = vpop.f32.mrf.mxu0
  %v3354 = vadd.f32 %v3238, %v3353
  %v3355 = vpop.f32.mrf.mxu0
  %v3356 = vpop.f32.mrf.mxu0
  %v3357 = vadd.f32 %v3238, %v3356
  %v3358 = vpop.f32.mrf.mxu0
  %3359 = vmatprep.mubr.bf16.mxu0 0
  %3360 = vmatmul.mubr.bf16.gmra.mxu0 %v3290
  %v3361 = vpop.f32.mrf.mxu0
  %v3362 = vadd.f32 %v3238, %v3361
  %v3363 = vpop.f32.mrf.mxu0
  %v3364 = vpop.f32.mrf.mxu0
  %v3365 = vadd.f32 %v3238, %v3364
  %v3366 = vpop.f32.mrf.mxu0
  %3367 = vmatprep.mubr.bf16.mxu0 0
  %3368 = vmatmul.mubr.bf16.gmra.mxu0 %v3293
  %v3369 = vpop.f32.mrf.mxu0
  %v3370 = vadd.f32 %v3238, %v3369
  %v3371 = vpop.f32.mrf.mxu0
  %v3372 = vpop.f32.mrf.mxu0
  %v3373 = vadd.f32 %v3238, %v3372
  %v3374 = vpop.f32.mrf.mxu0
  %3375 = vdwg.mxu0
  %v3376 = vmax.f32 %v3330, 0.0
  %v3377 = vmax.f32 %v3333, 0.0
  %v3378 = vmax.f32 %v3338, 0.0
  %v3379 = vmax.f32 %v3341, 0.0
  %v3380 = vmax.f32 %v3346, 0.0
  %v3381 = vmax.f32 %v3349, 0.0
  %v3382 = vmax.f32 %v3354, 0.0
  %v3383 = vmax.f32 %v3357, 0.0
  %v3384 = vmax.f32 %v3362, 0.0
  %v3385 = vmax.f32 %v3365, 0.0
  %v3386 = vmax.f32 %v3370, 0.0
  %v3387 = vmax.f32 %v3373, 0.0
  %v3400 = vcombine.high %v3376, %v3376
  %v3402 = vunpack.c.l.s4 1983009808
  %v3403 = vunpack.c.0.s8 %v3402
  %v3404 = vlaneseq
  %v3405 = vshrl.u32 %v3404, 7
  %v3406 = vsub.s32 %v3403, %v3405
  %v3407 = vrot.slane %v3376, %v3406
  %v3409 = vunpack.c.l.s4 1983009808
  %v3410 = vunpack.c.0.s8 %v3409
  %v3411 = vlaneseq
  %v3412 = vshrl.u32 %v3411, 7
  %v3413 = vsub.s32 %v3410, %v3412
  %v3414 = vrot.slane %v3400, %v3413
  %v3415 = vcombine.high %v3407, %v3407
  %v3416 = vcombine.high %v3414, %v3414
  %v3417 = vcombine.high %v3377, %v3377
  %v3419 = vunpack.c.l.s4 1983009808
  %v3420 = vunpack.c.0.s8 %v3419
  %v3421 = vlaneseq
  %v3422 = vshrl.u32 %v3421, 7
  %v3423 = vsub.s32 %v3420, %v3422
  %v3424 = vrot.slane %v3377, %v3423
  %v3426 = vunpack.c.l.s4 1983009808
  %v3427 = vunpack.c.0.s8 %v3426
  %v3428 = vlaneseq
  %v3429 = vshrl.u32 %v3428, 7
  %v3430 = vsub.s32 %v3427, %v3429
  %v3431 = vrot.slane %v3417, %v3430
  %v3432 = vcombine.high %v3424, %v3424
  %v3433 = vcombine.high %v3431, %v3431
  %v3434 = vcombine.high %v3378, %v3378
  %v3436 = vunpack.c.l.s4 1983009808
  %v3437 = vunpack.c.0.s8 %v3436
  %v3438 = vlaneseq
  %v3439 = vshrl.u32 %v3438, 7
  %v3440 = vsub.s32 %v3437, %v3439
  %v3441 = vrot.slane %v3378, %v3440
  %v3443 = vunpack.c.l.s4 1983009808
  %v3444 = vunpack.c.0.s8 %v3443
  %v3445 = vlaneseq
  %v3446 = vshrl.u32 %v3445, 7
  %v3447 = vsub.s32 %v3444, %v3446
  %v3448 = vrot.slane %v3434, %v3447
  %v3449 = vcombine.high %v3441, %v3441
  %v3450 = vcombine.high %v3448, %v3448
  %v3451 = vcombine.high %v3379, %v3379
  %v3453 = vunpack.c.l.s4 1983009808
  %v3454 = vunpack.c.0.s8 %v3453
  %v3455 = vlaneseq
  %v3456 = vshrl.u32 %v3455, 7
  %v3457 = vsub.s32 %v3454, %v3456
  %v3458 = vrot.slane %v3379, %v3457
  %v3460 = vunpack.c.l.s4 1983009808
  %v3461 = vunpack.c.0.s8 %v3460
  %v3462 = vlaneseq
  %v3463 = vshrl.u32 %v3462, 7
  %v3464 = vsub.s32 %v3461, %v3463
  %v3465 = vrot.slane %v3451, %v3464
  %v3466 = vcombine.high %v3458, %v3458
  %v3467 = vcombine.high %v3465, %v3465
  %v3468 = vcombine.high %v3380, %v3380
  %v3470 = vunpack.c.l.s4 1983009808
  %v3471 = vunpack.c.0.s8 %v3470
  %v3472 = vlaneseq
  %v3473 = vshrl.u32 %v3472, 7
  %v3474 = vsub.s32 %v3471, %v3473
  %v3475 = vrot.slane %v3380, %v3474
  %v3477 = vunpack.c.l.s4 1983009808
  %v3478 = vunpack.c.0.s8 %v3477
  %v3479 = vlaneseq
  %v3480 = vshrl.u32 %v3479, 7
  %v3481 = vsub.s32 %v3478, %v3480
  %v3482 = vrot.slane %v3468, %v3481
  %v3483 = vcombine.high %v3475, %v3475
  %v3484 = vcombine.high %v3482, %v3482
  %v3485 = vcombine.high %v3381, %v3381
  %v3487 = vunpack.c.l.s4 1983009808
  %v3488 = vunpack.c.0.s8 %v3487
  %v3489 = vlaneseq
  %v3490 = vshrl.u32 %v3489, 7
  %v3491 = vsub.s32 %v3488, %v3490
  %v3492 = vrot.slane %v3381, %v3491
  %v3494 = vunpack.c.l.s4 1983009808
  %v3495 = vunpack.c.0.s8 %v3494
  %v3496 = vlaneseq
  %v3497 = vshrl.u32 %v3496, 7
  %v3498 = vsub.s32 %v3495, %v3497
  %v3499 = vrot.slane %v3485, %v3498
  %v3500 = vcombine.high %v3492, %v3492
  %v3501 = vcombine.high %v3499, %v3499
  %v3502 = vcombine.high %v3382, %v3382
  %v3504 = vunpack.c.l.s4 1983009808
  %v3505 = vunpack.c.0.s8 %v3504
  %v3506 = vlaneseq
  %v3507 = vshrl.u32 %v3506, 7
  %v3508 = vsub.s32 %v3505, %v3507
  %v3509 = vrot.slane %v3382, %v3508
  %v3511 = vunpack.c.l.s4 1983009808
  %v3512 = vunpack.c.0.s8 %v3511
  %v3513 = vlaneseq
  %v3514 = vshrl.u32 %v3513, 7
  %v3515 = vsub.s32 %v3512, %v3514
  %v3516 = vrot.slane %v3502, %v3515
  %v3517 = vcombine.high %v3509, %v3509
  %v3518 = vcombine.high %v3516, %v3516
  %v3519 = vcombine.high %v3383, %v3383
  %v3521 = vunpack.c.l.s4 1983009808
  %v3522 = vunpack.c.0.s8 %v3521
  %v3523 = vlaneseq
  %v3524 = vshrl.u32 %v3523, 7
  %v3525 = vsub.s32 %v3522, %v3524
  %v3526 = vrot.slane %v3383, %v3525
  %v3528 = vunpack.c.l.s4 1983009808
  %v3529 = vunpack.c.0.s8 %v3528
  %v3530 = vlaneseq
  %v3531 = vshrl.u32 %v3530, 7
  %v3532 = vsub.s32 %v3529, %v3531
  %v3533 = vrot.slane %v3519, %v3532
  %v3534 = vcombine.high %v3526, %v3526
  %v3535 = vcombine.high %v3533, %v3533
  %v3536 = vcombine.high %v3384, %v3384
  %v3538 = vunpack.c.l.s4 1983009808
  %v3539 = vunpack.c.0.s8 %v3538
  %v3540 = vlaneseq
  %v3541 = vshrl.u32 %v3540, 7
  %v3542 = vsub.s32 %v3539, %v3541
  %v3543 = vrot.slane %v3384, %v3542
  %v3545 = vunpack.c.l.s4 1983009808
  %v3546 = vunpack.c.0.s8 %v3545
  %v3547 = vlaneseq
  %v3548 = vshrl.u32 %v3547, 7
  %v3549 = vsub.s32 %v3546, %v3548
  %v3550 = vrot.slane %v3536, %v3549
  %v3551 = vcombine.high %v3543, %v3543
  %v3552 = vcombine.high %v3550, %v3550
  %v3553 = vcombine.high %v3385, %v3385
  %v3555 = vunpack.c.l.s4 1983009808
  %v3556 = vunpack.c.0.s8 %v3555
  %v3557 = vlaneseq
  %v3558 = vshrl.u32 %v3557, 7
  %v3559 = vsub.s32 %v3556, %v3558
  %v3560 = vrot.slane %v3385, %v3559
  %v3562 = vunpack.c.l.s4 1983009808
  %v3563 = vunpack.c.0.s8 %v3562
  %v3564 = vlaneseq
  %v3565 = vshrl.u32 %v3564, 7
  %v3566 = vsub.s32 %v3563, %v3565
  %v3567 = vrot.slane %v3553, %v3566
  %v3568 = vcombine.high %v3560, %v3560
  %v3569 = vcombine.high %v3567, %v3567
  %v3570 = vcombine.high %v3386, %v3386
  %v3572 = vunpack.c.l.s4 1983009808
  %v3573 = vunpack.c.0.s8 %v3572
  %v3574 = vlaneseq
  %v3575 = vshrl.u32 %v3574, 7
  %v3576 = vsub.s32 %v3573, %v3575
  %v3577 = vrot.slane %v3386, %v3576
  %v3579 = vunpack.c.l.s4 1983009808
  %v3580 = vunpack.c.0.s8 %v3579
  %v3581 = vlaneseq
  %v3582 = vshrl.u32 %v3581, 7
  %v3583 = vsub.s32 %v3580, %v3582
  %v3584 = vrot.slane %v3570, %v3583
  %v3585 = vcombine.high %v3577, %v3577
  %v3586 = vcombine.high %v3584, %v3584
  %v3587 = vcombine.high %v3387, %v3387
  %v3589 = vunpack.c.l.s4 1983009808
  %v3590 = vunpack.c.0.s8 %v3589
  %v3591 = vlaneseq
  %v3592 = vshrl.u32 %v3591, 7
  %v3593 = vsub.s32 %v3590, %v3592
  %v3594 = vrot.slane %v3387, %v3593
  %v3596 = vunpack.c.l.s4 1983009808
  %v3597 = vunpack.c.0.s8 %v3596
  %v3598 = vlaneseq
  %v3599 = vshrl.u32 %v3598, 7
  %v3600 = vsub.s32 %v3597, %v3599
  %v3601 = vrot.slane %v3587, %v3600
  %v3602 = vcombine.high %v3594, %v3594
  %v3603 = vcombine.high %v3601, %v3601
  %v3652 = vrot.slane %v3407, 7
  %v3653 = vrot.slane %v3652, 2
  %v3654 = vrot.slane %v3415, 7
  %v3655 = vrot.slane %v3654, 2
  %v3656 = vrot.slane %v3414, 7
  %v3657 = vrot.slane %v3656, 2
  %v3658 = vrot.slane %v3416, 7
  %v3659 = vrot.slane %v3658, 2
  %v3660 = vrot.slane %v3424, 7
  %v3661 = vrot.slane %v3660, 2
  %v3662 = vrot.slane %v3432, 7
  %v3663 = vrot.slane %v3662, 2
  %v3664 = vrot.slane %v3431, 7
  %v3665 = vrot.slane %v3664, 2
  %v3666 = vrot.slane %v3433, 7
  %v3667 = vrot.slane %v3666, 2
  %v3668 = vrot.slane %v3441, 7
  %v3669 = vrot.slane %v3668, 2
  %v3670 = vrot.slane %v3449, 7
  %v3671 = vrot.slane %v3670, 2
  %v3672 = vrot.slane %v3448, 7
  %v3673 = vrot.slane %v3672, 2
  %v3674 = vrot.slane %v3450, 7
  %v3675 = vrot.slane %v3674, 2
  %v3676 = vrot.slane %v3458, 7
  %v3677 = vrot.slane %v3676, 2
  %v3678 = vrot.slane %v3466, 7
  %v3679 = vrot.slane %v3678, 2
  %v3680 = vrot.slane %v3465, 7
  %v3681 = vrot.slane %v3680, 2
  %v3682 = vrot.slane %v3467, 7
  %v3683 = vrot.slane %v3682, 2
  %v3684 = vrot.slane %v3475, 7
  %v3685 = vrot.slane %v3684, 2
  %v3686 = vrot.slane %v3483, 7
  %v3687 = vrot.slane %v3686, 2
  %v3688 = vrot.slane %v3482, 7
  %v3689 = vrot.slane %v3688, 2
  %v3690 = vrot.slane %v3484, 7
  %v3691 = vrot.slane %v3690, 2
  %v3692 = vrot.slane %v3492, 7
  %v3693 = vrot.slane %v3692, 2
  %v3694 = vrot.slane %v3500, 7
  %v3695 = vrot.slane %v3694, 2
  %v3696 = vrot.slane %v3499, 7
  %v3697 = vrot.slane %v3696, 2
  %v3698 = vrot.slane %v3501, 7
  %v3699 = vrot.slane %v3698, 2
  %v3700 = vrot.slane %v3509, 7
  %v3701 = vrot.slane %v3700, 2
  %v3702 = vrot.slane %v3517, 7
  %v3703 = vrot.slane %v3702, 2
  %v3704 = vrot.slane %v3516, 7
  %v3705 = vrot.slane %v3704, 2
  %v3706 = vrot.slane %v3518, 7
  %v3707 = vrot.slane %v3706, 2
  %v3708 = vrot.slane %v3526, 7
  %v3709 = vrot.slane %v3708, 2
  %v3710 = vrot.slane %v3534, 7
  %v3711 = vrot.slane %v3710, 2
  %v3712 = vrot.slane %v3533, 7
  %v3713 = vrot.slane %v3712, 2
  %v3714 = vrot.slane %v3535, 7
  %v3715 = vrot.slane %v3714, 2
  %v3716 = vrot.slane %v3543, 7
  %v3717 = vrot.slane %v3716, 2
  %v3718 = vrot.slane %v3551, 7
  %v3719 = vrot.slane %v3718, 2
  %v3720 = vrot.slane %v3550, 7
  %v3721 = vrot.slane %v3720, 2
  %v3722 = vrot.slane %v3552, 7
  %v3723 = vrot.slane %v3722, 2
  %v3724 = vrot.slane %v3560, 7
  %v3725 = vrot.slane %v3724, 2
  %v3726 = vrot.slane %v3568, 7
  %v3727 = vrot.slane %v3726, 2
  %v3728 = vrot.slane %v3567, 7
  %v3729 = vrot.slane %v3728, 2
  %v3730 = vrot.slane %v3569, 7
  %v3731 = vrot.slane %v3730, 2
  %v3732 = vrot.slane %v3577, 7
  %v3733 = vrot.slane %v3732, 2
  %v3734 = vrot.slane %v3585, 7
  %v3735 = vrot.slane %v3734, 2
  %v3736 = vrot.slane %v3584, 7
  %v3737 = vrot.slane %v3736, 2
  %v3738 = vrot.slane %v3586, 7
  %v3739 = vrot.slane %v3738, 2
  %v3740 = vrot.slane %v3594, 7
  %v3741 = vrot.slane %v3740, 2
  %v3742 = vrot.slane %v3602, 7
  %v3743 = vrot.slane %v3742, 2
  %v3744 = vrot.slane %v3601, 7
  %v3745 = vrot.slane %v3744, 2
  %v3746 = vrot.slane %v3603, 7
  %v3747 = vrot.slane %v3746, 2
  %v3796 = vadd.f32 %v3407, %v3653
  %v3797 = vadd.f32 %v3415, %v3655
  %v3798 = vadd.f32 %v3414, %v3657
  %v3799 = vadd.f32 %v3416, %v3659
  %v3800 = vadd.f32 %v3424, %v3661
  %v3801 = vadd.f32 %v3432, %v3663
  %v3802 = vadd.f32 %v3431, %v3665
  %v3803 = vadd.f32 %v3433, %v3667
  %v3804 = vadd.f32 %v3441, %v3669
  %v3805 = vadd.f32 %v3449, %v3671
  %v3806 = vadd.f32 %v3448, %v3673
  %v3807 = vadd.f32 %v3450, %v3675
  %v3808 = vadd.f32 %v3458, %v3677
  %v3809 = vadd.f32 %v3466, %v3679
  %v3810 = vadd.f32 %v3465, %v3681
  %v3811 = vadd.f32 %v3467, %v3683
  %v3812 = vadd.f32 %v3475, %v3685
  %v3813 = vadd.f32 %v3483, %v3687
  %v3814 = vadd.f32 %v3482, %v3689
  %v3815 = vadd.f32 %v3484, %v3691
  %v3816 = vadd.f32 %v3492, %v3693
  %v3817 = vadd.f32 %v3500, %v3695
  %v3818 = vadd.f32 %v3499, %v3697
  %v3819 = vadd.f32 %v3501, %v3699
  %v3820 = vadd.f32 %v3509, %v3701
  %v3821 = vadd.f32 %v3517, %v3703
  %v3822 = vadd.f32 %v3516, %v3705
  %v3823 = vadd.f32 %v3518, %v3707
  %v3824 = vadd.f32 %v3526, %v3709
  %v3825 = vadd.f32 %v3534, %v3711
  %v3826 = vadd.f32 %v3533, %v3713
  %v3827 = vadd.f32 %v3535, %v3715
  %v3828 = vadd.f32 %v3543, %v3717
  %v3829 = vadd.f32 %v3551, %v3719
  %v3830 = vadd.f32 %v3550, %v3721
  %v3831 = vadd.f32 %v3552, %v3723
  %v3832 = vadd.f32 %v3560, %v3725
  %v3833 = vadd.f32 %v3568, %v3727
  %v3834 = vadd.f32 %v3567, %v3729
  %v3835 = vadd.f32 %v3569, %v3731
  %v3836 = vadd.f32 %v3577, %v3733
  %v3837 = vadd.f32 %v3585, %v3735
  %v3838 = vadd.f32 %v3584, %v3737
  %v3839 = vadd.f32 %v3586, %v3739
  %v3840 = vadd.f32 %v3594, %v3741
  %v3841 = vadd.f32 %v3602, %v3743
  %v3842 = vadd.f32 %v3601, %v3745
  %v3843 = vadd.f32 %v3603, %v3747
  %v3844 = vld [vmem:[%s6] sm:$0xf]
  %v3845 = vld [vmem:[%s6 + $0x4] sm:$0xf]
  %v3846 = vld [vmem:[%s6 + $0x8] sm:$0xf]
  %v3847 = vld [vmem:[%s6 + $0xc] sm:$0xf]
  %v3848 = vld [vmem:[%s6 + $0x10] sm:$0xf]
  %v3849 = vld [vmem:[%s6 + $0x14] sm:$0xf]
  %v3850 = vld [vmem:[%s6 + $0x18] sm:$0xf]
  %v3851 = vld [vmem:[%s6 + $0x1c] sm:$0xf]
  %v3852 = vld [vmem:[%s6 + $0x20] sm:$0xf]
  %v3853 = vld [vmem:[%s6 + $0x24] sm:$0xf]
  %v3854 = vld [vmem:[%s6 + $0x28] sm:$0xf]
  %v3855 = vld [vmem:[%s6 + $0x2c] sm:$0xf]
  %v3856 = vld [vmem:[%s6 + $0x30] sm:$0xf]
  %v3857 = vld [vmem:[%s6 + $0x34] sm:$0xf]
  %v3858 = vld [vmem:[%s6 + $0x38] sm:$0xf]
  %v3859 = vld [vmem:[%s6 + $0x3c] sm:$0xf]
  %v3860 = vld [vmem:[%s6 + $0x40] sm:$0xf]
  %v3861 = vld [vmem:[%s6 + $0x44] sm:$0xf]
  %v3862 = vld [vmem:[%s6 + $0x48] sm:$0xf]
  %v3863 = vld [vmem:[%s6 + $0x4c] sm:$0xf]
  %v3864 = vld [vmem:[%s6 + $0x50] sm:$0xf]
  %v3865 = vld [vmem:[%s6 + $0x54] sm:$0xf]
  %v3866 = vld [vmem:[%s6 + $0x58] sm:$0xf]
  %v3867 = vld [vmem:[%s6 + $0x5c] sm:$0xf]
  %v3868 = vld [vmem:[%s7] sm:$0x1]
  %vm3869 = vcmp.lt.s32.totalorder %v114, 0
  %v3870 = vsub.s32 0, %v114
  %v3871 = vsel %vm3869, %v3870, %v114
  %v3872 = vmul.u32.u64.compose %v3871, 2863311531
  %v3873 = vextract.low.u32 %v3872
  %v3874 = vextract.high.u32 %v3872
  %v3875 = vshrl.u32 %v3874, 4
  %v3876 = vmul.u32 %v3875, 24
  %v3877 = vsub.s32 %v3871, %v3876
  %v3878 = vsub.s32 0, %v3877
  %v3879 = vsel %vm3869, %v3878, %v3877
  %vm3880 = vcmp.lt.s32.totalorder %v115, 0
  %v3881 = vsub.s32 0, %v115
  %v3882 = vsel %vm3880, %v3881, %v115
  %v3883 = vmul.u32.u64.compose %v3882, 2863311531
  %v3884 = vextract.low.u32 %v3883
  %v3885 = vextract.high.u32 %v3883
  %v3886 = vshrl.u32 %v3885, 4
  %v3887 = vmul.u32 %v3886, 24
  %v3888 = vsub.s32 %v3882, %v3887
  %v3889 = vsub.s32 0, %v3888
  %v3890 = vsel %vm3880, %v3889, %v3888
  %vm3891 = vcmp.lt.s32.totalorder %v116, 0
  %v3892 = vsub.s32 0, %v116
  %v3893 = vsel %vm3891, %v3892, %v116
  %v3894 = vmul.u32.u64.compose %v3893, 2863311531
  %v3895 = vextract.low.u32 %v3894
  %v3896 = vextract.high.u32 %v3894
  %v3897 = vshrl.u32 %v3896, 4
  %v3898 = vmul.u32 %v3897, 24
  %v3899 = vsub.s32 %v3893, %v3898
  %v3900 = vsub.s32 0, %v3899
  %v3901 = vsel %vm3891, %v3900, %v3899
  %vm3902 = vcmp.lt.s32.totalorder %v117, 0
  %v3903 = vsub.s32 0, %v117
  %v3904 = vsel %vm3902, %v3903, %v117
  %v3905 = vmul.u32.u64.compose %v3904, 2863311531
  %v3906 = vextract.low.u32 %v3905
  %v3907 = vextract.high.u32 %v3905
  %v3908 = vshrl.u32 %v3907, 4
  %v3909 = vmul.u32 %v3908, 24
  %v3910 = vsub.s32 %v3904, %v3909
  %v3911 = vsub.s32 0, %v3910
  %v3912 = vsel %vm3902, %v3911, %v3910
  %vm3913 = vcmp.lt.s32.totalorder %v118, 0
  %v3914 = vsub.s32 0, %v118
  %v3915 = vsel %vm3913, %v3914, %v118
  %v3916 = vmul.u32.u64.compose %v3915, 2863311531
  %v3917 = vextract.low.u32 %v3916
  %v3918 = vextract.high.u32 %v3916
  %v3919 = vshrl.u32 %v3918, 4
  %v3920 = vmul.u32 %v3919, 24
  %v3921 = vsub.s32 %v3915, %v3920
  %v3922 = vsub.s32 0, %v3921
  %v3923 = vsel %vm3913, %v3922, %v3921
  %vm3924 = vcmp.lt.s32.totalorder %v119, 0
  %v3925 = vsub.s32 0, %v119
  %v3926 = vsel %vm3924, %v3925, %v119
  %v3927 = vmul.u32.u64.compose %v3926, 2863311531
  %v3928 = vextract.low.u32 %v3927
  %v3929 = vextract.high.u32 %v3927
  %v3930 = vshrl.u32 %v3929, 4
  %v3931 = vmul.u32 %v3930, 24
  %v3932 = vsub.s32 %v3926, %v3931
  %v3933 = vsub.s32 0, %v3932
  %v3934 = vsel %vm3924, %v3933, %v3932
  %vm3935 = vcmp.ne.s32.totalorder %v3879, 0
  %vm3936 = vcmp.ne.s32.totalorder %v3890, 0
  %vm3937 = vcmp.ne.s32.totalorder %v3901, 0
  %vm3938 = vcmp.ne.s32.totalorder %v3912, 0
  %vm3939 = vcmp.ne.s32.totalorder %v3923, 0
  %vm3940 = vcmp.ne.s32.totalorder %v3934, 0
  %vm3941 = vcmp.lt.s32.totalorder %v3879, 0
  %vm3942 = vcmp.lt.s32.totalorder %v3890, 0
  %vm3943 = vcmp.lt.s32.totalorder %v3901, 0
  %vm3944 = vcmp.lt.s32.totalorder %v3912, 0
  %vm3945 = vcmp.lt.s32.totalorder %v3923, 0
  %vm3946 = vcmp.lt.s32.totalorder %v3934, 0
  %vm3947 = vmand %vm3941, %vm3935
  %vm3948 = vmand %vm3942, %vm3936
  %vm3949 = vmand %vm3943, %vm3937
  %vm3950 = vmand %vm3944, %vm3938
  %vm3951 = vmand %vm3945, %vm3939
  %vm3952 = vmand %vm3946, %vm3940
  %v3953 = vadd.s32 %v3879, 24
  %v3954 = vadd.s32 %v3890, 24
  %v3955 = vadd.s32 %v3901, 24
  %v3956 = vadd.s32 %v3912, 24
  %v3957 = vadd.s32 %v3923, 24
  %v3958 = vadd.s32 %v3934, 24
  %v3959 = vsel %vm3947, %v3953, %v3879
  %v3960 = vsel %vm3948, %v3954, %v3890
  %v3961 = vsel %vm3949, %v3955, %v3901
  %v3962 = vsel %vm3950, %v3956, %v3912
  %v3963 = vsel %vm3951, %v3957, %v3923
  %v3964 = vsel %vm3952, %v3958, %v3934
  %vm3965 = vcmp.ne.s32.totalorder %v3959, 0
  %vm3966 = vcmp.ne.s32.totalorder %v3960, 0
  %vm3967 = vcmp.ne.s32.totalorder %v3961, 0
  %vm3968 = vcmp.ne.s32.totalorder %v3962, 0
  %vm3969 = vcmp.ne.s32.totalorder %v3963, 0
  %vm3970 = vcmp.ne.s32.totalorder %v3964, 0
  %v3971 = vsel %vm3965, 1, 0
  %v3972 = vsel %vm3966, 1, 0
  %v3973 = vsel %vm3967, 1, 0
  %v3974 = vsel %vm3968, 1, 0
  %v3975 = vsel %vm3969, 1, 0
  %v3976 = vsel %vm3970, 1, 0
  %v3977 = vcvt.s32.f32 %v3971
  %v3978 = vcvt.s32.f32 %v3972
  %v3979 = vcvt.s32.f32 %v3973
  %v3980 = vcvt.s32.f32 %v3974
  %v3981 = vcvt.s32.f32 %v3975
  %v3982 = vcvt.s32.f32 %v3976
  %vm3983 = vcmp.ne.s32.totalorder %v3959, 23
  %vm3984 = vcmp.ne.s32.totalorder %v3960, 23
  %vm3985 = vcmp.ne.s32.totalorder %v3961, 23
  %vm3986 = vcmp.ne.s32.totalorder %v3962, 23
  %vm3987 = vcmp.ne.s32.totalorder %v3963, 23
  %vm3988 = vcmp.ne.s32.totalorder %v3964, 23
  %v3989 = vsel %vm3983, 1, 0
  %v3990 = vsel %vm3984, 1, 0
  %v3991 = vsel %vm3985, 1, 0
  %v3992 = vsel %vm3986, 1, 0
  %v3993 = vsel %vm3987, 1, 0
  %v3994 = vsel %vm3988, 1, 0
  %v3995 = vcvt.s32.f32 %v3989
  %v3996 = vcvt.s32.f32 %v3990
  %v3997 = vcvt.s32.f32 %v3991
  %v3998 = vcvt.s32.f32 %v3992
  %v3999 = vcvt.s32.f32 %v3993
  %v4000 = vcvt.s32.f32 %v3994
  %v4049 = vlaneseq
  %v4050 = vshrl.u32 %v4049, 7
  %v4051 = vsub.s32 0, %v4050
  %v4052 = vrot.slane %v3796, %v4051
  %v4053 = vlaneseq
  %v4054 = vshrl.u32 %v4053, 7
  %v4055 = vsub.s32 0, %v4054
  %v4056 = vrot.slane %v3797, %v4055
  %v4057 = vlaneseq
  %v4058 = vshrl.u32 %v4057, 7
  %v4059 = vsub.s32 0, %v4058
  %v4060 = vrot.slane %v3798, %v4059
  %v4061 = vlaneseq
  %v4062 = vshrl.u32 %v4061, 7
  %v4063 = vsub.s32 0, %v4062
  %v4064 = vrot.slane %v3799, %v4063
  %v4065 = vlaneseq
  %v4066 = vshrl.u32 %v4065, 7
  %v4067 = vsub.s32 0, %v4066
  %v4068 = vrot.slane %v3800, %v4067
  %v4069 = vlaneseq
  %v4070 = vshrl.u32 %v4069, 7
  %v4071 = vsub.s32 0, %v4070
  %v4072 = vrot.slane %v3801, %v4071
  %v4073 = vlaneseq
  %v4074 = vshrl.u32 %v4073, 7
  %v4075 = vsub.s32 0, %v4074
  %v4076 = vrot.slane %v3802, %v4075
  %v4077 = vlaneseq
  %v4078 = vshrl.u32 %v4077, 7
  %v4079 = vsub.s32 0, %v4078
  %v4080 = vrot.slane %v3803, %v4079
  %v4081 = vlaneseq
  %v4082 = vshrl.u32 %v4081, 7
  %v4083 = vsub.s32 0, %v4082
  %v4084 = vrot.slane %v3804, %v4083
  %v4085 = vlaneseq
  %v4086 = vshrl.u32 %v4085, 7
  %v4087 = vsub.s32 0, %v4086
  %v4088 = vrot.slane %v3805, %v4087
  %v4089 = vlaneseq
  %v4090 = vshrl.u32 %v4089, 7
  %v4091 = vsub.s32 0, %v4090
  %v4092 = vrot.slane %v3806, %v4091
  %v4093 = vlaneseq
  %v4094 = vshrl.u32 %v4093, 7
  %v4095 = vsub.s32 0, %v4094
  %v4096 = vrot.slane %v3807, %v4095
  %v4097 = vlaneseq
  %v4098 = vshrl.u32 %v4097, 7
  %v4099 = vsub.s32 0, %v4098
  %v4100 = vrot.slane %v3808, %v4099
  %v4101 = vlaneseq
  %v4102 = vshrl.u32 %v4101, 7
  %v4103 = vsub.s32 0, %v4102
  %v4104 = vrot.slane %v3809, %v4103
  %v4105 = vlaneseq
  %v4106 = vshrl.u32 %v4105, 7
  %v4107 = vsub.s32 0, %v4106
  %v4108 = vrot.slane %v3810, %v4107
  %v4109 = vlaneseq
  %v4110 = vshrl.u32 %v4109, 7
  %v4111 = vsub.s32 0, %v4110
  %v4112 = vrot.slane %v3811, %v4111
  %v4113 = vlaneseq
  %v4114 = vshrl.u32 %v4113, 7
  %v4115 = vsub.s32 0, %v4114
  %v4116 = vrot.slane %v3812, %v4115
  %v4117 = vlaneseq
  %v4118 = vshrl.u32 %v4117, 7
  %v4119 = vsub.s32 0, %v4118
  %v4120 = vrot.slane %v3813, %v4119
  %v4121 = vlaneseq
  %v4122 = vshrl.u32 %v4121, 7
  %v4123 = vsub.s32 0, %v4122
  %v4124 = vrot.slane %v3814, %v4123
  %v4125 = vlaneseq
  %v4126 = vshrl.u32 %v4125, 7
  %v4127 = vsub.s32 0, %v4126
  %v4128 = vrot.slane %v3815, %v4127
  %v4129 = vlaneseq
  %v4130 = vshrl.u32 %v4129, 7
  %v4131 = vsub.s32 0, %v4130
  %v4132 = vrot.slane %v3816, %v4131
  %v4133 = vlaneseq
  %v4134 = vshrl.u32 %v4133, 7
  %v4135 = vsub.s32 0, %v4134
  %v4136 = vrot.slane %v3817, %v4135
  %v4137 = vlaneseq
  %v4138 = vshrl.u32 %v4137, 7
  %v4139 = vsub.s32 0, %v4138
  %v4140 = vrot.slane %v3818, %v4139
  %v4141 = vlaneseq
  %v4142 = vshrl.u32 %v4141, 7
  %v4143 = vsub.s32 0, %v4142
  %v4144 = vrot.slane %v3819, %v4143
  %v4145 = vlaneseq
  %v4146 = vshrl.u32 %v4145, 7
  %v4147 = vsub.s32 0, %v4146
  %v4148 = vrot.slane %v3820, %v4147
  %v4149 = vlaneseq
  %v4150 = vshrl.u32 %v4149, 7
  %v4151 = vsub.s32 0, %v4150
  %v4152 = vrot.slane %v3821, %v4151
  %v4153 = vlaneseq
  %v4154 = vshrl.u32 %v4153, 7
  %v4155 = vsub.s32 0, %v4154
  %v4156 = vrot.slane %v3822, %v4155
  %v4157 = vlaneseq
  %v4158 = vshrl.u32 %v4157, 7
  %v4159 = vsub.s32 0, %v4158
  %v4160 = vrot.slane %v3823, %v4159
  %v4161 = vlaneseq
  %v4162 = vshrl.u32 %v4161, 7
  %v4163 = vsub.s32 0, %v4162
  %v4164 = vrot.slane %v3824, %v4163
  %v4165 = vlaneseq
  %v4166 = vshrl.u32 %v4165, 7
  %v4167 = vsub.s32 0, %v4166
  %v4168 = vrot.slane %v3825, %v4167
  %v4169 = vlaneseq
  %v4170 = vshrl.u32 %v4169, 7
  %v4171 = vsub.s32 0, %v4170
  %v4172 = vrot.slane %v3826, %v4171
  %v4173 = vlaneseq
  %v4174 = vshrl.u32 %v4173, 7
  %v4175 = vsub.s32 0, %v4174
  %v4176 = vrot.slane %v3827, %v4175
  %v4177 = vlaneseq
  %v4178 = vshrl.u32 %v4177, 7
  %v4179 = vsub.s32 0, %v4178
  %v4180 = vrot.slane %v3828, %v4179
  %v4181 = vlaneseq
  %v4182 = vshrl.u32 %v4181, 7
  %v4183 = vsub.s32 0, %v4182
  %v4184 = vrot.slane %v3829, %v4183
  %v4185 = vlaneseq
  %v4186 = vshrl.u32 %v4185, 7
  %v4187 = vsub.s32 0, %v4186
  %v4188 = vrot.slane %v3830, %v4187
  %v4189 = vlaneseq
  %v4190 = vshrl.u32 %v4189, 7
  %v4191 = vsub.s32 0, %v4190
  %v4192 = vrot.slane %v3831, %v4191
  %v4193 = vlaneseq
  %v4194 = vshrl.u32 %v4193, 7
  %v4195 = vsub.s32 0, %v4194
  %v4196 = vrot.slane %v3832, %v4195
  %v4197 = vlaneseq
  %v4198 = vshrl.u32 %v4197, 7
  %v4199 = vsub.s32 0, %v4198
  %v4200 = vrot.slane %v3833, %v4199
  %v4201 = vlaneseq
  %v4202 = vshrl.u32 %v4201, 7
  %v4203 = vsub.s32 0, %v4202
  %v4204 = vrot.slane %v3834, %v4203
  %v4205 = vlaneseq
  %v4206 = vshrl.u32 %v4205, 7
  %v4207 = vsub.s32 0, %v4206
  %v4208 = vrot.slane %v3835, %v4207
  %v4209 = vlaneseq
  %v4210 = vshrl.u32 %v4209, 7
  %v4211 = vsub.s32 0, %v4210
  %v4212 = vrot.slane %v3836, %v4211
  %v4213 = vlaneseq
  %v4214 = vshrl.u32 %v4213, 7
  %v4215 = vsub.s32 0, %v4214
  %v4216 = vrot.slane %v3837, %v4215
  %v4217 = vlaneseq
  %v4218 = vshrl.u32 %v4217, 7
  %v4219 = vsub.s32 0, %v4218
  %v4220 = vrot.slane %v3838, %v4219
  %v4221 = vlaneseq
  %v4222 = vshrl.u32 %v4221, 7
  %v4223 = vsub.s32 0, %v4222
  %v4224 = vrot.slane %v3839, %v4223
  %v4225 = vlaneseq
  %v4226 = vshrl.u32 %v4225, 7
  %v4227 = vsub.s32 0, %v4226
  %v4228 = vrot.slane %v3840, %v4227
  %v4229 = vlaneseq
  %v4230 = vshrl.u32 %v4229, 7
  %v4231 = vsub.s32 0, %v4230
  %v4232 = vrot.slane %v3841, %v4231
  %v4233 = vlaneseq
  %v4234 = vshrl.u32 %v4233, 7
  %v4235 = vsub.s32 0, %v4234
  %v4236 = vrot.slane %v3842, %v4235
  %v4237 = vlaneseq
  %v4238 = vshrl.u32 %v4237, 7
  %v4239 = vsub.s32 0, %v4238
  %v4240 = vrot.slane %v3843, %v4239
  %v4241 = vsel %vm2943, %v4056, %v4052
  %v4242 = vsel %vm2945, %v4060, %v4241
  %v4243 = vsel %vm2947, %v4064, %v4242
  %v4244 = vsel %vm2949, %v4068, %v4243
  %v4245 = vsel %vm2951, %v4072, %v4244
  %v4246 = vsel %vm2953, %v4076, %v4245
  %v4247 = vsel %vm2955, %v4080, %v4246
  %v4248 = vsel %vm2943, %v4088, %v4084
  %v4249 = vsel %vm2945, %v4092, %v4248
  %v4250 = vsel %vm2947, %v4096, %v4249
  %v4251 = vsel %vm2949, %v4100, %v4250
  %v4252 = vsel %vm2951, %v4104, %v4251
  %v4253 = vsel %vm2953, %v4108, %v4252
  %v4254 = vsel %vm2955, %v4112, %v4253
  %v4255 = vsel %vm2943, %v4120, %v4116
  %v4256 = vsel %vm2945, %v4124, %v4255
  %v4257 = vsel %vm2947, %v4128, %v4256
  %v4258 = vsel %vm2949, %v4132, %v4257
  %v4259 = vsel %vm2951, %v4136, %v4258
  %v4260 = vsel %vm2953, %v4140, %v4259
  %v4261 = vsel %vm2955, %v4144, %v4260
  %v4262 = vsel %vm2943, %v4152, %v4148
  %v4263 = vsel %vm2945, %v4156, %v4262
  %v4264 = vsel %vm2947, %v4160, %v4263
  %v4265 = vsel %vm2949, %v4164, %v4264
  %v4266 = vsel %vm2951, %v4168, %v4265
  %v4267 = vsel %vm2953, %v4172, %v4266
  %v4268 = vsel %vm2955, %v4176, %v4267
  %v4269 = vsel %vm2943, %v4184, %v4180
  %v4270 = vsel %vm2945, %v4188, %v4269
  %v4271 = vsel %vm2947, %v4192, %v4270
  %v4272 = vsel %vm2949, %v4196, %v4271
  %v4273 = vsel %vm2951, %v4200, %v4272
  %v4274 = vsel %vm2953, %v4204, %v4273
  %v4275 = vsel %vm2955, %v4208, %v4274
  %v4276 = vsel %vm2943, %v4216, %v4212
  %v4277 = vsel %vm2945, %v4220, %v4276
  %v4278 = vsel %vm2947, %v4224, %v4277
  %v4279 = vsel %vm2949, %v4228, %v4278
  %v4280 = vsel %vm2951, %v4232, %v4279
  %v4281 = vsel %vm2953, %v4236, %v4280
  %v4282 = vsel %vm2955, %v4240, %v4281
  %v4289 = vrot.slane %v4247, 7
  %v4290 = vrot.slane %v4254, 7
  %v4291 = vrot.slane %v4261, 7
  %v4292 = vrot.slane %v4268, 7
  %v4293 = vrot.slane %v4275, 7
  %v4294 = vrot.slane %v4282, 7
  %v4295 = vsel %vm690, %v4293, %v4294
  %v4296 = vsel %vm690, %v4292, %v4293
  %v4297 = vsel %vm690, %v4291, %v4292
  %v4298 = vsel %vm690, %v4290, %v4291
  %v4299 = vsel %vm690, %v4289, %v4290
  %v4300 = vsel %vm690, %v4294, %v4289
  %v4301 = vmul.f32 %v4300, %v3977
  %v4302 = vmul.f32 %v4299, %v3978
  %v4303 = vmul.f32 %v4298, %v3979
  %v4304 = vmul.f32 %v4297, %v3980
  %v4305 = vmul.f32 %v4296, %v3981
  %v4306 = vmul.f32 %v4295, %v3982
  %v4307 = vrot.slane %v4247, 1
  %v4308 = vrot.slane %v4254, 1
  %v4309 = vrot.slane %v4261, 1
  %v4310 = vrot.slane %v4268, 1
  %v4311 = vrot.slane %v4275, 1
  %v4312 = vrot.slane %v4282, 1
  %v4313 = vsel %vm763, %v4311, %v4312
  %v4314 = vsel %vm763, %v4310, %v4311
  %v4315 = vsel %vm763, %v4309, %v4310
  %v4316 = vsel %vm763, %v4308, %v4309
  %v4317 = vsel %vm763, %v4307, %v4308
  %v4318 = vsel %vm763, %v4312, %v4307
  %v4319 = vmul.f32 %v4317, %v3995
  %v4320 = vmul.f32 %v4316, %v3996
  %v4321 = vmul.f32 %v4315, %v3997
  %v4322 = vmul.f32 %v4314, %v3998
  %v4323 = vmul.f32 %v4313, %v3999
  %v4324 = vmul.f32 %v4318, %v4000
  %4325 = vrot.lane.b32.xlu0 %v4247, 64
  %v4326 = vpop.permute.xlu0 %4325
  %4327 = vrot.lane.b32.xlu0 %v4254, 64
  %v4328 = vpop.permute.xlu0 %4327
  %4329 = vrot.lane.b32.xlu0 %v4261, 64
  %v4330 = vpop.permute.xlu0 %4329
  %4331 = vrot.lane.b32.xlu0 %v4268, 64
  %v4332 = vpop.permute.xlu0 %4331
  %4333 = vrot.lane.b32.xlu0 %v4275, 64
  %v4334 = vpop.permute.xlu0 %4333
  %4335 = vrot.lane.b32.xlu0 %v4282, 64
  %v4336 = vpop.permute.xlu0 %4335
  %v4343 = vsel %vm3215, %v4301, %v4326
  %v4344 = vsel %vm3215, %v4302, %v4328
  %v4345 = vsel %vm3215, %v4303, %v4330
  %v4346 = vsel %vm3215, %v4304, %v4332
  %v4347 = vsel %vm3215, %v4305, %v4334
  %v4348 = vsel %vm3215, %v4306, %v4336
  %v4349 = vpack.c.bf16 %v4344, %v4343
  %v4350 = vpack.c.bf16 %v4320, %v4319
  %v4351 = vpack.c.bf16 %v4346, %v4345
  %v4352 = vpack.c.bf16 %v4322, %v4321
  %v4353 = vpack.c.bf16 %v4348, %v4347
  %v4354 = vpack.c.bf16 %v4324, %v4323
  %v4356 = vlaneseq
  %v4357 = vshrl.u32 %v4356, 7
  %v4358 = vsub.s32 0, %v4357
  %v4359 = vrot.slane %v3868, %v4358
  %v4385 = vunpack.c.l.b16 %v3844
  %v4386 = vunpack.c.l.b16 %v3845
  %v4387 = vunpack.c.l.b16 %v3846
  %v4388 = vunpack.c.l.b16 %v3847
  %v4389 = vunpack.c.l.b16 %v3848
  %v4390 = vunpack.c.l.b16 %v3849
  %v4391 = vunpack.c.l.b16 %v3850
  %v4392 = vunpack.c.l.b16 %v3851
  %v4393 = vunpack.c.l.b16 %v3852
  %v4394 = vunpack.c.l.b16 %v3853
  %v4395 = vunpack.c.l.b16 %v3854
  %v4396 = vunpack.c.l.b16 %v3855
  %v4397 = vunpack.c.l.b16 %v3856
  %v4398 = vunpack.c.l.b16 %v3857
  %v4399 = vunpack.c.l.b16 %v3858
  %v4400 = vunpack.c.l.b16 %v3859
  %v4401 = vunpack.c.l.b16 %v3860
  %v4402 = vunpack.c.l.b16 %v3861
  %v4403 = vunpack.c.l.b16 %v3862
  %v4404 = vunpack.c.l.b16 %v3863
  %v4405 = vunpack.c.l.b16 %v3864
  %v4406 = vunpack.c.l.b16 %v3865
  %v4407 = vunpack.c.l.b16 %v3866
  %v4408 = vunpack.c.l.b16 %v3867
  %v4409 = vpack.c.b16 %v4386, %v4385
  %v4410 = vpack.c.b16 %v4388, %v4387
  %v4411 = vpack.c.b16 %v4390, %v4389
  %v4412 = vpack.c.b16 %v4392, %v4391
  %v4413 = vpack.c.b16 %v4394, %v4393
  %v4414 = vpack.c.b16 %v4396, %v4395
  %v4415 = vpack.c.b16 %v4398, %v4397
  %v4416 = vpack.c.b16 %v4400, %v4399
  %v4417 = vpack.c.b16 %v4402, %v4401
  %v4418 = vpack.c.b16 %v4404, %v4403
  %v4419 = vpack.c.b16 %v4406, %v4405
  %v4420 = vpack.c.b16 %v4408, %v4407
  %v4434 = vsel %vm3215, %v4350, 0
  %v4437 = vsel %vm3215, %v4352, 0
  %v4440 = vsel %vm3215, %v4354, 0
  %4442 = vmatprep.subr.bf16.mxu0 0
  %4443 = vmatpush1.bf16.msra.mxu0 %v4416
  %4444 = vmatprep.subr.bf16.mxu0 0
  %4445 = vmatpush1.bf16.msra.mxu0 %v4415
  %4446 = vmatprep.subr.bf16.mxu0 0
  %4447 = vmatpush1.bf16.msra.mxu0 %v4414
  %4448 = vmatprep.subr.bf16.mxu0 0
  %4449 = vmatpush1.bf16.msra.mxu0 %v4413
  %4450 = vmatprep.subr.bf16.mxu0 0
  %4451 = vmatpush1.bf16.msra.mxu0 %v4412
  %4452 = vmatprep.subr.bf16.mxu0 0
  %4453 = vmatpush1.bf16.msra.mxu0 %v4411
  %4454 = vmatprep.subr.bf16.mxu0 0
  %4455 = vmatpush1.bf16.msra.mxu0 %v4410
  %4456 = vmatprep.subr.bf16.mxu0 0
  %4457 = vmatpush1.bf16.msra.mxu0 %v4409
  %4458 = vmatprep.subr.bf16.mxu0 0
  %4459 = vmatpush2.bf16.msra.mxu0 0
  %4460 = vmatprep.subr.bf16.mxu0 0
  %4461 = vmatpush2.bf16.msra.mxu0 0
  %4462 = vmatprep.subr.bf16.mxu0 0
  %4463 = vmatpush2.bf16.msra.mxu0 0
  %4464 = vmatprep.subr.bf16.mxu0 0
  %4465 = vmatpush2.bf16.msra.mxu0 0
  %4466 = vmatprep.subr.bf16.mxu0 0
  %4467 = vmatpush2.bf16.msra.mxu0 %v4420
  %4468 = vmatprep.subr.bf16.mxu0 0
  %4469 = vmatpush2.bf16.msra.mxu0 %v4419
  %4470 = vmatprep.subr.bf16.mxu0 0
  %4471 = vmatpush2.bf16.msra.mxu0 %v4418
  %4472 = vmatprep.subr.bf16.mxu0 0
  %4473 = vmatpush2.bf16.msra.mxu0 %v4417
  %4474 = vmatprep.mubr.bf16.mxu0 %v4434
  %4475 = vmatmul.mubr.bf16.gmra.mxu0 %v4349
  %v4476 = vpop.f32.mrf.mxu0
  %v4477 = vadd.f32 %v4359, %v4476
  %v4478 = vpop.f32.mrf.mxu0
  %v4479 = vpop.f32.mrf.mxu0
  %v4480 = vadd.f32 %v4359, %v4479
  %v4481 = vpop.f32.mrf.mxu0
  %4482 = vmatprep.mubr.bf16.mxu0 %v4437
  %4483 = vmatmul.mubr.bf16.gmra.mxu0 %v4351
  %v4484 = vpop.f32.mrf.mxu0
  %v4485 = vadd.f32 %v4359, %v4484
  %v4486 = vpop.f32.mrf.mxu0
  %v4487 = vpop.f32.mrf.mxu0
  %v4488 = vadd.f32 %v4359, %v4487
  %v4489 = vpop.f32.mrf.mxu0
  %4490 = vmatprep.mubr.bf16.mxu0 %v4440
  %4491 = vmatmul.mubr.bf16.gmra.mxu0 %v4353
  %v4492 = vpop.f32.mrf.mxu0
  %v4493 = vadd.f32 %v4359, %v4492
  %v4494 = vpop.f32.mrf.mxu0
  %v4495 = vpop.f32.mrf.mxu0
  %v4496 = vadd.f32 %v4359, %v4495
  %v4497 = vpop.f32.mrf.mxu0
  %4498 = vdwg.mxu0
  %v4499 = vmax.f32 %v4477, 0.0
  %v4500 = vmax.f32 %v4480, 0.0
  %v4501 = vmax.f32 %v4485, 0.0
  %v4502 = vmax.f32 %v4488, 0.0
  %v4503 = vmax.f32 %v4493, 0.0
  %v4504 = vmax.f32 %v4496, 0.0
  %v4511 = vcombine.high %v4499, %v4499
  %v4513 = vunpack.c.l.s4 1983009808
  %v4514 = vunpack.c.0.s8 %v4513
  %v4515 = vlaneseq
  %v4516 = vshrl.u32 %v4515, 7
  %v4517 = vsub.s32 %v4514, %v4516
  %v4518 = vrot.slane %v4499, %v4517
  %v4520 = vunpack.c.l.s4 1983009808
  %v4521 = vunpack.c.0.s8 %v4520
  %v4522 = vlaneseq
  %v4523 = vshrl.u32 %v4522, 7
  %v4524 = vsub.s32 %v4521, %v4523
  %v4525 = vrot.slane %v4511, %v4524
  %v4526 = vcombine.high %v4518, %v4518
  %v4527 = vcombine.high %v4525, %v4525
  %v4528 = vcombine.high %v4500, %v4500
  %v4530 = vunpack.c.l.s4 1983009808
  %v4531 = vunpack.c.0.s8 %v4530
  %v4532 = vlaneseq
  %v4533 = vshrl.u32 %v4532, 7
  %v4534 = vsub.s32 %v4531, %v4533
  %v4535 = vrot.slane %v4500, %v4534
  %v4537 = vunpack.c.l.s4 1983009808
  %v4538 = vunpack.c.0.s8 %v4537
  %v4539 = vlaneseq
  %v4540 = vshrl.u32 %v4539, 7
  %v4541 = vsub.s32 %v4538, %v4540
  %v4542 = vrot.slane %v4528, %v4541
  %v4543 = vcombine.high %v4535, %v4535
  %v4544 = vcombine.high %v4542, %v4542
  %v4545 = vcombine.high %v4501, %v4501
  %v4547 = vunpack.c.l.s4 1983009808
  %v4548 = vunpack.c.0.s8 %v4547
  %v4549 = vlaneseq
  %v4550 = vshrl.u32 %v4549, 7
  %v4551 = vsub.s32 %v4548, %v4550
  %v4552 = vrot.slane %v4501, %v4551
  %v4554 = vunpack.c.l.s4 1983009808
  %v4555 = vunpack.c.0.s8 %v4554
  %v4556 = vlaneseq
  %v4557 = vshrl.u32 %v4556, 7
  %v4558 = vsub.s32 %v4555, %v4557
  %v4559 = vrot.slane %v4545, %v4558
  %v4560 = vcombine.high %v4552, %v4552
  %v4561 = vcombine.high %v4559, %v4559
  %v4562 = vcombine.high %v4502, %v4502
  %v4564 = vunpack.c.l.s4 1983009808
  %v4565 = vunpack.c.0.s8 %v4564
  %v4566 = vlaneseq
  %v4567 = vshrl.u32 %v4566, 7
  %v4568 = vsub.s32 %v4565, %v4567
  %v4569 = vrot.slane %v4502, %v4568
  %v4571 = vunpack.c.l.s4 1983009808
  %v4572 = vunpack.c.0.s8 %v4571
  %v4573 = vlaneseq
  %v4574 = vshrl.u32 %v4573, 7
  %v4575 = vsub.s32 %v4572, %v4574
  %v4576 = vrot.slane %v4562, %v4575
  %v4577 = vcombine.high %v4569, %v4569
  %v4578 = vcombine.high %v4576, %v4576
  %v4579 = vcombine.high %v4503, %v4503
  %v4581 = vunpack.c.l.s4 1983009808
  %v4582 = vunpack.c.0.s8 %v4581
  %v4583 = vlaneseq
  %v4584 = vshrl.u32 %v4583, 7
  %v4585 = vsub.s32 %v4582, %v4584
  %v4586 = vrot.slane %v4503, %v4585
  %v4588 = vunpack.c.l.s4 1983009808
  %v4589 = vunpack.c.0.s8 %v4588
  %v4590 = vlaneseq
  %v4591 = vshrl.u32 %v4590, 7
  %v4592 = vsub.s32 %v4589, %v4591
  %v4593 = vrot.slane %v4579, %v4592
  %v4594 = vcombine.high %v4586, %v4586
  %v4595 = vcombine.high %v4593, %v4593
  %v4596 = vcombine.high %v4504, %v4504
  %v4598 = vunpack.c.l.s4 1983009808
  %v4599 = vunpack.c.0.s8 %v4598
  %v4600 = vlaneseq
  %v4601 = vshrl.u32 %v4600, 7
  %v4602 = vsub.s32 %v4599, %v4601
  %v4603 = vrot.slane %v4504, %v4602
  %v4605 = vunpack.c.l.s4 1983009808
  %v4606 = vunpack.c.0.s8 %v4605
  %v4607 = vlaneseq
  %v4608 = vshrl.u32 %v4607, 7
  %v4609 = vsub.s32 %v4606, %v4608
  %v4610 = vrot.slane %v4596, %v4609
  %v4611 = vcombine.high %v4603, %v4603
  %v4612 = vcombine.high %v4610, %v4610
  %v4637 = vrot.slane %v4518, 7
  %v4638 = vrot.slane %v4637, 2
  %v4639 = vrot.slane %v4526, 7
  %v4640 = vrot.slane %v4639, 2
  %v4641 = vrot.slane %v4525, 7
  %v4642 = vrot.slane %v4641, 2
  %v4643 = vrot.slane %v4527, 7
  %v4644 = vrot.slane %v4643, 2
  %v4645 = vrot.slane %v4535, 7
  %v4646 = vrot.slane %v4645, 2
  %v4647 = vrot.slane %v4543, 7
  %v4648 = vrot.slane %v4647, 2
  %v4649 = vrot.slane %v4542, 7
  %v4650 = vrot.slane %v4649, 2
  %v4651 = vrot.slane %v4544, 7
  %v4652 = vrot.slane %v4651, 2
  %v4653 = vrot.slane %v4552, 7
  %v4654 = vrot.slane %v4653, 2
  %v4655 = vrot.slane %v4560, 7
  %v4656 = vrot.slane %v4655, 2
  %v4657 = vrot.slane %v4559, 7
  %v4658 = vrot.slane %v4657, 2
  %v4659 = vrot.slane %v4561, 7
  %v4660 = vrot.slane %v4659, 2
  %v4661 = vrot.slane %v4569, 7
  %v4662 = vrot.slane %v4661, 2
  %v4663 = vrot.slane %v4577, 7
  %v4664 = vrot.slane %v4663, 2
  %v4665 = vrot.slane %v4576, 7
  %v4666 = vrot.slane %v4665, 2
  %v4667 = vrot.slane %v4578, 7
  %v4668 = vrot.slane %v4667, 2
  %v4669 = vrot.slane %v4586, 7
  %v4670 = vrot.slane %v4669, 2
  %v4671 = vrot.slane %v4594, 7
  %v4672 = vrot.slane %v4671, 2
  %v4673 = vrot.slane %v4593, 7
  %v4674 = vrot.slane %v4673, 2
  %v4675 = vrot.slane %v4595, 7
  %v4676 = vrot.slane %v4675, 2
  %v4677 = vrot.slane %v4603, 7
  %v4678 = vrot.slane %v4677, 2
  %v4679 = vrot.slane %v4611, 7
  %v4680 = vrot.slane %v4679, 2
  %v4681 = vrot.slane %v4610, 7
  %v4682 = vrot.slane %v4681, 2
  %v4683 = vrot.slane %v4612, 7
  %v4684 = vrot.slane %v4683, 2
  %v4709 = vadd.f32 %v4518, %v4638
  %v4710 = vadd.f32 %v4526, %v4640
  %v4711 = vadd.f32 %v4525, %v4642
  %v4712 = vadd.f32 %v4527, %v4644
  %v4713 = vadd.f32 %v4535, %v4646
  %v4714 = vadd.f32 %v4543, %v4648
  %v4715 = vadd.f32 %v4542, %v4650
  %v4716 = vadd.f32 %v4544, %v4652
  %v4717 = vadd.f32 %v4552, %v4654
  %v4718 = vadd.f32 %v4560, %v4656
  %v4719 = vadd.f32 %v4559, %v4658
  %v4720 = vadd.f32 %v4561, %v4660
  %v4721 = vadd.f32 %v4569, %v4662
  %v4722 = vadd.f32 %v4577, %v4664
  %v4723 = vadd.f32 %v4576, %v4666
  %v4724 = vadd.f32 %v4578, %v4668
  %v4725 = vadd.f32 %v4586, %v4670
  %v4726 = vadd.f32 %v4594, %v4672
  %v4727 = vadd.f32 %v4593, %v4674
  %v4728 = vadd.f32 %v4595, %v4676
  %v4729 = vadd.f32 %v4603, %v4678
  %v4730 = vadd.f32 %v4611, %v4680
  %v4731 = vadd.f32 %v4610, %v4682
  %v4732 = vadd.f32 %v4612, %v4684
  %v4757 = vlaneseq
  %v4758 = vshrl.u32 %v4757, 7
  %v4759 = vsub.s32 0, %v4758
  %v4760 = vrot.slane %v4709, %v4759
  %v4761 = vlaneseq
  %v4762 = vshrl.u32 %v4761, 7
  %v4763 = vsub.s32 0, %v4762
  %v4764 = vrot.slane %v4710, %v4763
  %v4765 = vlaneseq
  %v4766 = vshrl.u32 %v4765, 7
  %v4767 = vsub.s32 0, %v4766
  %v4768 = vrot.slane %v4711, %v4767
  %v4769 = vlaneseq
  %v4770 = vshrl.u32 %v4769, 7
  %v4771 = vsub.s32 0, %v4770
  %v4772 = vrot.slane %v4712, %v4771
  %v4773 = vlaneseq
  %v4774 = vshrl.u32 %v4773, 7
  %v4775 = vsub.s32 0, %v4774
  %v4776 = vrot.slane %v4713, %v4775
  %v4777 = vlaneseq
  %v4778 = vshrl.u32 %v4777, 7
  %v4779 = vsub.s32 0, %v4778
  %v4780 = vrot.slane %v4714, %v4779
  %v4781 = vlaneseq
  %v4782 = vshrl.u32 %v4781, 7
  %v4783 = vsub.s32 0, %v4782
  %v4784 = vrot.slane %v4715, %v4783
  %v4785 = vlaneseq
  %v4786 = vshrl.u32 %v4785, 7
  %v4787 = vsub.s32 0, %v4786
  %v4788 = vrot.slane %v4716, %v4787
  %v4789 = vlaneseq
  %v4790 = vshrl.u32 %v4789, 7
  %v4791 = vsub.s32 0, %v4790
  %v4792 = vrot.slane %v4717, %v4791
  %v4793 = vlaneseq
  %v4794 = vshrl.u32 %v4793, 7
  %v4795 = vsub.s32 0, %v4794
  %v4796 = vrot.slane %v4718, %v4795
  %v4797 = vlaneseq
  %v4798 = vshrl.u32 %v4797, 7
  %v4799 = vsub.s32 0, %v4798
  %v4800 = vrot.slane %v4719, %v4799
  %v4801 = vlaneseq
  %v4802 = vshrl.u32 %v4801, 7
  %v4803 = vsub.s32 0, %v4802
  %v4804 = vrot.slane %v4720, %v4803
  %v4805 = vlaneseq
  %v4806 = vshrl.u32 %v4805, 7
  %v4807 = vsub.s32 0, %v4806
  %v4808 = vrot.slane %v4721, %v4807
  %v4809 = vlaneseq
  %v4810 = vshrl.u32 %v4809, 7
  %v4811 = vsub.s32 0, %v4810
  %v4812 = vrot.slane %v4722, %v4811
  %v4813 = vlaneseq
  %v4814 = vshrl.u32 %v4813, 7
  %v4815 = vsub.s32 0, %v4814
  %v4816 = vrot.slane %v4723, %v4815
  %v4817 = vlaneseq
  %v4818 = vshrl.u32 %v4817, 7
  %v4819 = vsub.s32 0, %v4818
  %v4820 = vrot.slane %v4724, %v4819
  %v4821 = vlaneseq
  %v4822 = vshrl.u32 %v4821, 7
  %v4823 = vsub.s32 0, %v4822
  %v4824 = vrot.slane %v4725, %v4823
  %v4825 = vlaneseq
  %v4826 = vshrl.u32 %v4825, 7
  %v4827 = vsub.s32 0, %v4826
  %v4828 = vrot.slane %v4726, %v4827
  %v4829 = vlaneseq
  %v4830 = vshrl.u32 %v4829, 7
  %v4831 = vsub.s32 0, %v4830
  %v4832 = vrot.slane %v4727, %v4831
  %v4833 = vlaneseq
  %v4834 = vshrl.u32 %v4833, 7
  %v4835 = vsub.s32 0, %v4834
  %v4836 = vrot.slane %v4728, %v4835
  %v4837 = vlaneseq
  %v4838 = vshrl.u32 %v4837, 7
  %v4839 = vsub.s32 0, %v4838
  %v4840 = vrot.slane %v4729, %v4839
  %v4841 = vlaneseq
  %v4842 = vshrl.u32 %v4841, 7
  %v4843 = vsub.s32 0, %v4842
  %v4844 = vrot.slane %v4730, %v4843
  %v4845 = vlaneseq
  %v4846 = vshrl.u32 %v4845, 7
  %v4847 = vsub.s32 0, %v4846
  %v4848 = vrot.slane %v4731, %v4847
  %v4849 = vlaneseq
  %v4850 = vshrl.u32 %v4849, 7
  %v4851 = vsub.s32 0, %v4850
  %v4852 = vrot.slane %v4732, %v4851
  %v4853 = vsel %vm2943, %v4764, %v4760
  %v4854 = vsel %vm2945, %v4768, %v4853
  %v4855 = vsel %vm2947, %v4772, %v4854
  %v4856 = vsel %vm2949, %v4776, %v4855
  %v4857 = vsel %vm2951, %v4780, %v4856
  %v4858 = vsel %vm2953, %v4784, %v4857
  %v4859 = vsel %vm2955, %v4788, %v4858
  %v4860 = vsel %vm2943, %v4796, %v4792
  %v4861 = vsel %vm2945, %v4800, %v4860
  %v4862 = vsel %vm2947, %v4804, %v4861
  %v4863 = vsel %vm2949, %v4808, %v4862
  %v4864 = vsel %vm2951, %v4812, %v4863
  %v4865 = vsel %vm2953, %v4816, %v4864
  %v4866 = vsel %vm2955, %v4820, %v4865
  %v4867 = vsel %vm2943, %v4828, %v4824
  %v4868 = vsel %vm2945, %v4832, %v4867
  %v4869 = vsel %vm2947, %v4836, %v4868
  %v4870 = vsel %vm2949, %v4840, %v4869
  %v4871 = vsel %vm2951, %v4844, %v4870
  %v4872 = vsel %vm2953, %v4848, %v4871
  %v4873 = vsel %vm2955, %v4852, %v4872
  %vm4877 = vcmask 1040384
  %v4878 = vsel %vm4877, %v4859, 0.0
  %v4879 = vrot.slane %v4866, 3
  %v4880 = vsel %vm2943, %v4879, %v4878
  %v4881 = vrot.slane %v4859, 1
  %v4882 = vsel %vm4877, %v4881, 0.0
  %v4883 = vrot.slane %v4866, 4
  %v4884 = vsel %vm2943, %v4883, %v4882
  %v4885 = vrot.slane %v4859, 2
  %v4886 = vsel %vm4877, %v4885, 0.0
  %v4887 = vrot.slane %v4866, 5
  %v4888 = vsel %vm2943, %v4887, %v4886
  %v4889 = vrot.slane %v4859, 3
  %v4890 = vsel %vm4877, %v4889, 0.0
  %v4891 = vrot.slane %v4866, 6
  %v4892 = vsel %vm2943, %v4891, %v4890
  %v4893 = vrot.slane %v4859, 4
  %v4894 = vsel %vm4877, %v4893, 0.0
  %v4895 = vrot.slane %v4873, 7
  %v4896 = vsel %vm2943, %v4895, %v4894
  %v4897 = vrot.slane %v4859, 5
  %v4898 = vsel %vm4877, %v4897, 0.0
  %v4899 = vsel %vm2943, %v4873, %v4898
  %v4900 = vrot.slane %v4859, 6
  %v4901 = vsel %vm4877, %v4900, 0.0
  %v4902 = vrot.slane %v4873, 1
  %v4903 = vsel %vm2943, %v4902, %v4901
  %v4904 = vrot.slane %v4859, 7
  %v4905 = vsel %vm4877, %v4904, 0.0
  %v4906 = vrot.slane %v4873, 2
  %v4907 = vsel %vm2943, %v4906, %v4905
  %v4908 = vsel %vm4877, %v4866, 0.0
  %v4909 = vrot.slane %v4873, 3
  %v4910 = vsel %vm2943, %v4909, %v4908
  %v4911 = vrot.slane %v4866, 1
  %v4912 = vsel %vm4877, %v4911, 0.0
  %v4913 = vrot.slane %v4873, 4
  %v4914 = vsel %vm2943, %v4913, %v4912
  %v4915 = vrot.slane %v4866, 2
  %v4916 = vsel %vm4877, %v4915, 0.0
  %v4917 = vrot.slane %v4873, 5
  %v4918 = vsel %vm2943, %v4917, %v4916
  %v4919 = vsel %vm4877, %v4879, 0.0
  %v4920 = vrot.slane %v4873, 6
  %v4921 = vsel %vm2943, %v4920, %v4919
  %v4922 = vld [vmem:[%s1] sm:$0x3]
  %v4923 = vpack.c.bf16 %v4880, %v4880
  %v4924 = vpack.c.bf16 %v4884, %v4884
  %v4925 = vpack.c.bf16 %v4888, %v4888
  %v4926 = vpack.c.bf16 %v4892, %v4892
  %v4927 = vpack.c.bf16 %v4896, %v4896
  %v4928 = vpack.c.bf16 %v4899, %v4899
  %v4929 = vpack.c.bf16 %v4903, %v4903
  %v4930 = vpack.c.bf16 %v4907, %v4907
  %v4931 = vpack.c.bf16 %v4910, %v4910
  %v4932 = vpack.c.bf16 %v4914, %v4914
  %v4933 = vpack.c.bf16 %v4918, %v4918
  %v4934 = vpack.c.bf16 %v4921, %v4921
  %v4935 = vpack.c.bf16 %v4922, %v4922
  %v4936 = vld [vmem:[%s8] sm:$0xff]
  %v4937 = vld [vmem:[%s8 + $0x8] sm:$0xff]
  %v4938 = vld [vmem:[%s8 + $0x10] sm:$0xff]
  %v4939 = vld [vmem:[%s8 + $0x18] sm:$0xff]
  %v4940 = vld [vmem:[%s8 + $0x20] sm:$0xff]
  %v4941 = vld [vmem:[%s8 + $0x28] sm:$0xff]
  %v4942 = vld [vmem:[%s8 + $0x30] sm:$0xff]
  %v4943 = vld [vmem:[%s8 + $0x38] sm:$0xff]
  %v4944 = vld [vmem:[%s8 + $0x40] sm:$0xff]
  %v4945 = vld [vmem:[%s8 + $0x48] sm:$0xff]
  %v4946 = vld [vmem:[%s8 + $0x50] sm:$0xff]
  %v4947 = vld [vmem:[%s8 + $0x58] sm:$0xff]
  %v4948 = vld [vmem:[%s8 + $0x60] sm:$0xff]
  %v4949 = vld [vmem:[%s8 + $0x68] sm:$0xff]
  %v4950 = vld [vmem:[%s8 + $0x70] sm:$0xff]
  %v4951 = vld [vmem:[%s8 + $0x78] sm:$0xff]
  %v4952 = vld [vmem:[%s8 + $0x80] sm:$0xff]
  %v4953 = vld [vmem:[%s8 + $0x88] sm:$0xff]
  %v4954 = vld [vmem:[%s8 + $0x90] sm:$0xff]
  %v4955 = vld [vmem:[%s8 + $0x98] sm:$0xff]
  %v4956 = vld [vmem:[%s8 + $0xa0] sm:$0xff]
  %v4957 = vld [vmem:[%s8 + $0xa8] sm:$0xff]
  %v4958 = vld [vmem:[%s8 + $0xb0] sm:$0xff]
  %v4959 = vld [vmem:[%s8 + $0xb8] sm:$0xff]
  %v4960 = vld [vmem:[%s8 + $0xc0] sm:$0xff]
  %v4961 = vld [vmem:[%s8 + $0xc8] sm:$0xff]
  %v4962 = vld [vmem:[%s8 + $0xd0] sm:$0xff]
  %v4963 = vld [vmem:[%s8 + $0xd8] sm:$0xff]
  %v4964 = vld [vmem:[%s8 + $0xe0] sm:$0xff]
  %v4965 = vld [vmem:[%s8 + $0xe8] sm:$0xff]
  %v4966 = vld [vmem:[%s8 + $0xf0] sm:$0xff]
  %v4967 = vld [vmem:[%s8 + $0xf8] sm:$0xff]
  %v4968 = vld [vmem:[%s8 + $0x100] sm:$0xff]
  %v4969 = vld [vmem:[%s8 + $0x108] sm:$0xff]
  %v4970 = vld [vmem:[%s8 + $0x110] sm:$0xff]
  %v4971 = vld [vmem:[%s8 + $0x118] sm:$0xff]
  %v4972 = vld [vmem:[%s8 + $0x120] sm:$0xff]
  %v4973 = vld [vmem:[%s8 + $0x128] sm:$0xff]
  %v4974 = vld [vmem:[%s8 + $0x130] sm:$0xff]
  %v4975 = vld [vmem:[%s8 + $0x138] sm:$0xff]
  %v4976 = vld [vmem:[%s8 + $0x140] sm:$0xff]
  %v4977 = vld [vmem:[%s8 + $0x148] sm:$0xff]
  %v4978 = vld [vmem:[%s8 + $0x150] sm:$0xff]
  %v4979 = vld [vmem:[%s8 + $0x158] sm:$0xff]
  %v4980 = vld [vmem:[%s8 + $0x160] sm:$0xff]
  %v4981 = vld [vmem:[%s8 + $0x168] sm:$0xff]
  %v4982 = vld [vmem:[%s8 + $0x170] sm:$0xff]
  %v4983 = vld [vmem:[%s8 + $0x178] sm:$0xff]
  %v4984 = vld [vmem:[%s8 + $0x180] sm:$0xff]
  %v4985 = vld [vmem:[%s8 + $0x188] sm:$0xff]
  %v4986 = vld [vmem:[%s8 + $0x190] sm:$0xff]
  %v4987 = vld [vmem:[%s8 + $0x198] sm:$0xff]
  %v4988 = vld [vmem:[%s8 + $0x1a0] sm:$0xff]
  %v4989 = vld [vmem:[%s8 + $0x1a8] sm:$0xff]
  %v4990 = vld [vmem:[%s8 + $0x1b0] sm:$0xff]
  %v4991 = vld [vmem:[%s8 + $0x1b8] sm:$0xff]
  %v4992 = vld [vmem:[%s8 + $0x1c0] sm:$0xff]
  %v4993 = vld [vmem:[%s8 + $0x1c8] sm:$0xff]
  %v4994 = vld [vmem:[%s8 + $0x1d0] sm:$0xff]
  %v4995 = vld [vmem:[%s8 + $0x1d8] sm:$0xff]
  %v4996 = vld [vmem:[%s8 + $0x1e0] sm:$0xff]
  %v4997 = vld [vmem:[%s8 + $0x1e8] sm:$0xff]
  %v4998 = vld [vmem:[%s8 + $0x1f0] sm:$0xff]
  %v4999 = vld [vmem:[%s8 + $0x1f8] sm:$0xff]
  %v5000 = vld [vmem:[%s8 + $0x200] sm:$0xff]
  %v5001 = vld [vmem:[%s8 + $0x208] sm:$0xff]
  %v5002 = vld [vmem:[%s8 + $0x210] sm:$0xff]
  %v5003 = vld [vmem:[%s8 + $0x218] sm:$0xff]
  %v5004 = vld [vmem:[%s8 + $0x220] sm:$0xff]
  %v5005 = vld [vmem:[%s8 + $0x228] sm:$0xff]
  %v5006 = vld [vmem:[%s8 + $0x230] sm:$0xff]
  %v5007 = vld [vmem:[%s8 + $0x238] sm:$0xff]
  %v5008 = vld [vmem:[%s8 + $0x240] sm:$0xff]
  %v5009 = vld [vmem:[%s8 + $0x248] sm:$0xff]
  %v5010 = vld [vmem:[%s8 + $0x250] sm:$0xff]
  %v5011 = vld [vmem:[%s8 + $0x258] sm:$0xff]
  %v5012 = vld [vmem:[%s8 + $0x260] sm:$0xff]
  %v5013 = vld [vmem:[%s8 + $0x268] sm:$0xff]
  %v5014 = vld [vmem:[%s8 + $0x270] sm:$0xff]
  %v5015 = vld [vmem:[%s8 + $0x278] sm:$0xff]
  %v5016 = vld [vmem:[%s8 + $0x280] sm:$0xff]
  %v5017 = vld [vmem:[%s8 + $0x288] sm:$0xff]
  %v5018 = vld [vmem:[%s8 + $0x290] sm:$0xff]
  %v5019 = vld [vmem:[%s8 + $0x298] sm:$0xff]
  %v5020 = vld [vmem:[%s8 + $0x2a0] sm:$0xff]
  %v5021 = vld [vmem:[%s8 + $0x2a8] sm:$0xff]
  %v5022 = vld [vmem:[%s8 + $0x2b0] sm:$0xff]
  %v5023 = vld [vmem:[%s8 + $0x2b8] sm:$0xff]
  %v5024 = vld [vmem:[%s8 + $0x2c0] sm:$0xff]
  %v5025 = vld [vmem:[%s8 + $0x2c8] sm:$0xff]
  %v5026 = vld [vmem:[%s8 + $0x2d0] sm:$0xff]
  %v5027 = vld [vmem:[%s8 + $0x2d8] sm:$0xff]
  %v5028 = vld [vmem:[%s8 + $0x2e0] sm:$0xff]
  %v5029 = vld [vmem:[%s8 + $0x2e8] sm:$0xff]
  %v5030 = vld [vmem:[%s8 + $0x2f0] sm:$0xff]
  %v5031 = vld [vmem:[%s8 + $0x2f8] sm:$0xff]
  %v5032 = vld [vmem:[%s8 + $0x300] sm:$0xff]
  %v5033 = vld [vmem:[%s8 + $0x308] sm:$0xff]
  %v5034 = vld [vmem:[%s8 + $0x310] sm:$0xff]
  %v5035 = vld [vmem:[%s8 + $0x318] sm:$0xff]
  %v5036 = vld [vmem:[%s8 + $0x320] sm:$0xff]
  %v5037 = vld [vmem:[%s8 + $0x328] sm:$0xff]
  %v5038 = vld [vmem:[%s8 + $0x330] sm:$0xff]
  %v5039 = vld [vmem:[%s8 + $0x338] sm:$0xff]
  %v5040 = vld [vmem:[%s8 + $0x340] sm:$0xff]
  %v5041 = vld [vmem:[%s8 + $0x348] sm:$0xff]
  %v5042 = vld [vmem:[%s8 + $0x350] sm:$0xff]
  %v5043 = vld [vmem:[%s8 + $0x358] sm:$0xff]
  %v5044 = vld [vmem:[%s8 + $0x360] sm:$0xff]
  %v5045 = vld [vmem:[%s8 + $0x368] sm:$0xff]
  %v5046 = vld [vmem:[%s8 + $0x370] sm:$0xff]
  %v5047 = vld [vmem:[%s8 + $0x378] sm:$0xff]
  %v5048 = vld [vmem:[%s8 + $0x380] sm:$0xff]
  %v5049 = vld [vmem:[%s8 + $0x388] sm:$0xff]
  %v5050 = vld [vmem:[%s8 + $0x390] sm:$0xff]
  %v5051 = vld [vmem:[%s8 + $0x398] sm:$0xff]
  %v5052 = vld [vmem:[%s8 + $0x3a0] sm:$0xff]
  %v5053 = vld [vmem:[%s8 + $0x3a8] sm:$0xff]
  %v5054 = vld [vmem:[%s8 + $0x3b0] sm:$0xff]
  %v5055 = vld [vmem:[%s8 + $0x3b8] sm:$0xff]
  %v5056 = vld [vmem:[%s8 + $0x3c0] sm:$0xff]
  %v5057 = vld [vmem:[%s8 + $0x3c8] sm:$0xff]
  %v5058 = vld [vmem:[%s8 + $0x3d0] sm:$0xff]
  %v5059 = vld [vmem:[%s8 + $0x3d8] sm:$0xff]
  %v5060 = vld [vmem:[%s8 + $0x3e0] sm:$0xff]
  %v5061 = vld [vmem:[%s8 + $0x3e8] sm:$0xff]
  %v5062 = vld [vmem:[%s8 + $0x3f0] sm:$0xff]
  %v5063 = vld [vmem:[%s8 + $0x3f8] sm:$0xff]
  %v5064 = vld [vmem:[%s8 + $0x400] sm:$0xff]
  %v5065 = vld [vmem:[%s8 + $0x408] sm:$0xff]
  %v5066 = vld [vmem:[%s8 + $0x410] sm:$0xff]
  %v5067 = vld [vmem:[%s8 + $0x418] sm:$0xff]
  %v5068 = vld [vmem:[%s8 + $0x420] sm:$0xff]
  %v5069 = vld [vmem:[%s8 + $0x428] sm:$0xff]
  %v5070 = vld [vmem:[%s8 + $0x430] sm:$0xff]
  %v5071 = vld [vmem:[%s8 + $0x438] sm:$0xff]
  %v5072 = vld [vmem:[%s8 + $0x440] sm:$0xff]
  %v5073 = vld [vmem:[%s8 + $0x448] sm:$0xff]
  %v5074 = vld [vmem:[%s8 + $0x450] sm:$0xff]
  %v5075 = vld [vmem:[%s8 + $0x458] sm:$0xff]
  %v5076 = vld [vmem:[%s8 + $0x460] sm:$0xff]
  %v5077 = vld [vmem:[%s8 + $0x468] sm:$0xff]
  %v5078 = vld [vmem:[%s8 + $0x470] sm:$0xff]
  %v5079 = vld [vmem:[%s8 + $0x478] sm:$0xff]
  %v5080 = vld [vmem:[%s8 + $0x480] sm:$0xff]
  %v5081 = vld [vmem:[%s8 + $0x488] sm:$0xff]
  %v5082 = vld [vmem:[%s8 + $0x490] sm:$0xff]
  %v5083 = vld [vmem:[%s8 + $0x498] sm:$0xff]
  %v5084 = vld [vmem:[%s8 + $0x4a0] sm:$0xff]
  %v5085 = vld [vmem:[%s8 + $0x4a8] sm:$0xff]
  %v5086 = vld [vmem:[%s8 + $0x4b0] sm:$0xff]
  %v5087 = vld [vmem:[%s8 + $0x4b8] sm:$0xff]
  %v5088 = vld [vmem:[%s8 + $0x4c0] sm:$0xff]
  %v5089 = vld [vmem:[%s8 + $0x4c8] sm:$0xff]
  %v5090 = vld [vmem:[%s8 + $0x4d0] sm:$0xff]
  %v5091 = vld [vmem:[%s8 + $0x4d8] sm:$0xff]
  %v5092 = vld [vmem:[%s8 + $0x4e0] sm:$0xff]
  %v5093 = vld [vmem:[%s8 + $0x4e8] sm:$0xff]
  %v5094 = vld [vmem:[%s8 + $0x4f0] sm:$0xff]
  %v5095 = vld [vmem:[%s8 + $0x4f8] sm:$0xff]
  %v5096 = vld [vmem:[%s8 + $0x500] sm:$0xff]
  %v5097 = vld [vmem:[%s8 + $0x508] sm:$0xff]
  %v5098 = vld [vmem:[%s8 + $0x510] sm:$0xff]
  %v5099 = vld [vmem:[%s8 + $0x518] sm:$0xff]
  %v5100 = vld [vmem:[%s8 + $0x520] sm:$0xff]
  %v5101 = vld [vmem:[%s8 + $0x528] sm:$0xff]
  %v5102 = vld [vmem:[%s8 + $0x530] sm:$0xff]
  %v5103 = vld [vmem:[%s8 + $0x538] sm:$0xff]
  %v5104 = vld [vmem:[%s8 + $0x540] sm:$0xff]
  %v5105 = vld [vmem:[%s8 + $0x548] sm:$0xff]
  %v5106 = vld [vmem:[%s8 + $0x550] sm:$0xff]
  %v5107 = vld [vmem:[%s8 + $0x558] sm:$0xff]
  %v5108 = vld [vmem:[%s8 + $0x560] sm:$0xff]
  %v5109 = vld [vmem:[%s8 + $0x568] sm:$0xff]
  %v5110 = vld [vmem:[%s8 + $0x570] sm:$0xff]
  %v5111 = vld [vmem:[%s8 + $0x578] sm:$0xff]
  %v5112 = vld [vmem:[%s8 + $0x580] sm:$0xff]
  %v5113 = vld [vmem:[%s8 + $0x588] sm:$0xff]
  %v5114 = vld [vmem:[%s8 + $0x590] sm:$0xff]
  %v5115 = vld [vmem:[%s8 + $0x598] sm:$0xff]
  %v5116 = vld [vmem:[%s8 + $0x5a0] sm:$0xff]
  %v5117 = vld [vmem:[%s8 + $0x5a8] sm:$0xff]
  %v5118 = vld [vmem:[%s8 + $0x5b0] sm:$0xff]
  %v5119 = vld [vmem:[%s8 + $0x5b8] sm:$0xff]
  %v5120 = vld [vmem:[%s8 + $0x5c0] sm:$0xff]
  %v5121 = vld [vmem:[%s8 + $0x5c8] sm:$0xff]
  %v5122 = vld [vmem:[%s8 + $0x5d0] sm:$0xff]
  %v5123 = vld [vmem:[%s8 + $0x5d8] sm:$0xff]
  %v5124 = vld [vmem:[%s8 + $0x5e0] sm:$0xff]
  %v5125 = vld [vmem:[%s8 + $0x5e8] sm:$0xff]
  %v5126 = vld [vmem:[%s8 + $0x5f0] sm:$0xff]
  %v5127 = vld [vmem:[%s8 + $0x5f8] sm:$0xff]
  %v5128 = vld [vmem:[%s8 + $0x600] sm:$0xff]
  %v5129 = vld [vmem:[%s9] sm:$0x3]
  %v5131 = vlaneseq
  %v5132 = vshrl.u32 %v5131, 7
  %v5133 = vsub.s32 0, %v5132
  %v5134 = vrot.slane %v5129, %v5133
  %v5135 = vlaneseq
  %v5136 = vshrl.u32 %v5135, 7
  %v5137 = vsub.s32 1, %v5136
  %v5138 = vrot.slane %v5129, %v5137
  %v5334 = vunpack.c.l.b16 %v4936
  %v5335 = vunpack.c.h.b16 %v4936
  %v5336 = vunpack.c.l.b16 %v4937
  %v5337 = vunpack.c.h.b16 %v4937
  %v5338 = vunpack.c.l.b16 %v4938
  %v5339 = vunpack.c.h.b16 %v4938
  %v5340 = vunpack.c.l.b16 %v4939
  %v5341 = vunpack.c.h.b16 %v4939
  %v5342 = vunpack.c.l.b16 %v4940
  %v5343 = vunpack.c.h.b16 %v4940
  %v5344 = vunpack.c.l.b16 %v4941
  %v5345 = vunpack.c.h.b16 %v4941
  %v5346 = vunpack.c.l.b16 %v4942
  %v5347 = vunpack.c.h.b16 %v4942
  %v5348 = vunpack.c.l.b16 %v4943
  %v5349 = vunpack.c.h.b16 %v4943
  %v5350 = vunpack.c.l.b16 %v4944
  %v5351 = vunpack.c.h.b16 %v4944
  %v5352 = vunpack.c.l.b16 %v4945
  %v5353 = vunpack.c.h.b16 %v4945
  %v5354 = vunpack.c.l.b16 %v4946
  %v5355 = vunpack.c.h.b16 %v4946
  %v5356 = vunpack.c.l.b16 %v4947
  %v5357 = vunpack.c.h.b16 %v4947
  %v5358 = vunpack.c.l.b16 %v4948
  %v5359 = vunpack.c.h.b16 %v4948
  %v5360 = vunpack.c.l.b16 %v4949
  %v5361 = vunpack.c.h.b16 %v4949
  %v5362 = vunpack.c.l.b16 %v4950
  %v5363 = vunpack.c.h.b16 %v4950
  %v5364 = vunpack.c.l.b16 %v4951
  %v5365 = vunpack.c.h.b16 %v4951
  %v5366 = vunpack.c.l.b16 %v4952
  %v5367 = vunpack.c.h.b16 %v4952
  %v5368 = vunpack.c.l.b16 %v4953
  %v5369 = vunpack.c.h.b16 %v4953
  %v5370 = vunpack.c.l.b16 %v4954
  %v5371 = vunpack.c.h.b16 %v4954
  %v5372 = vunpack.c.l.b16 %v4955
  %v5373 = vunpack.c.h.b16 %v4955
  %v5374 = vunpack.c.l.b16 %v4956
  %v5375 = vunpack.c.h.b16 %v4956
  %v5376 = vunpack.c.l.b16 %v4957
  %v5377 = vunpack.c.h.b16 %v4957
  %v5378 = vunpack.c.l.b16 %v4958
  %v5379 = vunpack.c.h.b16 %v4958
  %v5380 = vunpack.c.l.b16 %v4959
  %v5381 = vunpack.c.h.b16 %v4959
  %v5382 = vunpack.c.l.b16 %v4960
  %v5383 = vunpack.c.h.b16 %v4960
  %v5384 = vunpack.c.l.b16 %v4961
  %v5385 = vunpack.c.h.b16 %v4961
  %v5386 = vunpack.c.l.b16 %v4962
  %v5387 = vunpack.c.h.b16 %v4962
  %v5388 = vunpack.c.l.b16 %v4963
  %v5389 = vunpack.c.h.b16 %v4963
  %v5390 = vunpack.c.l.b16 %v4964
  %v5391 = vunpack.c.h.b16 %v4964
  %v5392 = vunpack.c.l.b16 %v4965
  %v5393 = vunpack.c.h.b16 %v4965
  %v5394 = vunpack.c.l.b16 %v4966
  %v5395 = vunpack.c.h.b16 %v4966
  %v5396 = vunpack.c.l.b16 %v4967
  %v5397 = vunpack.c.h.b16 %v4967
  %v5398 = vunpack.c.l.b16 %v4968
  %v5399 = vunpack.c.h.b16 %v4968
  %v5400 = vunpack.c.l.b16 %v4969
  %v5401 = vunpack.c.h.b16 %v4969
  %v5402 = vunpack.c.l.b16 %v4970
  %v5403 = vunpack.c.h.b16 %v4970
  %v5404 = vunpack.c.l.b16 %v4971
  %v5405 = vunpack.c.h.b16 %v4971
  %v5406 = vunpack.c.l.b16 %v4972
  %v5407 = vunpack.c.h.b16 %v4972
  %v5408 = vunpack.c.l.b16 %v4973
  %v5409 = vunpack.c.h.b16 %v4973
  %v5410 = vunpack.c.l.b16 %v4974
  %v5411 = vunpack.c.h.b16 %v4974
  %v5412 = vunpack.c.l.b16 %v4975
  %v5413 = vunpack.c.h.b16 %v4975
  %v5414 = vunpack.c.l.b16 %v4976
  %v5415 = vunpack.c.h.b16 %v4976
  %v5416 = vunpack.c.l.b16 %v4977
  %v5417 = vunpack.c.h.b16 %v4977
  %v5418 = vunpack.c.l.b16 %v4978
  %v5419 = vunpack.c.h.b16 %v4978
  %v5420 = vunpack.c.l.b16 %v4979
  %v5421 = vunpack.c.h.b16 %v4979
  %v5422 = vunpack.c.l.b16 %v4980
  %v5423 = vunpack.c.h.b16 %v4980
  %v5424 = vunpack.c.l.b16 %v4981
  %v5425 = vunpack.c.h.b16 %v4981
  %v5426 = vunpack.c.l.b16 %v4982
  %v5427 = vunpack.c.h.b16 %v4982
  %v5428 = vunpack.c.l.b16 %v4983
  %v5429 = vunpack.c.h.b16 %v4983
  %v5430 = vunpack.c.l.b16 %v4984
  %v5431 = vunpack.c.h.b16 %v4984
  %v5432 = vunpack.c.l.b16 %v4985
  %v5433 = vunpack.c.h.b16 %v4985
  %v5434 = vunpack.c.l.b16 %v4986
  %v5435 = vunpack.c.h.b16 %v4986
  %v5436 = vunpack.c.l.b16 %v4987
  %v5437 = vunpack.c.h.b16 %v4987
  %v5438 = vunpack.c.l.b16 %v4988
  %v5439 = vunpack.c.h.b16 %v4988
  %v5440 = vunpack.c.l.b16 %v4989
  %v5441 = vunpack.c.h.b16 %v4989
  %v5442 = vunpack.c.l.b16 %v4990
  %v5443 = vunpack.c.h.b16 %v4990
  %v5444 = vunpack.c.l.b16 %v4991
  %v5445 = vunpack.c.h.b16 %v4991
  %v5446 = vunpack.c.l.b16 %v4992
  %v5447 = vunpack.c.h.b16 %v4992
  %v5448 = vunpack.c.l.b16 %v4993
  %v5449 = vunpack.c.h.b16 %v4993
  %v5450 = vunpack.c.l.b16 %v4994
  %v5451 = vunpack.c.h.b16 %v4994
  %v5452 = vunpack.c.l.b16 %v4995
  %v5453 = vunpack.c.h.b16 %v4995
  %v5454 = vunpack.c.l.b16 %v4996
  %v5455 = vunpack.c.h.b16 %v4996
  %v5456 = vunpack.c.l.b16 %v4997
  %v5457 = vunpack.c.h.b16 %v4997
  %v5458 = vunpack.c.l.b16 %v4998
  %v5459 = vunpack.c.h.b16 %v4998
  %v5460 = vunpack.c.l.b16 %v4999
  %v5461 = vunpack.c.h.b16 %v4999
  %v5462 = vunpack.c.l.b16 %v5000
  %v5463 = vunpack.c.h.b16 %v5000
  %v5464 = vunpack.c.l.b16 %v5001
  %v5465 = vunpack.c.h.b16 %v5001
  %v5466 = vunpack.c.l.b16 %v5002
  %v5467 = vunpack.c.h.b16 %v5002
  %v5468 = vunpack.c.l.b16 %v5003
  %v5469 = vunpack.c.h.b16 %v5003
  %v5470 = vunpack.c.l.b16 %v5004
  %v5471 = vunpack.c.h.b16 %v5004
  %v5472 = vunpack.c.l.b16 %v5005
  %v5473 = vunpack.c.h.b16 %v5005
  %v5474 = vunpack.c.l.b16 %v5006
  %v5475 = vunpack.c.h.b16 %v5006
  %v5476 = vunpack.c.l.b16 %v5007
  %v5477 = vunpack.c.h.b16 %v5007
  %v5478 = vunpack.c.l.b16 %v5008
  %v5479 = vunpack.c.h.b16 %v5008
  %v5480 = vunpack.c.l.b16 %v5009
  %v5481 = vunpack.c.h.b16 %v5009
  %v5482 = vunpack.c.l.b16 %v5010
  %v5483 = vunpack.c.h.b16 %v5010
  %v5484 = vunpack.c.l.b16 %v5011
  %v5485 = vunpack.c.h.b16 %v5011
  %v5486 = vunpack.c.l.b16 %v5012
  %v5487 = vunpack.c.h.b16 %v5012
  %v5488 = vunpack.c.l.b16 %v5013
  %v5489 = vunpack.c.h.b16 %v5013
  %v5490 = vunpack.c.l.b16 %v5014
  %v5491 = vunpack.c.h.b16 %v5014
  %v5492 = vunpack.c.l.b16 %v5015
  %v5493 = vunpack.c.h.b16 %v5015
  %v5494 = vunpack.c.l.b16 %v5016
  %v5495 = vunpack.c.h.b16 %v5016
  %v5496 = vunpack.c.l.b16 %v5017
  %v5497 = vunpack.c.h.b16 %v5017
  %v5498 = vunpack.c.l.b16 %v5018
  %v5499 = vunpack.c.h.b16 %v5018
  %v5500 = vunpack.c.l.b16 %v5019
  %v5501 = vunpack.c.h.b16 %v5019
  %v5502 = vunpack.c.l.b16 %v5020
  %v5503 = vunpack.c.h.b16 %v5020
  %v5504 = vunpack.c.l.b16 %v5021
  %v5505 = vunpack.c.h.b16 %v5021
  %v5506 = vunpack.c.l.b16 %v5022
  %v5507 = vunpack.c.h.b16 %v5022
  %v5508 = vunpack.c.l.b16 %v5023
  %v5509 = vunpack.c.h.b16 %v5023
  %v5510 = vunpack.c.l.b16 %v5024
  %v5511 = vunpack.c.h.b16 %v5024
  %v5512 = vunpack.c.l.b16 %v5025
  %v5513 = vunpack.c.h.b16 %v5025
  %v5514 = vunpack.c.l.b16 %v5026
  %v5515 = vunpack.c.h.b16 %v5026
  %v5516 = vunpack.c.l.b16 %v5027
  %v5517 = vunpack.c.h.b16 %v5027
  %v5518 = vunpack.c.l.b16 %v5028
  %v5519 = vunpack.c.h.b16 %v5028
  %v5520 = vunpack.c.l.b16 %v5029
  %v5521 = vunpack.c.h.b16 %v5029
  %v5522 = vunpack.c.l.b16 %v5030
  %v5523 = vunpack.c.h.b16 %v5030
  %v5524 = vunpack.c.l.b16 %v5031
  %v5525 = vunpack.c.h.b16 %v5031
  %v5526 = vunpack.c.l.b16 %v5032
  %v5527 = vunpack.c.h.b16 %v5032
  %v5528 = vunpack.c.l.b16 %v5033
  %v5529 = vunpack.c.h.b16 %v5033
  %v5530 = vunpack.c.l.b16 %v5034
  %v5531 = vunpack.c.h.b16 %v5034
  %v5532 = vunpack.c.l.b16 %v5035
  %v5533 = vunpack.c.h.b16 %v5035
  %v5534 = vunpack.c.l.b16 %v5036
  %v5535 = vunpack.c.h.b16 %v5036
  %v5536 = vunpack.c.l.b16 %v5037
  %v5537 = vunpack.c.h.b16 %v5037
  %v5538 = vunpack.c.l.b16 %v5038
  %v5539 = vunpack.c.h.b16 %v5038
  %v5540 = vunpack.c.l.b16 %v5039
  %v5541 = vunpack.c.h.b16 %v5039
  %v5542 = vunpack.c.l.b16 %v5040
  %v5543 = vunpack.c.h.b16 %v5040
  %v5544 = vunpack.c.l.b16 %v5041
  %v5545 = vunpack.c.h.b16 %v5041
  %v5546 = vunpack.c.l.b16 %v5042
  %v5547 = vunpack.c.h.b16 %v5042
  %v5548 = vunpack.c.l.b16 %v5043
  %v5549 = vunpack.c.h.b16 %v5043
  %v5550 = vunpack.c.l.b16 %v5044
  %v5551 = vunpack.c.h.b16 %v5044
  %v5552 = vunpack.c.l.b16 %v5045
  %v5553 = vunpack.c.h.b16 %v5045
  %v5554 = vunpack.c.l.b16 %v5046
  %v5555 = vunpack.c.h.b16 %v5046
  %v5556 = vunpack.c.l.b16 %v5047
  %v5557 = vunpack.c.h.b16 %v5047
  %v5558 = vunpack.c.l.b16 %v5048
  %v5559 = vunpack.c.h.b16 %v5048
  %v5560 = vunpack.c.l.b16 %v5049
  %v5561 = vunpack.c.h.b16 %v5049
  %v5562 = vunpack.c.l.b16 %v5050
  %v5563 = vunpack.c.h.b16 %v5050
  %v5564 = vunpack.c.l.b16 %v5051
  %v5565 = vunpack.c.h.b16 %v5051
  %v5566 = vunpack.c.l.b16 %v5052
  %v5567 = vunpack.c.h.b16 %v5052
  %v5568 = vunpack.c.l.b16 %v5053
  %v5569 = vunpack.c.h.b16 %v5053
  %v5570 = vunpack.c.l.b16 %v5054
  %v5571 = vunpack.c.h.b16 %v5054
  %v5572 = vunpack.c.l.b16 %v5055
  %v5573 = vunpack.c.h.b16 %v5055
  %v5574 = vunpack.c.l.b16 %v5056
  %v5575 = vunpack.c.h.b16 %v5056
  %v5576 = vunpack.c.l.b16 %v5057
  %v5577 = vunpack.c.h.b16 %v5057
  %v5578 = vunpack.c.l.b16 %v5058
  %v5579 = vunpack.c.h.b16 %v5058
  %v5580 = vunpack.c.l.b16 %v5059
  %v5581 = vunpack.c.h.b16 %v5059
  %v5582 = vunpack.c.l.b16 %v5060
  %v5583 = vunpack.c.h.b16 %v5060
  %v5584 = vunpack.c.l.b16 %v5061
  %v5585 = vunpack.c.h.b16 %v5061
  %v5586 = vunpack.c.l.b16 %v5062
  %v5587 = vunpack.c.h.b16 %v5062
  %v5588 = vunpack.c.l.b16 %v5063
  %v5589 = vunpack.c.h.b16 %v5063
  %v5590 = vunpack.c.l.b16 %v5064
  %v5591 = vunpack.c.h.b16 %v5064
  %v5592 = vunpack.c.l.b16 %v5065
  %v5593 = vunpack.c.h.b16 %v5065
  %v5594 = vunpack.c.l.b16 %v5066
  %v5595 = vunpack.c.h.b16 %v5066
  %v5596 = vunpack.c.l.b16 %v5067
  %v5597 = vunpack.c.h.b16 %v5067
  %v5598 = vunpack.c.l.b16 %v5068
  %v5599 = vunpack.c.h.b16 %v5068
  %v5600 = vunpack.c.l.b16 %v5069
  %v5601 = vunpack.c.h.b16 %v5069
  %v5602 = vunpack.c.l.b16 %v5070
  %v5603 = vunpack.c.h.b16 %v5070
  %v5604 = vunpack.c.l.b16 %v5071
  %v5605 = vunpack.c.h.b16 %v5071
  %v5606 = vunpack.c.l.b16 %v5072
  %v5607 = vunpack.c.h.b16 %v5072
  %v5608 = vunpack.c.l.b16 %v5073
  %v5609 = vunpack.c.h.b16 %v5073
  %v5610 = vunpack.c.l.b16 %v5074
  %v5611 = vunpack.c.h.b16 %v5074
  %v5612 = vunpack.c.l.b16 %v5075
  %v5613 = vunpack.c.h.b16 %v5075
  %v5614 = vunpack.c.l.b16 %v5076
  %v5615 = vunpack.c.h.b16 %v5076
  %v5616 = vunpack.c.l.b16 %v5077
  %v5617 = vunpack.c.h.b16 %v5077
  %v5618 = vunpack.c.l.b16 %v5078
  %v5619 = vunpack.c.h.b16 %v5078
  %v5620 = vunpack.c.l.b16 %v5079
  %v5621 = vunpack.c.h.b16 %v5079
  %v5622 = vunpack.c.l.b16 %v5080
  %v5623 = vunpack.c.h.b16 %v5080
  %v5624 = vunpack.c.l.b16 %v5081
  %v5625 = vunpack.c.h.b16 %v5081
  %v5626 = vunpack.c.l.b16 %v5082
  %v5627 = vunpack.c.h.b16 %v5082
  %v5628 = vunpack.c.l.b16 %v5083
  %v5629 = vunpack.c.h.b16 %v5083
  %v5630 = vunpack.c.l.b16 %v5084
  %v5631 = vunpack.c.h.b16 %v5084
  %v5632 = vunpack.c.l.b16 %v5085
  %v5633 = vunpack.c.h.b16 %v5085
  %v5634 = vunpack.c.l.b16 %v5086
  %v5635 = vunpack.c.h.b16 %v5086
  %v5636 = vunpack.c.l.b16 %v5087
  %v5637 = vunpack.c.h.b16 %v5087
  %v5638 = vunpack.c.l.b16 %v5088
  %v5639 = vunpack.c.h.b16 %v5088
  %v5640 = vunpack.c.l.b16 %v5089
  %v5641 = vunpack.c.h.b16 %v5089
  %v5642 = vunpack.c.l.b16 %v5090
  %v5643 = vunpack.c.h.b16 %v5090
  %v5644 = vunpack.c.l.b16 %v5091
  %v5645 = vunpack.c.h.b16 %v5091
  %v5646 = vunpack.c.l.b16 %v5092
  %v5647 = vunpack.c.h.b16 %v5092
  %v5648 = vunpack.c.l.b16 %v5093
  %v5649 = vunpack.c.h.b16 %v5093
  %v5650 = vunpack.c.l.b16 %v5094
  %v5651 = vunpack.c.h.b16 %v5094
  %v5652 = vunpack.c.l.b16 %v5095
  %v5653 = vunpack.c.h.b16 %v5095
  %v5654 = vunpack.c.l.b16 %v5096
  %v5655 = vunpack.c.h.b16 %v5096
  %v5656 = vunpack.c.l.b16 %v5097
  %v5657 = vunpack.c.h.b16 %v5097
  %v5658 = vunpack.c.l.b16 %v5098
  %v5659 = vunpack.c.h.b16 %v5098
  %v5660 = vunpack.c.l.b16 %v5099
  %v5661 = vunpack.c.h.b16 %v5099
  %v5662 = vunpack.c.l.b16 %v5100
  %v5663 = vunpack.c.h.b16 %v5100
  %v5664 = vunpack.c.l.b16 %v5101
  %v5665 = vunpack.c.h.b16 %v5101
  %v5666 = vunpack.c.l.b16 %v5102
  %v5667 = vunpack.c.h.b16 %v5102
  %v5668 = vunpack.c.l.b16 %v5103
  %v5669 = vunpack.c.h.b16 %v5103
  %v5670 = vunpack.c.l.b16 %v5104
  %v5671 = vunpack.c.h.b16 %v5104
  %v5672 = vunpack.c.l.b16 %v5105
  %v5673 = vunpack.c.h.b16 %v5105
  %v5674 = vunpack.c.l.b16 %v5106
  %v5675 = vunpack.c.h.b16 %v5106
  %v5676 = vunpack.c.l.b16 %v5107
  %v5677 = vunpack.c.h.b16 %v5107
  %v5678 = vunpack.c.l.b16 %v5108
  %v5679 = vunpack.c.h.b16 %v5108
  %v5680 = vunpack.c.l.b16 %v5109
  %v5681 = vunpack.c.h.b16 %v5109
  %v5682 = vunpack.c.l.b16 %v5110
  %v5683 = vunpack.c.h.b16 %v5110
  %v5684 = vunpack.c.l.b16 %v5111
  %v5685 = vunpack.c.h.b16 %v5111
  %v5686 = vunpack.c.l.b16 %v5112
  %v5687 = vunpack.c.h.b16 %v5112
  %v5688 = vunpack.c.l.b16 %v5113
  %v5689 = vunpack.c.h.b16 %v5113
  %v5690 = vunpack.c.l.b16 %v5114
  %v5691 = vunpack.c.h.b16 %v5114
  %v5692 = vunpack.c.l.b16 %v5115
  %v5693 = vunpack.c.h.b16 %v5115
  %v5694 = vunpack.c.l.b16 %v5116
  %v5695 = vunpack.c.h.b16 %v5116
  %v5696 = vunpack.c.l.b16 %v5117
  %v5697 = vunpack.c.h.b16 %v5117
  %v5698 = vunpack.c.l.b16 %v5118
  %v5699 = vunpack.c.h.b16 %v5118
  %v5700 = vunpack.c.l.b16 %v5119
  %v5701 = vunpack.c.h.b16 %v5119
  %v5702 = vunpack.c.l.b16 %v5120
  %v5703 = vunpack.c.h.b16 %v5120
  %v5704 = vunpack.c.l.b16 %v5121
  %v5705 = vunpack.c.h.b16 %v5121
  %v5706 = vunpack.c.l.b16 %v5122
  %v5707 = vunpack.c.h.b16 %v5122
  %v5708 = vunpack.c.l.b16 %v5123
  %v5709 = vunpack.c.h.b16 %v5123
  %v5710 = vunpack.c.l.b16 %v5124
  %v5711 = vunpack.c.h.b16 %v5124
  %v5712 = vunpack.c.l.b16 %v5125
  %v5713 = vunpack.c.h.b16 %v5125
  %v5714 = vunpack.c.l.b16 %v5126
  %v5715 = vunpack.c.h.b16 %v5126
  %v5716 = vunpack.c.l.b16 %v5127
  %v5717 = vunpack.c.h.b16 %v5127
  %v5718 = vunpack.c.l.b16 %v5128
  %v5719 = vunpack.c.h.b16 %v5128
  %v5720 = vpack.c.b16 %v5336, %v5334
  %v5721 = vpack.c.b16 %v5337, %v5335
  %v5722 = vpack.c.b16 %v5340, %v5338
  %v5723 = vpack.c.b16 %v5341, %v5339
  %v5724 = vpack.c.b16 %v5344, %v5342
  %v5725 = vpack.c.b16 %v5345, %v5343
  %v5726 = vpack.c.b16 %v5348, %v5346
  %v5727 = vpack.c.b16 %v5349, %v5347
  %v5728 = vpack.c.b16 %v5352, %v5350
  %v5729 = vpack.c.b16 %v5353, %v5351
  %v5730 = vpack.c.b16 %v5356, %v5354
  %v5731 = vpack.c.b16 %v5357, %v5355
  %v5732 = vpack.c.b16 %v5360, %v5358
  %v5733 = vpack.c.b16 %v5361, %v5359
  %v5734 = vpack.c.b16 %v5364, %v5362
  %v5735 = vpack.c.b16 %v5365, %v5363
  %v5736 = vpack.c.b16 %v5368, %v5366
  %v5737 = vpack.c.b16 %v5369, %v5367
  %v5738 = vpack.c.b16 %v5372, %v5370
  %v5739 = vpack.c.b16 %v5373, %v5371
  %v5740 = vpack.c.b16 %v5376, %v5374
  %v5741 = vpack.c.b16 %v5377, %v5375
  %v5742 = vpack.c.b16 %v5380, %v5378
  %v5743 = vpack.c.b16 %v5381, %v5379
  %v5744 = vpack.c.b16 %v5384, %v5382
  %v5745 = vpack.c.b16 %v5385, %v5383
  %v5746 = vpack.c.b16 %v5388, %v5386
  %v5747 = vpack.c.b16 %v5389, %v5387
  %v5748 = vpack.c.b16 %v5392, %v5390
  %v5749 = vpack.c.b16 %v5393, %v5391
  %v5750 = vpack.c.b16 %v5396, %v5394
  %v5751 = vpack.c.b16 %v5397, %v5395
  %v5752 = vpack.c.b16 %v5400, %v5398
  %v5753 = vpack.c.b16 %v5401, %v5399
  %v5754 = vpack.c.b16 %v5404, %v5402
  %v5755 = vpack.c.b16 %v5405, %v5403
  %v5756 = vpack.c.b16 %v5408, %v5406
  %v5757 = vpack.c.b16 %v5409, %v5407
  %v5758 = vpack.c.b16 %v5412, %v5410
  %v5759 = vpack.c.b16 %v5413, %v5411
  %v5760 = vpack.c.b16 %v5416, %v5414
  %v5761 = vpack.c.b16 %v5417, %v5415
  %v5762 = vpack.c.b16 %v5420, %v5418
  %v5763 = vpack.c.b16 %v5421, %v5419
  %v5764 = vpack.c.b16 %v5424, %v5422
  %v5765 = vpack.c.b16 %v5425, %v5423
  %v5766 = vpack.c.b16 %v5428, %v5426
  %v5767 = vpack.c.b16 %v5429, %v5427
  %v5768 = vpack.c.b16 %v5432, %v5430
  %v5769 = vpack.c.b16 %v5433, %v5431
  %v5770 = vpack.c.b16 %v5436, %v5434
  %v5771 = vpack.c.b16 %v5437, %v5435
  %v5772 = vpack.c.b16 %v5440, %v5438
  %v5773 = vpack.c.b16 %v5441, %v5439
  %v5774 = vpack.c.b16 %v5444, %v5442
  %v5775 = vpack.c.b16 %v5445, %v5443
  %v5776 = vpack.c.b16 %v5448, %v5446
  %v5777 = vpack.c.b16 %v5449, %v5447
  %v5778 = vpack.c.b16 %v5452, %v5450
  %v5779 = vpack.c.b16 %v5453, %v5451
  %v5780 = vpack.c.b16 %v5456, %v5454
  %v5781 = vpack.c.b16 %v5457, %v5455
  %v5782 = vpack.c.b16 %v5460, %v5458
  %v5783 = vpack.c.b16 %v5461, %v5459
  %v5784 = vpack.c.b16 %v5464, %v5462
  %v5785 = vpack.c.b16 %v5465, %v5463
  %v5786 = vpack.c.b16 %v5468, %v5466
  %v5787 = vpack.c.b16 %v5469, %v5467
  %v5788 = vpack.c.b16 %v5472, %v5470
  %v5789 = vpack.c.b16 %v5473, %v5471
  %v5790 = vpack.c.b16 %v5476, %v5474
  %v5791 = vpack.c.b16 %v5477, %v5475
  %v5792 = vpack.c.b16 %v5480, %v5478
  %v5793 = vpack.c.b16 %v5481, %v5479
  %v5794 = vpack.c.b16 %v5484, %v5482
  %v5795 = vpack.c.b16 %v5485, %v5483
  %v5796 = vpack.c.b16 %v5488, %v5486
  %v5797 = vpack.c.b16 %v5489, %v5487
  %v5798 = vpack.c.b16 %v5492, %v5490
  %v5799 = vpack.c.b16 %v5493, %v5491
  %v5800 = vpack.c.b16 %v5496, %v5494
  %v5801 = vpack.c.b16 %v5497, %v5495
  %v5802 = vpack.c.b16 %v5500, %v5498
  %v5803 = vpack.c.b16 %v5501, %v5499
  %v5804 = vpack.c.b16 %v5504, %v5502
  %v5805 = vpack.c.b16 %v5505, %v5503
  %v5806 = vpack.c.b16 %v5508, %v5506
  %v5807 = vpack.c.b16 %v5509, %v5507
  %v5808 = vpack.c.b16 %v5512, %v5510
  %v5809 = vpack.c.b16 %v5513, %v5511
  %v5810 = vpack.c.b16 %v5516, %v5514
  %v5811 = vpack.c.b16 %v5517, %v5515
  %v5812 = vpack.c.b16 %v5520, %v5518
  %v5813 = vpack.c.b16 %v5521, %v5519
  %v5814 = vpack.c.b16 %v5524, %v5522
  %v5815 = vpack.c.b16 %v5525, %v5523
  %v5816 = vpack.c.b16 %v5528, %v5526
  %v5817 = vpack.c.b16 %v5529, %v5527
  %v5818 = vpack.c.b16 %v5532, %v5530
  %v5819 = vpack.c.b16 %v5533, %v5531
  %v5820 = vpack.c.b16 %v5536, %v5534
  %v5821 = vpack.c.b16 %v5537, %v5535
  %v5822 = vpack.c.b16 %v5540, %v5538
  %v5823 = vpack.c.b16 %v5541, %v5539
  %v5824 = vpack.c.b16 %v5544, %v5542
  %v5825 = vpack.c.b16 %v5545, %v5543
  %v5826 = vpack.c.b16 %v5548, %v5546
  %v5827 = vpack.c.b16 %v5549, %v5547
  %v5828 = vpack.c.b16 %v5552, %v5550
  %v5829 = vpack.c.b16 %v5553, %v5551
  %v5830 = vpack.c.b16 %v5556, %v5554
  %v5831 = vpack.c.b16 %v5557, %v5555
  %v5832 = vpack.c.b16 %v5560, %v5558
  %v5833 = vpack.c.b16 %v5561, %v5559
  %v5834 = vpack.c.b16 %v5564, %v5562
  %v5835 = vpack.c.b16 %v5565, %v5563
  %v5836 = vpack.c.b16 %v5568, %v5566
  %v5837 = vpack.c.b16 %v5569, %v5567
  %v5838 = vpack.c.b16 %v5572, %v5570
  %v5839 = vpack.c.b16 %v5573, %v5571
  %v5840 = vpack.c.b16 %v5576, %v5574
  %v5841 = vpack.c.b16 %v5577, %v5575
  %v5842 = vpack.c.b16 %v5580, %v5578
  %v5843 = vpack.c.b16 %v5581, %v5579
  %v5844 = vpack.c.b16 %v5584, %v5582
  %v5845 = vpack.c.b16 %v5585, %v5583
  %v5846 = vpack.c.b16 %v5588, %v5586
  %v5847 = vpack.c.b16 %v5589, %v5587
  %v5848 = vpack.c.b16 %v5592, %v5590
  %v5849 = vpack.c.b16 %v5593, %v5591
  %v5850 = vpack.c.b16 %v5596, %v5594
  %v5851 = vpack.c.b16 %v5597, %v5595
  %v5852 = vpack.c.b16 %v5600, %v5598
  %v5853 = vpack.c.b16 %v5601, %v5599
  %v5854 = vpack.c.b16 %v5604, %v5602
  %v5855 = vpack.c.b16 %v5605, %v5603
  %v5856 = vpack.c.b16 %v5608, %v5606
  %v5857 = vpack.c.b16 %v5609, %v5607
  %v5858 = vpack.c.b16 %v5612, %v5610
  %v5859 = vpack.c.b16 %v5613, %v5611
  %v5860 = vpack.c.b16 %v5616, %v5614
  %v5861 = vpack.c.b16 %v5617, %v5615
  %v5862 = vpack.c.b16 %v5620, %v5618
  %v5863 = vpack.c.b16 %v5621, %v5619
  %v5864 = vpack.c.b16 %v5624, %v5622
  %v5865 = vpack.c.b16 %v5625, %v5623
  %v5866 = vpack.c.b16 %v5628, %v5626
  %v5867 = vpack.c.b16 %v5629, %v5627
  %v5868 = vpack.c.b16 %v5632, %v5630
  %v5869 = vpack.c.b16 %v5633, %v5631
  %v5870 = vpack.c.b16 %v5636, %v5634
  %v5871 = vpack.c.b16 %v5637, %v5635
  %v5872 = vpack.c.b16 %v5640, %v5638
  %v5873 = vpack.c.b16 %v5641, %v5639
  %v5874 = vpack.c.b16 %v5644, %v5642
  %v5875 = vpack.c.b16 %v5645, %v5643
  %v5876 = vpack.c.b16 %v5648, %v5646
  %v5877 = vpack.c.b16 %v5649, %v5647
  %v5878 = vpack.c.b16 %v5652, %v5650
  %v5879 = vpack.c.b16 %v5653, %v5651
  %v5880 = vpack.c.b16 %v5656, %v5654
  %v5881 = vpack.c.b16 %v5657, %v5655
  %v5882 = vpack.c.b16 %v5660, %v5658
  %v5883 = vpack.c.b16 %v5661, %v5659
  %v5884 = vpack.c.b16 %v5664, %v5662
  %v5885 = vpack.c.b16 %v5665, %v5663
  %v5886 = vpack.c.b16 %v5668, %v5666
  %v5887 = vpack.c.b16 %v5669, %v5667
  %v5888 = vpack.c.b16 %v5672, %v5670
  %v5889 = vpack.c.b16 %v5673, %v5671
  %v5890 = vpack.c.b16 %v5676, %v5674
  %v5891 = vpack.c.b16 %v5677, %v5675
  %v5892 = vpack.c.b16 %v5680, %v5678
  %v5893 = vpack.c.b16 %v5681, %v5679
  %v5894 = vpack.c.b16 %v5684, %v5682
  %v5895 = vpack.c.b16 %v5685, %v5683
  %v5896 = vpack.c.b16 %v5688, %v5686
  %v5897 = vpack.c.b16 %v5689, %v5687
  %v5898 = vpack.c.b16 %v5692, %v5690
  %v5899 = vpack.c.b16 %v5693, %v5691
  %v5900 = vpack.c.b16 %v5696, %v5694
  %v5901 = vpack.c.b16 %v5697, %v5695
  %v5902 = vpack.c.b16 %v5700, %v5698
  %v5903 = vpack.c.b16 %v5701, %v5699
  %v5904 = vpack.c.b16 %v5704, %v5702
  %v5905 = vpack.c.b16 %v5705, %v5703
  %v5906 = vpack.c.b16 %v5708, %v5706
  %v5907 = vpack.c.b16 %v5709, %v5707
  %v5908 = vpack.c.b16 %v5712, %v5710
  %v5909 = vpack.c.b16 %v5713, %v5711
  %v5910 = vpack.c.b16 %v5716, %v5714
  %v5911 = vpack.c.b16 %v5717, %v5715
  %v5912 = vpack.c.b16 %v5718, %v5718
  %v5913 = vpack.c.b16 %v5719, %v5719
  %vm6106 = vcmask 64512
  %v6108 = vsel %vm6106, %v4935, 0
  %v6111 = vsel %vm1114, %v5912, 0
  %v6114 = vsel %vm1114, %v5913, 0
  %6116 = vmatprep.subr.bf16.mxu0 %v5735
  %6117 = vmatpush1.bf16.msra.mxu0 %v5734
  %6118 = vmatprep.subr.bf16.mxu0 %v5733
  %6119 = vmatpush1.bf16.msra.mxu0 %v5732
  %6120 = vmatprep.subr.bf16.mxu0 %v5731
  %6121 = vmatpush1.bf16.msra.mxu0 %v5730
  %6122 = vmatprep.subr.bf16.mxu0 %v5729
  %6123 = vmatpush1.bf16.msra.mxu0 %v5728
  %6124 = vmatprep.subr.bf16.mxu0 %v5727
  %6125 = vmatpush1.bf16.msra.mxu0 %v5726
  %6126 = vmatprep.subr.bf16.mxu0 %v5725
  %6127 = vmatpush1.bf16.msra.mxu0 %v5724
  %6128 = vmatprep.subr.bf16.mxu0 %v5723
  %6129 = vmatpush1.bf16.msra.mxu0 %v5722
  %6130 = vmatprep.subr.bf16.mxu0 %v5721
  %6131 = vmatpush1.bf16.msra.mxu0 %v5720
  %6132 = vmatprep.subr.bf16.mxu0 %v5751
  %6133 = vmatpush2.bf16.msra.mxu0 %v5750
  %6134 = vmatprep.subr.bf16.mxu0 %v5749
  %6135 = vmatpush2.bf16.msra.mxu0 %v5748
  %6136 = vmatprep.subr.bf16.mxu0 %v5747
  %6137 = vmatpush2.bf16.msra.mxu0 %v5746
  %6138 = vmatprep.subr.bf16.mxu0 %v5745
  %6139 = vmatpush2.bf16.msra.mxu0 %v5744
  %6140 = vmatprep.subr.bf16.mxu0 %v5743
  %6141 = vmatpush2.bf16.msra.mxu0 %v5742
  %6142 = vmatprep.subr.bf16.mxu0 %v5741
  %6143 = vmatpush2.bf16.msra.mxu0 %v5740
  %6144 = vmatprep.subr.bf16.mxu0 %v5739
  %6145 = vmatpush2.bf16.msra.mxu0 %v5738
  %6146 = vmatprep.subr.bf16.mxu0 %v5737
  %6147 = vmatpush2.bf16.msra.mxu0 %v5736
  %6148 = vmatprep.mubr.bf16.mxu0 %v4924
  %6149 = vmatmul.mubr.bf16.gmra.mxu0 %v4923
  %v6150 = vpop.f32.mrf.mxu0
  %v6151 = vadd.f32 %v5134, %v6150
  %v6152 = vpop.f32.mrf.mxu0
  %v6153 = vadd.f32 %v5138, %v6152
  %v6154 = vpop.f32.mrf.mxu0
  %v6155 = vpop.f32.mrf.mxu0
  %6156 = vdwg.mxu0
  %6157 = vmatprep.subr.bf16.mxu0 %v5767
  %6158 = vmatpush1.bf16.msra.mxu0 %v5766
  %6159 = vmatprep.subr.bf16.mxu0 %v5765
  %6160 = vmatpush1.bf16.msra.mxu0 %v5764
  %6161 = vmatprep.subr.bf16.mxu0 %v5763
  %6162 = vmatpush1.bf16.msra.mxu0 %v5762
  %6163 = vmatprep.subr.bf16.mxu0 %v5761
  %6164 = vmatpush1.bf16.msra.mxu0 %v5760
  %6165 = vmatprep.subr.bf16.mxu0 %v5759
  %6166 = vmatpush1.bf16.msra.mxu0 %v5758
  %6167 = vmatprep.subr.bf16.mxu0 %v5757
  %6168 = vmatpush1.bf16.msra.mxu0 %v5756
  %6169 = vmatprep.subr.bf16.mxu0 %v5755
  %6170 = vmatpush1.bf16.msra.mxu0 %v5754
  %6171 = vmatprep.subr.bf16.mxu0 %v5753
  %6172 = vmatpush1.bf16.msra.mxu0 %v5752
  %6173 = vmatprep.subr.bf16.mxu0 %v5783
  %6174 = vmatpush2.bf16.msra.mxu0 %v5782
  %6175 = vmatprep.subr.bf16.mxu0 %v5781
  %6176 = vmatpush2.bf16.msra.mxu0 %v5780
  %6177 = vmatprep.subr.bf16.mxu0 %v5779
  %6178 = vmatpush2.bf16.msra.mxu0 %v5778
  %6179 = vmatprep.subr.bf16.mxu0 %v5777
  %6180 = vmatpush2.bf16.msra.mxu0 %v5776
  %6181 = vmatprep.subr.bf16.mxu0 %v5775
  %6182 = vmatpush2.bf16.msra.mxu0 %v5774
  %6183 = vmatprep.subr.bf16.mxu0 %v5773
  %6184 = vmatpush2.bf16.msra.mxu0 %v5772
  %6185 = vmatprep.subr.bf16.mxu0 %v5771
  %6186 = vmatpush2.bf16.msra.mxu0 %v5770
  %6187 = vmatprep.subr.bf16.mxu0 %v5769
  %6188 = vmatpush2.bf16.msra.mxu0 %v5768
  %6189 = vmatprep.mubr.bf16.mxu0 %v4926
  %6190 = vmatmul.mubr.bf16.gmra.mxu0 %v4925
  %v6191 = vpop.f32.mrf.mxu0
  %v6192 = vadd.f32 %v6151, %v6191
  %v6193 = vpop.f32.mrf.mxu0
  %v6194 = vadd.f32 %v6153, %v6193
  %v6195 = vpop.f32.mrf.mxu0
  %v6196 = vpop.f32.mrf.mxu0
  %6197 = vdwg.mxu0
  %6198 = vmatprep.subr.bf16.mxu0 %v5799
  %6199 = vmatpush1.bf16.msra.mxu0 %v5798
  %6200 = vmatprep.subr.bf16.mxu0 %v5797
  %6201 = vmatpush1.bf16.msra.mxu0 %v5796
  %6202 = vmatprep.subr.bf16.mxu0 %v5795
  %6203 = vmatpush1.bf16.msra.mxu0 %v5794
  %6204 = vmatprep.subr.bf16.mxu0 %v5793
  %6205 = vmatpush1.bf16.msra.mxu0 %v5792
  %6206 = vmatprep.subr.bf16.mxu0 %v5791
  %6207 = vmatpush1.bf16.msra.mxu0 %v5790
  %6208 = vmatprep.subr.bf16.mxu0 %v5789
  %6209 = vmatpush1.bf16.msra.mxu0 %v5788
  %6210 = vmatprep.subr.bf16.mxu0 %v5787
  %6211 = vmatpush1.bf16.msra.mxu0 %v5786
  %6212 = vmatprep.subr.bf16.mxu0 %v5785
  %6213 = vmatpush1.bf16.msra.mxu0 %v5784
  %6214 = vmatprep.subr.bf16.mxu0 %v5815
  %6215 = vmatpush2.bf16.msra.mxu0 %v5814
  %6216 = vmatprep.subr.bf16.mxu0 %v5813
  %6217 = vmatpush2.bf16.msra.mxu0 %v5812
  %6218 = vmatprep.subr.bf16.mxu0 %v5811
  %6219 = vmatpush2.bf16.msra.mxu0 %v5810
  %6220 = vmatprep.subr.bf16.mxu0 %v5809
  %6221 = vmatpush2.bf16.msra.mxu0 %v5808
  %6222 = vmatprep.subr.bf16.mxu0 %v5807
  %6223 = vmatpush2.bf16.msra.mxu0 %v5806
  %6224 = vmatprep.subr.bf16.mxu0 %v5805
  %6225 = vmatpush2.bf16.msra.mxu0 %v5804
  %6226 = vmatprep.subr.bf16.mxu0 %v5803
  %6227 = vmatpush2.bf16.msra.mxu0 %v5802
  %6228 = vmatprep.subr.bf16.mxu0 %v5801
  %6229 = vmatpush2.bf16.msra.mxu0 %v5800
  %6230 = vmatprep.mubr.bf16.mxu0 %v4928
  %6231 = vmatmul.mubr.bf16.gmra.mxu0 %v4927
  %v6232 = vpop.f32.mrf.mxu0
  %v6233 = vadd.f32 %v6192, %v6232
  %v6234 = vpop.f32.mrf.mxu0
  %v6235 = vadd.f32 %v6194, %v6234
  %v6236 = vpop.f32.mrf.mxu0
  %v6237 = vpop.f32.mrf.mxu0
  %6238 = vdwg.mxu0
  %6239 = vmatprep.subr.bf16.mxu0 %v5831
  %6240 = vmatpush1.bf16.msra.mxu0 %v5830
  %6241 = vmatprep.subr.bf16.mxu0 %v5829
  %6242 = vmatpush1.bf16.msra.mxu0 %v5828
  %6243 = vmatprep.subr.bf16.mxu0 %v5827
  %6244 = vmatpush1.bf16.msra.mxu0 %v5826
  %6245 = vmatprep.subr.bf16.mxu0 %v5825
  %6246 = vmatpush1.bf16.msra.mxu0 %v5824
  %6247 = vmatprep.subr.bf16.mxu0 %v5823
  %6248 = vmatpush1.bf16.msra.mxu0 %v5822
  %6249 = vmatprep.subr.bf16.mxu0 %v5821
  %6250 = vmatpush1.bf16.msra.mxu0 %v5820
  %6251 = vmatprep.subr.bf16.mxu0 %v5819
  %6252 = vmatpush1.bf16.msra.mxu0 %v5818
  %6253 = vmatprep.subr.bf16.mxu0 %v5817
  %6254 = vmatpush1.bf16.msra.mxu0 %v5816
  %6255 = vmatprep.subr.bf16.mxu0 %v5847
  %6256 = vmatpush2.bf16.msra.mxu0 %v5846
  %6257 = vmatprep.subr.bf16.mxu0 %v5845
  %6258 = vmatpush2.bf16.msra.mxu0 %v5844
  %6259 = vmatprep.subr.bf16.mxu0 %v5843
  %6260 = vmatpush2.bf16.msra.mxu0 %v5842
  %6261 = vmatprep.subr.bf16.mxu0 %v5841
  %6262 = vmatpush2.bf16.msra.mxu0 %v5840
  %6263 = vmatprep.subr.bf16.mxu0 %v5839
  %6264 = vmatpush2.bf16.msra.mxu0 %v5838
  %6265 = vmatprep.subr.bf16.mxu0 %v5837
  %6266 = vmatpush2.bf16.msra.mxu0 %v5836
  %6267 = vmatprep.subr.bf16.mxu0 %v5835
  %6268 = vmatpush2.bf16.msra.mxu0 %v5834
  %6269 = vmatprep.subr.bf16.mxu0 %v5833
  %6270 = vmatpush2.bf16.msra.mxu0 %v5832
  %6271 = vmatprep.mubr.bf16.mxu0 %v4930
  %6272 = vmatmul.mubr.bf16.gmra.mxu0 %v4929
  %v6273 = vpop.f32.mrf.mxu0
  %v6274 = vadd.f32 %v6233, %v6273
  %v6275 = vpop.f32.mrf.mxu0
  %v6276 = vadd.f32 %v6235, %v6275
  %v6277 = vpop.f32.mrf.mxu0
  %v6278 = vpop.f32.mrf.mxu0
  %6279 = vdwg.mxu0
  %6280 = vmatprep.subr.bf16.mxu0 %v5863
  %6281 = vmatpush1.bf16.msra.mxu0 %v5862
  %6282 = vmatprep.subr.bf16.mxu0 %v5861
  %6283 = vmatpush1.bf16.msra.mxu0 %v5860
  %6284 = vmatprep.subr.bf16.mxu0 %v5859
  %6285 = vmatpush1.bf16.msra.mxu0 %v5858
  %6286 = vmatprep.subr.bf16.mxu0 %v5857
  %6287 = vmatpush1.bf16.msra.mxu0 %v5856
  %6288 = vmatprep.subr.bf16.mxu0 %v5855
  %6289 = vmatpush1.bf16.msra.mxu0 %v5854
  %6290 = vmatprep.subr.bf16.mxu0 %v5853
  %6291 = vmatpush1.bf16.msra.mxu0 %v5852
  %6292 = vmatprep.subr.bf16.mxu0 %v5851
  %6293 = vmatpush1.bf16.msra.mxu0 %v5850
  %6294 = vmatprep.subr.bf16.mxu0 %v5849
  %6295 = vmatpush1.bf16.msra.mxu0 %v5848
  %6296 = vmatprep.subr.bf16.mxu0 %v5879
  %6297 = vmatpush2.bf16.msra.mxu0 %v5878
  %6298 = vmatprep.subr.bf16.mxu0 %v5877
  %6299 = vmatpush2.bf16.msra.mxu0 %v5876
  %6300 = vmatprep.subr.bf16.mxu0 %v5875
  %6301 = vmatpush2.bf16.msra.mxu0 %v5874
  %6302 = vmatprep.subr.bf16.mxu0 %v5873
  %6303 = vmatpush2.bf16.msra.mxu0 %v5872
  %6304 = vmatprep.subr.bf16.mxu0 %v5871
  %6305 = vmatpush2.bf16.msra.mxu0 %v5870
  %6306 = vmatprep.subr.bf16.mxu0 %v5869
  %6307 = vmatpush2.bf16.msra.mxu0 %v5868
  %6308 = vmatprep.subr.bf16.mxu0 %v5867
  %6309 = vmatpush2.bf16.msra.mxu0 %v5866
  %6310 = vmatprep.subr.bf16.mxu0 %v5865
  %6311 = vmatpush2.bf16.msra.mxu0 %v5864
  %6312 = vmatprep.mubr.bf16.mxu0 %v4932
  %6313 = vmatmul.mubr.bf16.gmra.mxu0 %v4931
  %v6314 = vpop.f32.mrf.mxu0
  %v6315 = vadd.f32 %v6274, %v6314
  %v6316 = vpop.f32.mrf.mxu0
  %v6317 = vadd.f32 %v6276, %v6316
  %v6318 = vpop.f32.mrf.mxu0
  %v6319 = vpop.f32.mrf.mxu0
  %6320 = vdwg.mxu0
  %6321 = vmatprep.subr.bf16.mxu0 %v5895
  %6322 = vmatpush1.bf16.msra.mxu0 %v5894
  %6323 = vmatprep.subr.bf16.mxu0 %v5893
  %6324 = vmatpush1.bf16.msra.mxu0 %v5892
  %6325 = vmatprep.subr.bf16.mxu0 %v5891
  %6326 = vmatpush1.bf16.msra.mxu0 %v5890
  %6327 = vmatprep.subr.bf16.mxu0 %v5889
  %6328 = vmatpush1.bf16.msra.mxu0 %v5888
  %6329 = vmatprep.subr.bf16.mxu0 %v5887
  %6330 = vmatpush1.bf16.msra.mxu0 %v5886
  %6331 = vmatprep.subr.bf16.mxu0 %v5885
  %6332 = vmatpush1.bf16.msra.mxu0 %v5884
  %6333 = vmatprep.subr.bf16.mxu0 %v5883
  %6334 = vmatpush1.bf16.msra.mxu0 %v5882
  %6335 = vmatprep.subr.bf16.mxu0 %v5881
  %6336 = vmatpush1.bf16.msra.mxu0 %v5880
  %6337 = vmatprep.subr.bf16.mxu0 %v5911
  %6338 = vmatpush2.bf16.msra.mxu0 %v5910
  %6339 = vmatprep.subr.bf16.mxu0 %v5909
  %6340 = vmatpush2.bf16.msra.mxu0 %v5908
  %6341 = vmatprep.subr.bf16.mxu0 %v5907
  %6342 = vmatpush2.bf16.msra.mxu0 %v5906
  %6343 = vmatprep.subr.bf16.mxu0 %v5905
  %6344 = vmatpush2.bf16.msra.mxu0 %v5904
  %6345 = vmatprep.subr.bf16.mxu0 %v5903
  %6346 = vmatpush2.bf16.msra.mxu0 %v5902
  %6347 = vmatprep.subr.bf16.mxu0 %v5901
  %6348 = vmatpush2.bf16.msra.mxu0 %v5900
  %6349 = vmatprep.subr.bf16.mxu0 %v5899
  %6350 = vmatpush2.bf16.msra.mxu0 %v5898
  %6351 = vmatprep.subr.bf16.mxu0 %v5897
  %6352 = vmatpush2.bf16.msra.mxu0 %v5896
  %6353 = vmatprep.mubr.bf16.mxu0 %v4934
  %6354 = vmatmul.mubr.bf16.gmra.mxu0 %v4933
  %v6355 = vpop.f32.mrf.mxu0
  %v6356 = vadd.f32 %v6315, %v6355
  %v6357 = vpop.f32.mrf.mxu0
  %v6358 = vadd.f32 %v6317, %v6357
  %v6359 = vpop.f32.mrf.mxu0
  %v6360 = vpop.f32.mrf.mxu0
  %6361 = vdwg.mxu0
  %6362 = vmatprep.subr.bf16.mxu0 0
  %6363 = vmatpush1.bf16.msra.mxu0 0
  %6364 = vmatprep.subr.bf16.mxu0 0
  %6365 = vmatpush1.bf16.msra.mxu0 0
  %6366 = vmatprep.subr.bf16.mxu0 0
  %6367 = vmatpush1.bf16.msra.mxu0 0
  %6368 = vmatprep.subr.bf16.mxu0 0
  %6369 = vmatpush1.bf16.msra.mxu0 0
  %6370 = vmatprep.subr.bf16.mxu0 0
  %6371 = vmatpush1.bf16.msra.mxu0 0
  %6372 = vmatprep.subr.bf16.mxu0 0
  %6373 = vmatpush1.bf16.msra.mxu0 0
  %6374 = vmatprep.subr.bf16.mxu0 0
  %6375 = vmatpush1.bf16.msra.mxu0 0
  %6376 = vmatprep.subr.bf16.mxu0 %v6114
  %6377 = vmatpush1.bf16.msra.mxu0 %v6111
  %6378 = vmatprep.subr.bf16.mxu0 0
  %6379 = vmatpush2.bf16.msra.mxu0 0
  %6380 = vmatprep.subr.bf16.mxu0 0
  %6381 = vmatpush2.bf16.msra.mxu0 0
  %6382 = vmatprep.subr.bf16.mxu0 0
  %6383 = vmatpush2.bf16.msra.mxu0 0
  %6384 = vmatprep.subr.bf16.mxu0 0
  %6385 = vmatpush2.bf16.msra.mxu0 0
  %6386 = vmatprep.subr.bf16.mxu0 0
  %6387 = vmatpush2.bf16.msra.mxu0 0
  %6388 = vmatprep.subr.bf16.mxu0 0
  %6389 = vmatpush2.bf16.msra.mxu0 0
  %6390 = vmatprep.subr.bf16.mxu0 0
  %6391 = vmatpush2.bf16.msra.mxu0 0
  %6392 = vmatprep.subr.bf16.mxu0 0
  %6393 = vmatpush2.bf16.msra.mxu0 0
  %6394 = vmatprep.mubr.bf16.mxu0 0
  %6395 = vmatmul.mubr.bf16.gmra.mxu0 %v6108
  %v6396 = vpop.f32.mrf.mxu0
  %v6397 = vadd.f32 %v6356, %v6396
  %v6398 = vpop.f32.mrf.mxu0
  %v6399 = vadd.f32 %v6358, %v6398
  %v6400 = vpop.f32.mrf.mxu0
  %v6401 = vpop.f32.mrf.mxu0
  %6402 = vdwg.mxu0
  %v6403 = vmax.f32 %v6397, 0.0
  %v6404 = vmax.f32 %v6399, 0.0
  %v6405 = vld [vmem:[%s10] sm:$0x3]
  %v6407 = vlaneseq
  %v6408 = vshrl.u32 %v6407, 7
  %v6409 = vsub.s32 0, %v6408
  %v6410 = vrot.slane %v6405, %v6409
  %v6411 = vlaneseq
  %v6412 = vshrl.u32 %v6411, 7
  %v6413 = vsub.s32 1, %v6412
  %v6414 = vrot.slane %v6405, %v6413
  %v6417 = vmul.f32 %v6403, %v6410
  %v6418 = vmul.f32 %v6404, %v6414
  %vm6419 = vcmask 1041408
  %v6420 = vsel %vm6419, %v6417, 0.0
  %vm6421 = vcmask 582656
  %v6422 = vsel %vm6421, %v6418, 0.0
  %v6423 = vadd.f32 %v6420, %v6422
  %6424 = vadd.xlane.f32.xlu0 %v6423
  %v6425 = vpop.xlane.xlu0 %6424
  %v6426 = vld [vmem:[#allocation2] sm:$0x1]
  %v6428 = vlaneseq
  %v6429 = vshrl.u32 %v6428, 7
  %v6430 = vsub.s32 0, %v6429
  %v6431 = vrot.slane %v6426, %v6430
  %v6433 = vadd.f32 %v6425, %v6431
  %vm6434 = vcmask 1024
  %6435 = vst.msk [vmem:[%s12] sm:$0x3] %vm6434, %v6433
  // Predicated region
  $region50: #{convnet_forward.1} parent=0 // pred_check
    _
  $region51: #{convnet_forward.1} parent=0 // pred_check_branch
    %6437 = sbr.rel (0) target = $region53
  $region52: #{convnet_forward.1} parent=0 // pred_region
    _
  $region53: #{convnet_forward.1} parent=0 // pred_fallthru
    _
  // Predicated region
  $region54: #{convnet_forward.1} parent=0 // pred_check
    _
  $region55: #{convnet_forward.1} parent=0 // pred_check_branch
    %6439 = sbr.rel (0) target = $region57
  $region56: #{convnet_forward.1} parent=0 // pred_region
    _
  $region57: #{convnet_forward.1} parent=0 // pred_fallthru
    _

</llo_original>
